<compile_context>
chip_gen: v7x
topology: tpu7x:2x2x1
jax: 0.10.0
libtpu: 0.0.40
codegen_flags: <defaults>
</compile_context>

<pallas_src>
import functools

import jax
import jax.numpy as jnp
from jax.experimental import pallas as pl
from jax.experimental.pallas import tpu as pltpu


_HID = 500          # true hidden width (PyTorch)
_HID_PAD = 512      # padded to a multiple of 128 for lane-dense MXU tiles


def _round_up(x, m):
    return (x + m - 1) // m * m


# ----------------------------- Pallas kernel ------------------------------- #

def _decoder_kernel(z_ref, w1_ref, b1_ref, w2_ref, b2_ref, w3_ref, b3_ref,
                    o_ref):
    """Fused 3-layer MLP.  One grid step computes one N-tile of the output."""
    # layer 1: (M, Kpad) @ (Kpad, 512) + b1, ReLU   (f32 accumulate)
    z = z_ref[...].astype(jnp.bfloat16)
    h1 = jnp.dot(z, w1_ref[...], preferred_element_type=jnp.float32)
    h1 = jnp.maximum(h1 + b1_ref[...], 0.0)

    # layer 2: (M, 512) @ (512, 512) + b2, ReLU
    h2 = jnp.dot(h1.astype(jnp.bfloat16), w2_ref[...],
                 preferred_element_type=jnp.float32)
    h2 = jnp.maximum(h2 + b2_ref[...], 0.0)

    # layer 3 (this N tile): (M, 512) @ (512, TN) + b3
    y = jnp.dot(h2.astype(jnp.bfloat16), w3_ref[...],
                preferred_element_type=jnp.float32)
    o_ref[...] = (y + b3_ref[...]).astype(o_ref.dtype)


# ------------------------------- parameters -------------------------------- #

def init_params(key, latent_dim, num_channels):
    """PyTorch nn.Linear default init: U(-1/sqrt(fan_in), 1/sqrt(fan_in))."""
    def dense(k, fan_in, fan_out):
        k1, k2 = jax.random.split(k)
        lim = 1.0 / (float(fan_in) ** 0.5)
        w = jax.random.uniform(k1, (fan_in, fan_out), jnp.float32, -lim, lim)
        b = jax.random.uniform(k2, (fan_out,), jnp.float32, -lim, lim)
        return w, b

    ks = jax.random.split(key, 3)
    n_out = num_channels * 32 * 32
    return {
        "fc1": dense(ks[0], latent_dim, _HID),
        "fc2": dense(ks[1], _HID, _HID),
        "fc3": dense(ks[2], _HID, n_out),
    }


def prepare_params(params, latent_dim, num_channels, weight_dtype=jnp.bfloat16):
    """Zero-pad to MXU-friendly shapes and cast weights to bf16 (once)."""
    k_pad = _round_up(latent_dim, 128)
    n_out = num_channels * 32 * 32           # 3072 for C=3 (already % 128 == 0)

    w1, b1 = params["fc1"]
    w2, b2 = params["fc2"]
    w3, b3 = params["fc3"]

    w1p = jnp.zeros((k_pad, _HID_PAD), jnp.float32)
    w1p = w1p.at[:latent_dim, :_HID].set(w1).astype(weight_dtype)
    b1p = jnp.zeros((1, _HID_PAD), jnp.float32).at[:, :_HID].set(b1)

    w2p = jnp.zeros((_HID_PAD, _HID_PAD), jnp.float32)
    w2p = w2p.at[:_HID, :_HID].set(w2).astype(weight_dtype)
    b2p = jnp.zeros((1, _HID_PAD), jnp.float32).at[:, :_HID].set(b2)

    w3p = jnp.zeros((_HID_PAD, n_out), jnp.float32)
    w3p = w3p.at[:_HID, :].set(w3).astype(weight_dtype)
    b3p = b3.reshape(1, n_out)

    return {"w1": w1p, "b1": b1p, "w2": w2p, "b2": b2p, "w3": w3p, "b3": b3p,
            "k_pad": k_pad}


# ------------------------------ forward pass -------------------------------- #

def state_decoder_forward(prepped, latent_state, latent_dim, num_channels):
    """latent_state: (..., latent_dim) -> (..., num_channels, 32, 32)"""
    lead = latent_state.shape[:-1]
    z = latent_state.reshape(-1, latent_dim).astype(jnp.float32)
    m = z.shape[0]

    k_pad = prepped["k_pad"]
    z_p = jnp.pad(z, ((0, 0), (0, k_pad - latent_dim)))   # tiny XLA-side pad

    n_out = num_channels * 32 * 32
    # Split the output N axis across grid steps (feeds both v7x TensorCores);
    # each tile stays lane-dense (multiple of 128).
    n_tiles = 2 if n_out % 256 == 0 else 1
    tn = n_out // n_tiles

    out = pl.pallas_call(
        _decoder_kernel,
        grid=(n_tiles,),
        in_specs=[
            pl.BlockSpec((m, k_pad), lambda j: (0, 0)),          # z (padded)
            pl.BlockSpec((k_pad, _HID_PAD), lambda j: (0, 0)),   # w1
            pl.BlockSpec((1, _HID_PAD), lambda j: (0, 0)),       # b1
            pl.BlockSpec((_HID_PAD, _HID_PAD), lambda j: (0, 0)),  # w2
            pl.BlockSpec((1, _HID_PAD), lambda j: (0, 0)),       # b2
            pl.BlockSpec((_HID_PAD, tn), lambda j: (0, j)),      # w3 tile
            pl.BlockSpec((1, tn), lambda j: (0, j)),             # b3 tile
        ],
        out_specs=pl.BlockSpec((m, tn), lambda j: (0, j)),
        out_shape=jax.ShapeDtypeStruct((m, n_out), jnp.float32),
        compiler_params=pltpu.CompilerParams(
            dimension_semantics=("parallel",),
            vmem_limit_bytes=32 * 1024 * 1024,
        ),
    )(z_p, prepped["w1"], prepped["b1"], prepped["w2"], prepped["b2"],
      prepped["w3"], prepped["b3"])

    return out.reshape(*lead, num_channels, 32, 32)


# ----------------------------- pure-JAX reference --------------------------- #

def reference_forward(params, latent_state, num_channels):
    w1, b1 = params["fc1"]
    w2, b2 = params["fc2"]
    w3, b3 = params["fc3"]
    z = latent_state.reshape(-1, latent_state.shape[-1])
    h = jnp.maximum(z @ w1 + b1, 0.0)
    h = jnp.maximum(h @ w2 + b2, 0.0)
    y = h @ w3 + b3
    return y.reshape(*latent_state.shape[:-1], num_channels, 32, 32)


# ---------------------------------- main ------------------------------------ #

if __name__ == "__main__":
    latent_dim, num_channels = 16, 3
    B = 2

    key = jax.random.PRNGKey(0)
    kp, kz = jax.random.split(key)
    params = init_params(kp, latent_dim, num_channels)
    prepped = prepare_params(params, latent_dim, num_channels)

    latent = jax.random.normal(kz, (B, latent_dim), jnp.float32)

    out = state_decoder_forward(prepped, latent, latent_dim, num_channels)
    out = jax.block_until_ready(out)

    assert out.shape == (B, num_channels, 32, 32), out.shape
    assert bool(jnp.all(jnp.isfinite(out)))

    # loose tolerance: weights are streamed in bf16 (f32 accumulation)
    ref = reference_forward(params, latent, num_channels)
    max_err = float(jnp.max(jnp.abs(out - ref)))
    assert max_err < 5e-2, f"max abs error {max_err}"

    print("KERNEL_OK")
</pallas_src>

<mosaic_0001>
module attributes {stable_mosaic.version = 11 : i64} {
  func.func @_decoder_kernel(%arg0: i32, %arg1: memref<2x128xf32, #tpu.memory_space<vmem>>, %arg2: memref<128x512xbf16, #tpu.memory_space<vmem>>, %arg3: memref<1x512xf32, #tpu.memory_space<vmem>>, %arg4: memref<512x512xbf16, #tpu.memory_space<vmem>>, %arg5: memref<1x512xf32, #tpu.memory_space<vmem>>, %arg6: memref<512x1536xbf16, #tpu.memory_space<vmem>>, %arg7: memref<1x1536xf32, #tpu.memory_space<vmem>>, %arg8: memref<2x1536xf32, #tpu.memory_space<vmem>>) attributes {dimension_semantics = [#tpu.dimension_semantics<parallel>], iteration_bounds = array<i64: 2>, scalar_prefetch = 0 : i64, scratch_operands = 0 : i64, tpu.core_type = #tpu.core_type<tc>, window_params = [{pipeline_mode = #tpu.pipeline_mode<synchronous>, transform_indices = @transform_0, window_bounds = array<i64: 2, 128>}, {pipeline_mode = #tpu.pipeline_mode<synchronous>, transform_indices = @transform_1, window_bounds = array<i64: 128, 512>}, {pipeline_mode = #tpu.pipeline_mode<synchronous>, transform_indices = @transform_2, window_bounds = array<i64: 1, 512>}, {pipeline_mode = #tpu.pipeline_mode<synchronous>, transform_indices = @transform_3, window_bounds = array<i64: 512, 512>}, {pipeline_mode = #tpu.pipeline_mode<synchronous>, transform_indices = @transform_4, window_bounds = array<i64: 1, 512>}, {transform_indices = @transform_5, window_bounds = array<i64: 512, 1536>}, {transform_indices = @transform_6, window_bounds = array<i64: 1, 1536>}, {transform_indices = @transform_7, window_bounds = array<i64: 2, 1536>}]} {
    %c0 = arith.constant 0 : index
    %c0_0 = arith.constant 0 : index
    %0 = vector.load %arg1[%c0, %c0_0] : memref<2x128xf32, #tpu.memory_space<vmem>>, vector<2x128xf32>
    %1 = arith.truncf %0 : vector<2x128xf32> to vector<2x128xbf16>
    %c0_1 = arith.constant 0 : index
    %c0_2 = arith.constant 0 : index
    %2 = vector.load %arg2[%c0_1, %c0_2] : memref<128x512xbf16, #tpu.memory_space<vmem>>, vector<128x512xbf16>
    %cst = arith.constant dense<0.000000e+00> : vector<2x512xf32>
    %3 = tpu.matmul %1, %2, %cst {dimension_numbers = #tpu.dot_dimension_numbers<[1], [0], [0], [1], [0, 0, 1, 1], [], []>} : vector<2x128xbf16>, vector<128x512xbf16>, vector<2x512xf32> -> vector<2x512xf32>
    %c0_3 = arith.constant 0 : index
    %c0_4 = arith.constant 0 : index
    %4 = vector.load %arg3[%c0_3, %c0_4] : memref<1x512xf32, #tpu.memory_space<vmem>>, vector<1x512xf32>
    %5 = vector.broadcast %4 : vector<1x512xf32> to vector<2x512xf32>
    %6 = arith.addf %3, %5 : vector<2x512xf32>
    %cst_5 = arith.constant 0.000000e+00 : f32
    %7 = vector.broadcast %cst_5 : f32 to vector<2x512xf32>
    %8 = arith.maximumf %6, %7 : vector<2x512xf32>
    %9 = arith.truncf %8 : vector<2x512xf32> to vector<2x512xbf16>
    %c0_6 = arith.constant 0 : index
    %c0_7 = arith.constant 0 : index
    %10 = vector.load %arg4[%c0_6, %c0_7] : memref<512x512xbf16, #tpu.memory_space<vmem>>, vector<512x512xbf16>
    %cst_8 = arith.constant dense<0.000000e+00> : vector<2x512xf32>
    %11 = tpu.matmul %9, %10, %cst_8 {dimension_numbers = #tpu.dot_dimension_numbers<[1], [0], [0], [1], [0, 0, 1, 1], [], []>} : vector<2x512xbf16>, vector<512x512xbf16>, vector<2x512xf32> -> vector<2x512xf32>
    %c0_9 = arith.constant 0 : index
    %c0_10 = arith.constant 0 : index
    %12 = vector.load %arg5[%c0_9, %c0_10] : memref<1x512xf32, #tpu.memory_space<vmem>>, vector<1x512xf32>
    %13 = vector.broadcast %12 : vector<1x512xf32> to vector<2x512xf32>
    %14 = arith.addf %11, %13 : vector<2x512xf32>
    %cst_11 = arith.constant 0.000000e+00 : f32
    %15 = vector.broadcast %cst_11 : f32 to vector<2x512xf32>
    %16 = arith.maximumf %14, %15 : vector<2x512xf32>
    %17 = arith.truncf %16 : vector<2x512xf32> to vector<2x512xbf16>
    %c0_12 = arith.constant 0 : index
    %c0_13 = arith.constant 0 : index
    %18 = vector.load %arg6[%c0_12, %c0_13] : memref<512x1536xbf16, #tpu.memory_space<vmem>>, vector<512x1536xbf16>
    %cst_14 = arith.constant dense<0.000000e+00> : vector<2x1536xf32>
    %19 = tpu.matmul %17, %18, %cst_14 {dimension_numbers = #tpu.dot_dimension_numbers<[1], [0], [0], [1], [0, 0, 1, 1], [], []>} : vector<2x512xbf16>, vector<512x1536xbf16>, vector<2x1536xf32> -> vector<2x1536xf32>
    %c0_15 = arith.constant 0 : index
    %c0_16 = arith.constant 0 : index
    %20 = vector.load %arg7[%c0_15, %c0_16] : memref<1x1536xf32, #tpu.memory_space<vmem>>, vector<1x1536xf32>
    %21 = vector.broadcast %20 : vector<1x1536xf32> to vector<2x1536xf32>
    %22 = arith.addf %19, %21 : vector<2x1536xf32>
    %c0_17 = arith.constant 0 : index
    %c0_18 = arith.constant 0 : index
    %23 = vector.load %arg8[%c0_17, %c0_18] : memref<2x1536xf32, #tpu.memory_space<vmem>>, vector<2x1536xf32>
    tpu.vector_store %arg8[%c0_17, %c0_18], %22 {strides = array<i32>} : memref<2x1536xf32, #tpu.memory_space<vmem>>, vector<2x1536xf32>,
    return
  }
  func.func @transform_0(%arg0: i32) -> (i32, i32) {
    %c0_i32 = arith.constant 0 : i32
    %c0_i32_0 = arith.constant 0 : i32
    %c0_i32_1 = arith.constant 0 : i32
    return %c0_i32, %c0_i32_0 : i32, i32
  }
  func.func @transform_1(%arg0: i32) -> (i32, i32) {
    %c0_i32 = arith.constant 0 : i32
    %c0_i32_0 = arith.constant 0 : i32
    %c0_i32_1 = arith.constant 0 : i32
    return %c0_i32, %c0_i32_0 : i32, i32
  }
  func.func @transform_2(%arg0: i32) -> (i32, i32) {
    %c0_i32 = arith.constant 0 : i32
    %c0_i32_0 = arith.constant 0 : i32
    %c0_i32_1 = arith.constant 0 : i32
    return %c0_i32, %c0_i32_0 : i32, i32
  }
  func.func @transform_3(%arg0: i32) -> (i32, i32) {
    %c0_i32 = arith.constant 0 : i32
    %c0_i32_0 = arith.constant 0 : i32
    %c0_i32_1 = arith.constant 0 : i32
    return %c0_i32, %c0_i32_0 : i32, i32
  }
  func.func @transform_4(%arg0: i32) -> (i32, i32) {
    %c0_i32 = arith.constant 0 : i32
    %c0_i32_0 = arith.constant 0 : i32
    %c0_i32_1 = arith.constant 0 : i32
    return %c0_i32, %c0_i32_0 : i32, i32
  }
  func.func @transform_5(%arg0: i32) -> (i32, i32) {
    %c0_i32 = arith.constant 0 : i32
    %c0_i32_0 = arith.constant 0 : i32
    return %c0_i32, %arg0 : i32, i32
  }
  func.func @transform_6(%arg0: i32) -> (i32, i32) {
    %c0_i32 = arith.constant 0 : i32
    %c0_i32_0 = arith.constant 0 : i32
    return %c0_i32, %arg0 : i32, i32
  }
  func.func @transform_7(%arg0: i32) -> (i32, i32) {
    %c0_i32 = arith.constant 0 : i32
    %c0_i32_0 = arith.constant 0 : i32
    return %c0_i32, %arg0 : i32, i32
  }
}

</mosaic_0001>

<llo_original>
// kernel: tpu_custom_call.1
$region0: #{tpu_custom_call.1}
  #allocation0 [shape = 'u32[]', space=smem, size = 0x4, offset = 0x4, fixed_abs, tag = 'smem constant byte address 0x4 - core index']
  #allocation1 [shape = 'u32[144,128]{1,0:T(1,128)}', space=vmem, size = 0x12000, scoped, tag = 'internal scratch']
  %s0 = inlined_call_operand.hbm [shape: f32[2,128], index: 0, kind: input, shape index: {}]
  %s1 = inlined_call_operand.hbm [shape: bf16[128,512], index: 1, kind: input, shape index: {}]
  %s2 = inlined_call_operand.hbm [shape: f32[1,512], index: 2, kind: input, shape index: {}]
  %s3 = inlined_call_operand.hbm [shape: bf16[512,512], index: 3, kind: input, shape index: {}]
  %s4 = inlined_call_operand.hbm [shape: f32[1,512], index: 4, kind: input, shape index: {}]
  %s5 = inlined_call_operand.hbm [shape: bf16[512,3072], index: 5, kind: input, shape index: {}]
  %s6 = inlined_call_operand.hbm [shape: f32[1,3072], index: 6, kind: input, shape index: {}]
  %s7 = inlined_call_operand.hbm [shape: f32[2,3072], index: 7, kind: output, shape index: {}]
  %s8 = sld [smem:[#allocation0]]
  $region89: #{tpu_custom_call.1} parent=0
    _
  %s10 = ssub.s32 1, %s8
  %s11 = scalar_select 0, %s10, %s8
  $region1: #{tpu_custom_call.1} parent=0
    #allocation2 [shape = 'u8[1024]{0}', space=vmem, size = 0x400, scoped, tag = 'input window, operand 0, single buffered']
    #allocation3 [shape = 's32[2]{0}', space=sflag, size = 0x8, scoped, tag = 'scoped memory for tpu_custom_call.1']
    #allocation4 [shape = 's32[2]{0}', space=sflag, size = 0x8, scoped, tag = 'scoped memory for tpu_custom_call.1']
    #allocation5 [shape = 'u8[131072]{0}', space=vmem, size = 0x20000, scoped, tag = 'input window, operand 1, single buffered']
    #allocation6 [shape = 's32[1]{0}', space=sflag, size = 0x4, scoped, tag = 'scoped memory for tpu_custom_call.1']
    #allocation7 [shape = 'u8[2048]{0}', space=vmem, size = 0x800, scoped, tag = 'input window, operand 2, single buffered']
    #allocation8 [shape = 'u8[524288]{0}', space=vmem, size = 0x80000, scoped, tag = 'input window, operand 3, single buffered']
    #allocation9 [shape = 's32[1]{0}', space=sflag, size = 0x4, scoped, tag = 'scoped memory for tpu_custom_call.1']
    #allocation10 [shape = 'u8[2048]{0}', space=vmem, size = 0x800, scoped, tag = 'input window, operand 4, single buffered']
    #allocation11 [shape = 'u8[3145728]{0}', space=vmem, size = 0x300000, scoped, tag = 'input window, operand 5']
    #allocation12 [shape = 's32[2]{0}', space=sflag, size = 0x8, scoped, tag = 'scoped memory for tpu_custom_call.1']
    #allocation13 [shape = 'u8[12288]{0}', space=vmem, size = 0x3000, scoped, tag = 'input window, operand 6']
    #allocation14 [shape = 'u8[24576]{0}', space=vmem, size = 0x6000, scoped, tag = 'output window, operand 0']
    %12 = vsyncpa [#allocation3], 0
    %13 = vsyncpa [#allocation6], 0
    %14 = vsyncpa [#allocation9], 0
    %15 = vsyncpa [#allocation12], 0
    %s16 = scalar_lea.sflag [#allocation12], 1
    %17 = vsyncpa %s16, 0
    %18 = vsyncpa [#allocation4], 0
    %s19 = scalar_lea.sflag [#allocation4], 1
    %20 = vsyncpa %s19, 0
    loop: start=0, step=1, limit=4
    $region2: #{tpu_custom_call.1} parent=1 // loop_pre_header
      _
    $region3: #{tpu_custom_call.1} parent=1 // loop_header
      %s22 = sphi 0, %s26
      %p23 = scmp.ge.s32.totalorder %s22, 4
      %s30 = sphi 0, %s30
      %s32 = sphi 0, %s30
      %s33 = sphi 0, %s32
      %s47 = sphi 0, %s33
      %s51 = sphi 0, %s51
      %s53 = sphi 0, %s51
      %s54 = sphi 0, %s53
      %s68 = sphi 0, %s54
      %s72 = sphi 0, %s72
      %s74 = sphi 0, %s72
      %s75 = sphi 0, %s74
      %s89 = sphi 0, %s75
      %s93 = sphi 0, %s93
      %s95 = sphi 0, %s93
      %s96 = sphi 0, %s95
      %s110 = sphi 0, %s96
      %s114 = sphi 0, %s114
      %s116 = sphi 0, %s114
      %s117 = sphi 0, %s116
      %s131 = sphi 0, %s117
      %s137 = sphi 0, %s139
      %s140 = sphi 0, %s137
      %s141 = sphi 0, %s140
      %s157 = sphi 0, %s141
      %s163 = sphi 0, %s165
      %s166 = sphi 0, %s163
      %s167 = sphi 0, %s166
      %s183 = sphi 0, %s167
      %s189 = sphi 0, %s191
      %s192 = sphi 0, %s189
      %s193 = sphi 0, %s192
      %s209 = sphi 0, %s193
    $region4: #{tpu_custom_call.1} parent=1 // loop_header_branch
      %25 = sbr.rel (%p23) target = $region8
    $region5: #{tpu_custom_call.1} parent=1 // loop_body
      %s27 = ssub.s32 %s22, 1
      %s28 = ssub.s32 %s22, 2
      %s29 = sadd.s32 %s22, 1
      %s31 = sadd.s32 %s30, 1
      %p34 = scmp.eq.s32.totalorder %s22, 1
      %p35 = scmp.ne.s32.totalorder %s30, %s32
      %p36 = scmp.eq.s32.totalorder %s22, 0
      %p37 = por %p35, %p36
      %p38 = scmp.ne.s32.totalorder %s30, %s32
      %p39 = scmp.eq.s32.totalorder %s27, 1
      %p40 = por %p38, %p39
      %p41 = scmp.ne.s32.totalorder %s32, %s33
      %p42 = scmp.eq.s32.totalorder %s27, 0
      %p43 = por %p41, %p42
      %p44 = scmp.ne.s32.totalorder %s32, %s33
      %p45 = scmp.eq.s32.totalorder %s28, 1
      %p46 = por %p44, %p45
      %p48 = scmp.ne.s32.totalorder %s33, %s47
      %p49 = scmp.eq.s32.totalorder %s28, 0
      %p50 = por %p48, %p49
      %s52 = sadd.s32 %s51, 1
      %p55 = scmp.eq.s32.totalorder %s22, 1
      %p56 = scmp.ne.s32.totalorder %s51, %s53
      %p57 = scmp.eq.s32.totalorder %s22, 0
      %p58 = por %p56, %p57
      %p59 = scmp.ne.s32.totalorder %s51, %s53
      %p60 = scmp.eq.s32.totalorder %s27, 1
      %p61 = por %p59, %p60
      %p62 = scmp.ne.s32.totalorder %s53, %s54
      %p63 = scmp.eq.s32.totalorder %s27, 0
      %p64 = por %p62, %p63
      %p65 = scmp.ne.s32.totalorder %s53, %s54
      %p66 = scmp.eq.s32.totalorder %s28, 1
      %p67 = por %p65, %p66
      %p69 = scmp.ne.s32.totalorder %s54, %s68
      %p70 = scmp.eq.s32.totalorder %s28, 0
      %p71 = por %p69, %p70
      %s73 = sadd.s32 %s72, 1
      %p76 = scmp.eq.s32.totalorder %s22, 1
      %p77 = scmp.ne.s32.totalorder %s72, %s74
      %p78 = scmp.eq.s32.totalorder %s22, 0
      %p79 = por %p77, %p78
      %p80 = scmp.ne.s32.totalorder %s72, %s74
      %p81 = scmp.eq.s32.totalorder %s27, 1
      %p82 = por %p80, %p81
      %p83 = scmp.ne.s32.totalorder %s74, %s75
      %p84 = scmp.eq.s32.totalorder %s27, 0
      %p85 = por %p83, %p84
      %p86 = scmp.ne.s32.totalorder %s74, %s75
      %p87 = scmp.eq.s32.totalorder %s28, 1
      %p88 = por %p86, %p87
      %p90 = scmp.ne.s32.totalorder %s75, %s89
      %p91 = scmp.eq.s32.totalorder %s28, 0
      %p92 = por %p90, %p91
      %s94 = sadd.s32 %s93, 1
      %p97 = scmp.eq.s32.totalorder %s22, 1
      %p98 = scmp.ne.s32.totalorder %s93, %s95
      %p99 = scmp.eq.s32.totalorder %s22, 0
      %p100 = por %p98, %p99
      %p101 = scmp.ne.s32.totalorder %s93, %s95
      %p102 = scmp.eq.s32.totalorder %s27, 1
      %p103 = por %p101, %p102
      %p104 = scmp.ne.s32.totalorder %s95, %s96
      %p105 = scmp.eq.s32.totalorder %s27, 0
      %p106 = por %p104, %p105
      %p107 = scmp.ne.s32.totalorder %s95, %s96
      %p108 = scmp.eq.s32.totalorder %s28, 1
      %p109 = por %p107, %p108
      %p111 = scmp.ne.s32.totalorder %s96, %s110
      %p112 = scmp.eq.s32.totalorder %s28, 0
      %p113 = por %p111, %p112
      %s115 = sadd.s32 %s114, 1
      %p118 = scmp.eq.s32.totalorder %s22, 1
      %p119 = scmp.ne.s32.totalorder %s114, %s116
      %p120 = scmp.eq.s32.totalorder %s22, 0
      %p121 = por %p119, %p120
      %p122 = scmp.ne.s32.totalorder %s114, %s116
      %p123 = scmp.eq.s32.totalorder %s27, 1
      %p124 = por %p122, %p123
      %p125 = scmp.ne.s32.totalorder %s116, %s117
      %p126 = scmp.eq.s32.totalorder %s27, 0
      %p127 = por %p125, %p126
      %p128 = scmp.ne.s32.totalorder %s116, %s117
      %p129 = scmp.eq.s32.totalorder %s28, 1
      %p130 = por %p128, %p129
      %p132 = scmp.ne.s32.totalorder %s117, %s131
      %p133 = scmp.eq.s32.totalorder %s28, 0
      %p134 = por %p132, %p133
      %s135 = ssub.s32 %s22, %s29
      %p136 = scmp.eq.s32.totalorder %s135, 0
      %s138 = sadd.s32 %s137, 1
      %s139 = scalar_select %p136, %s137, %s138
      %p142 = pneg %p136
      %p143 = scmp.eq.s32.totalorder %s22, 1
      %p144 = por %p142, %p143
      %p145 = scmp.ne.s32.totalorder %s137, %s140
      %p146 = scmp.eq.s32.totalorder %s22, 0
      %p147 = por %p145, %p146
      %p148 = scmp.ne.s32.totalorder %s137, %s140
      %p149 = scmp.eq.s32.totalorder %s27, 1
      %p150 = por %p148, %p149
      %p151 = scmp.ne.s32.totalorder %s140, %s141
      %p152 = scmp.eq.s32.totalorder %s27, 0
      %p153 = por %p151, %p152
      %p154 = scmp.ne.s32.totalorder %s140, %s141
      %p155 = scmp.eq.s32.totalorder %s28, 1
      %p156 = por %p154, %p155
      %p158 = scmp.ne.s32.totalorder %s141, %s157
      %p159 = scmp.eq.s32.totalorder %s28, 0
      %p160 = por %p158, %p159
      %s161 = ssub.s32 %s22, %s29
      %p162 = scmp.eq.s32.totalorder %s161, 0
      %s164 = sadd.s32 %s163, 1
      %s165 = scalar_select %p162, %s163, %s164
      %p168 = pneg %p162
      %p169 = scmp.eq.s32.totalorder %s22, 1
      %p170 = por %p168, %p169
      %p171 = scmp.ne.s32.totalorder %s163, %s166
      %p172 = scmp.eq.s32.totalorder %s22, 0
      %p173 = por %p171, %p172
      %p174 = scmp.ne.s32.totalorder %s163, %s166
      %p175 = scmp.eq.s32.totalorder %s27, 1
      %p176 = por %p174, %p175
      %p177 = scmp.ne.s32.totalorder %s166, %s167
      %p178 = scmp.eq.s32.totalorder %s27, 0
      %p179 = por %p177, %p178
      %p180 = scmp.ne.s32.totalorder %s166, %s167
      %p181 = scmp.eq.s32.totalorder %s28, 1
      %p182 = por %p180, %p181
      %p184 = scmp.ne.s32.totalorder %s167, %s183
      %p185 = scmp.eq.s32.totalorder %s28, 0
      %p186 = por %p184, %p185
      %s187 = ssub.s32 %s22, %s29
      %p188 = scmp.eq.s32.totalorder %s187, 0
      %s190 = sadd.s32 %s189, 1
      %s191 = scalar_select %p188, %s189, %s190
      %p194 = pneg %p188
      %p195 = scmp.eq.s32.totalorder %s22, 1
      %p196 = por %p194, %p195
      %p197 = scmp.ne.s32.totalorder %s189, %s192
      %p198 = scmp.eq.s32.totalorder %s22, 0
      %p199 = por %p197, %p198
      %p200 = scmp.ne.s32.totalorder %s189, %s192
      %p201 = scmp.eq.s32.totalorder %s27, 1
      %p202 = por %p200, %p201
      %p203 = scmp.ne.s32.totalorder %s192, %s193
      %p204 = scmp.eq.s32.totalorder %s27, 0
      %p205 = por %p203, %p204
      %p206 = scmp.ne.s32.totalorder %s192, %s193
      %p207 = scmp.eq.s32.totalorder %s28, 1
      %p208 = por %p206, %p207
      %p210 = scmp.ne.s32.totalorder %s193, %s209
      %p211 = scmp.eq.s32.totalorder %s28, 0
      %p212 = por %p210, %p211
      %p213 = scmp.le.s32.totalorder 1, %s22
      %p214 = scmp.lt.s32.totalorder %s22, 3
      %p215 = pnand %p213, %p214
      %p216 = pneg %p215
      // Predicated region
      $region9: #{tpu_custom_call.1} parent=5 // pred_check
        _
      $region10: #{tpu_custom_call.1} parent=5 // pred_check_branch
        %218 = sbr.rel (%p215) target = $region12
      $region11: #{tpu_custom_call.1} parent=5 // pred_region
        %s219 = ssub.s32 %s22, 1
        // Predicated region
        $region13: #{tpu_custom_call.1} parent=11 // pred_check
          %p220 = pneg %p43
        $region14: #{tpu_custom_call.1} parent=11 // pred_check_branch
          %222 = sbr.rel (%p220) target = $region16
        $region15: #{tpu_custom_call.1} parent=11 // pred_region
          %s224 = ssub.s32 32, 32
          %225 = vsyncadd [#allocation3], %s224
          %s227 = sshll.u32 [#allocation2], 4
          %s228 = int_to_ptr.vmem [resolvable:$true] %s227
          %230 = dma.hbm_to_vmem [thread:$0]  %s0, 32, %s228, [#allocation3]
        $region16: #{tpu_custom_call.1} parent=11 // pred_fallthru
          _
        // Predicated region
        $region17: #{tpu_custom_call.1} parent=11 // pred_check
          %p231 = pneg %p64
        $region18: #{tpu_custom_call.1} parent=11 // pred_check_branch
          %233 = sbr.rel (%p231) target = $region20
        $region19: #{tpu_custom_call.1} parent=11 // pred_region
          %s235 = ssub.s32 4096, 4096
          %236 = vsyncadd [#allocation6], %s235
          %s237 = sshll.u32 [#allocation5], 4
          %s238 = int_to_ptr.vmem [resolvable:$true] %s237
          %243 = dma.hbm_to_vmem [thread:$0]  %s1, 4096, %s238, [#allocation6], 256, 256, 16
        $region20: #{tpu_custom_call.1} parent=11 // pred_fallthru
          _
        // Predicated region
        $region21: #{tpu_custom_call.1} parent=11 // pred_check
          %p244 = pneg %p85
        $region22: #{tpu_custom_call.1} parent=11 // pred_check_branch
          %246 = sbr.rel (%p244) target = $region24
        $region23: #{tpu_custom_call.1} parent=11 // pred_region
          %s248 = ssub.s32 64, 64
          %249 = vsyncadd [#allocation6], %s248
          %s251 = sshll.u32 [#allocation7], 4
          %s252 = int_to_ptr.vmem [resolvable:$true] %s251
          %254 = dma.hbm_to_vmem [thread:$0]  %s2, 64, %s252, [#allocation6]
        $region24: #{tpu_custom_call.1} parent=11 // pred_fallthru
          _
        // Predicated region
        $region25: #{tpu_custom_call.1} parent=11 // pred_check
          %p255 = pneg %p106
        $region26: #{tpu_custom_call.1} parent=11 // pred_check_branch
          %257 = sbr.rel (%p255) target = $region28
        $region27: #{tpu_custom_call.1} parent=11 // pred_region
          %s259 = ssub.s32 16384, 16384
          %260 = vsyncadd [#allocation9], %s259
          %s261 = sshll.u32 [#allocation8], 4
          %s262 = int_to_ptr.vmem [resolvable:$true] %s261
          %267 = dma.hbm_to_vmem [thread:$0]  %s3, 16384, %s262, [#allocation9], 256, 256, 16
        $region28: #{tpu_custom_call.1} parent=11 // pred_fallthru
          _
        // Predicated region
        $region29: #{tpu_custom_call.1} parent=11 // pred_check
          %p268 = pneg %p127
        $region30: #{tpu_custom_call.1} parent=11 // pred_check_branch
          %270 = sbr.rel (%p268) target = $region32
        $region31: #{tpu_custom_call.1} parent=11 // pred_region
          %s272 = ssub.s32 64, 64
          %273 = vsyncadd [#allocation9], %s272
          %s275 = sshll.u32 [#allocation10], 4
          %s276 = int_to_ptr.vmem [resolvable:$true] %s275
          %278 = dma.hbm_to_vmem [thread:$0]  %s4, 64, %s276, [#allocation9]
        $region32: #{tpu_custom_call.1} parent=11 // pred_fallthru
          _
      $region12: #{tpu_custom_call.1} parent=5 // pred_fallthru
        _
      %p279 = scmp.lt.s32.totalorder %s22, 2
      // Predicated region
      $region33: #{tpu_custom_call.1} parent=5 // pred_check
        %p280 = pneg %p279
      $region34: #{tpu_custom_call.1} parent=5 // pred_check_branch
        %282 = sbr.rel (%p280) target = $region36
      $region35: #{tpu_custom_call.1} parent=5 // pred_region
        // Predicated region
        $region37: #{tpu_custom_call.1} parent=35 // pred_check
          %p283 = pneg %p147
        $region38: #{tpu_custom_call.1} parent=35 // pred_check_branch
          %285 = sbr.rel (%p283) target = $region40
        $region39: #{tpu_custom_call.1} parent=35 // pred_region
          %s286 = sand.u32 %s22, 1
          %s287 = scalar_lea.sflag [#allocation12], %s286
          %s288 = sand.u32 %s137, 1
          %s289 = smul.addr %s288, 3072
          %s290 = scalar_lea.vmem [#allocation11], %s289
          %s291 = smul.u32 12, %s22
          %s293 = ssub.s32 49152, 49152
          %294 = vsyncadd %s287, %s293
          %s295 = smul.addr %s291, 64
          %s296 = scalar_lea.hbm %s5, %s295
          %s297 = sshll.u32 %s290, 4
          %s298 = int_to_ptr.vmem [resolvable:$true] %s297
          %303 = dma.hbm_to_vmem [thread:$0]  %s296, 49152, %s298, %s287, 1536, 768, 48
        $region40: #{tpu_custom_call.1} parent=35 // pred_fallthru
          _
        // Predicated region
        $region41: #{tpu_custom_call.1} parent=35 // pred_check
          %p304 = pneg %p173
        $region42: #{tpu_custom_call.1} parent=35 // pred_check_branch
          %306 = sbr.rel (%p304) target = $region44
        $region43: #{tpu_custom_call.1} parent=35 // pred_region
          %s307 = sand.u32 %s22, 1
          %s308 = scalar_lea.sflag [#allocation12], %s307
          %s309 = sand.u32 %s163, 1
          %s310 = smul.addr %s309, 12
          %s311 = scalar_lea.vmem [#allocation13], %s310
          %s312 = smul.u32 12, %s22
          %s314 = ssub.s32 192, 192
          %315 = vsyncadd %s308, %s314
          %s316 = smul.addr %s312, 16
          %s317 = scalar_lea.hbm %s6, %s316
          %s319 = sshll.u32 %s311, 4
          %s320 = int_to_ptr.vmem [resolvable:$true] %s319
          %322 = dma.hbm_to_vmem [thread:$0]  %s317, 192, %s320, %s308
        $region44: #{tpu_custom_call.1} parent=35 // pred_fallthru
          _
      $region36: #{tpu_custom_call.1} parent=5 // pred_fallthru
        _
      %p323 = scmp.le.s32.totalorder 1, %s22
      %p324 = scmp.lt.s32.totalorder %s22, 3
      %p325 = pnand %p323, %p324
      %p326 = pneg %p325
      // Predicated region
      $region45: #{tpu_custom_call.1} parent=5 // pred_check
        _
      $region46: #{tpu_custom_call.1} parent=5 // pred_check_branch
        %328 = sbr.rel (%p325) target = $region48
      $region47: #{tpu_custom_call.1} parent=5 // pred_region
        %s329 = ssub.s32 %s22, 1
        // Predicated region
        $region49: #{tpu_custom_call.1} parent=47 // pred_check
          %p330 = pneg %p43
        $region50: #{tpu_custom_call.1} parent=47 // pred_check_branch
          %332 = sbr.rel (%p330) target = $region52
        $region51: #{tpu_custom_call.1} parent=47 // pred_region
          %333 = dma.done [#allocation3], 32
        $region52: #{tpu_custom_call.1} parent=47 // pred_fallthru
          _
        // Predicated region
        $region53: #{tpu_custom_call.1} parent=47 // pred_check
          %p334 = pneg %p64
        $region54: #{tpu_custom_call.1} parent=47 // pred_check_branch
          %336 = sbr.rel (%p334) target = $region56
        $region55: #{tpu_custom_call.1} parent=47 // pred_region
          %337 = dma.done [#allocation6], 4096
        $region56: #{tpu_custom_call.1} parent=47 // pred_fallthru
          _
        // Predicated region
        $region57: #{tpu_custom_call.1} parent=47 // pred_check
          %p338 = pneg %p85
        $region58: #{tpu_custom_call.1} parent=47 // pred_check_branch
          %340 = sbr.rel (%p338) target = $region60
        $region59: #{tpu_custom_call.1} parent=47 // pred_region
          %341 = dma.done [#allocation6], 64
        $region60: #{tpu_custom_call.1} parent=47 // pred_fallthru
          _
        // Predicated region
        $region61: #{tpu_custom_call.1} parent=47 // pred_check
          %p342 = pneg %p106
        $region62: #{tpu_custom_call.1} parent=47 // pred_check_branch
          %344 = sbr.rel (%p342) target = $region64
        $region63: #{tpu_custom_call.1} parent=47 // pred_region
          %345 = dma.done [#allocation9], 16384
        $region64: #{tpu_custom_call.1} parent=47 // pred_fallthru
          _
        // Predicated region
        $region65: #{tpu_custom_call.1} parent=47 // pred_check
          %p346 = pneg %p127
        $region66: #{tpu_custom_call.1} parent=47 // pred_check_branch
          %348 = sbr.rel (%p346) target = $region68
        $region67: #{tpu_custom_call.1} parent=47 // pred_region
          %349 = dma.done [#allocation9], 64
        $region68: #{tpu_custom_call.1} parent=47 // pred_fallthru
          _
        %s350 = sand.u32 %s27, 1
        %s351 = scalar_lea.sflag [#allocation12], %s350
        %s352 = sand.u32 %s140, 1
        %s353 = smul.addr %s352, 3072
        %s354 = scalar_lea.vmem [#allocation11], %s353
        // Predicated region
        $region69: #{tpu_custom_call.1} parent=47 // pred_check
          %p355 = pneg %p153
        $region70: #{tpu_custom_call.1} parent=47 // pred_check_branch
          %357 = sbr.rel (%p355) target = $region72
        $region71: #{tpu_custom_call.1} parent=47 // pred_region
          %358 = dma.done %s351, 49152
        $region72: #{tpu_custom_call.1} parent=47 // pred_fallthru
          _
        %s359 = sand.u32 %s27, 1
        %s360 = scalar_lea.sflag [#allocation12], %s359
        %s361 = sand.u32 %s166, 1
        %s362 = smul.addr %s361, 12
        %s363 = scalar_lea.vmem [#allocation13], %s362
        // Predicated region
        $region73: #{tpu_custom_call.1} parent=47 // pred_check
          %p364 = pneg %p179
        $region74: #{tpu_custom_call.1} parent=47 // pred_check_branch
          %366 = sbr.rel (%p364) target = $region76
        $region75: #{tpu_custom_call.1} parent=47 // pred_region
          %367 = dma.done %s360, 192
        $region76: #{tpu_custom_call.1} parent=47 // pred_fallthru
          _
        %p368 = pneg %p43
        %p369 = pneg %p40
        %p370 = pneg %p64
        %p371 = pneg %p61
        %p372 = pneg %p85
        %p373 = pneg %p82
        %p374 = pneg %p106
        %p375 = pneg %p103
        %p376 = pneg %p127
        %p377 = pneg %p124
        %s378 = sand.u32 %s27, 1
        %s379 = scalar_lea.sflag [#allocation12], %s378
        %s380 = sand.u32 %s140, 1
        %s381 = smul.addr %s380, 3072
        %s382 = scalar_lea.vmem [#allocation11], %s381
        %p383 = pneg %p153
        %p384 = pneg %p150
        %s385 = sand.u32 %s27, 1
        %s386 = scalar_lea.sflag [#allocation12], %s385
        %s387 = sand.u32 %s166, 1
        %s388 = smul.addr %s387, 12
        %s389 = scalar_lea.vmem [#allocation13], %s388
        %p390 = pneg %p179
        %p391 = pneg %p176
        %p392 = pneg %p205
        %p393 = pneg %p202
        %s394 = sand.u32 %s192, 1
        %s395 = scalar_lea.sflag [#allocation4], %s394
        %s396 = sand.u32 %s192, 1
        %s397 = smul.addr %s396, 24
        %s398 = scalar_lea.vmem [#allocation14], %s397
        %s399 = smul.u32 12, %s27
        %s400 = smul.u32 12, %s27
        %s401 = smul.u32 12, %s27
        %v403 = vld [vmem:[#allocation2] sm:$0x3]
        %v404 = vpack.c.bf16 %v403, %v403
        %v405 = vld [vmem:[#allocation5] sm:$0xff]
        %v406 = vld [vmem:[#allocation5 + $0x8] sm:$0xff]
        %v407 = vld [vmem:[#allocation5 + $0x10] sm:$0xff]
        %v408 = vld [vmem:[#allocation5 + $0x18] sm:$0xff]
        %v409 = vld [vmem:[#allocation5 + $0x20] sm:$0xff]
        %v410 = vld [vmem:[#allocation5 + $0x28] sm:$0xff]
        %v411 = vld [vmem:[#allocation5 + $0x30] sm:$0xff]
        %v412 = vld [vmem:[#allocation5 + $0x38] sm:$0xff]
        %v413 = vld [vmem:[#allocation5 + $0x40] sm:$0xff]
        %v414 = vld [vmem:[#allocation5 + $0x48] sm:$0xff]
        %v415 = vld [vmem:[#allocation5 + $0x50] sm:$0xff]
        %v416 = vld [vmem:[#allocation5 + $0x58] sm:$0xff]
        %v417 = vld [vmem:[#allocation5 + $0x60] sm:$0xff]
        %v418 = vld [vmem:[#allocation5 + $0x68] sm:$0xff]
        %v419 = vld [vmem:[#allocation5 + $0x70] sm:$0xff]
        %v420 = vld [vmem:[#allocation5 + $0x78] sm:$0xff]
        %v421 = vld [vmem:[#allocation5 + $0x80] sm:$0xff]
        %v422 = vld [vmem:[#allocation5 + $0x88] sm:$0xff]
        %v423 = vld [vmem:[#allocation5 + $0x90] sm:$0xff]
        %v424 = vld [vmem:[#allocation5 + $0x98] sm:$0xff]
        %v425 = vld [vmem:[#allocation5 + $0xa0] sm:$0xff]
        %v426 = vld [vmem:[#allocation5 + $0xa8] sm:$0xff]
        %v427 = vld [vmem:[#allocation5 + $0xb0] sm:$0xff]
        %v428 = vld [vmem:[#allocation5 + $0xb8] sm:$0xff]
        %v429 = vld [vmem:[#allocation5 + $0xc0] sm:$0xff]
        %v430 = vld [vmem:[#allocation5 + $0xc8] sm:$0xff]
        %v431 = vld [vmem:[#allocation5 + $0xd0] sm:$0xff]
        %v432 = vld [vmem:[#allocation5 + $0xd8] sm:$0xff]
        %v433 = vld [vmem:[#allocation5 + $0xe0] sm:$0xff]
        %v434 = vld [vmem:[#allocation5 + $0xe8] sm:$0xff]
        %v435 = vld [vmem:[#allocation5 + $0xf0] sm:$0xff]
        %v436 = vld [vmem:[#allocation5 + $0xf8] sm:$0xff]
        %v437 = vld [vmem:[#allocation7] sm:$0xf]
        %v439 = vlaneseq
        %v440 = vshrl.u32 %v439, 7
        %v441 = vsub.s32 0, %v440
        %v442 = vrot.slane %v437, %v441
        %v443 = vlaneseq
        %v444 = vshrl.u32 %v443, 7
        %v445 = vsub.s32 1, %v444
        %v446 = vrot.slane %v437, %v445
        %v447 = vlaneseq
        %v448 = vshrl.u32 %v447, 7
        %v449 = vsub.s32 2, %v448
        %v450 = vrot.slane %v437, %v449
        %v451 = vlaneseq
        %v452 = vshrl.u32 %v451, 7
        %v453 = vsub.s32 3, %v452
        %v454 = vrot.slane %v437, %v453
        %v491 = vunpack.c.l.b16 %v405
        %v492 = vunpack.c.h.b16 %v405
        %v493 = vunpack.c.l.b16 %v406
        %v494 = vunpack.c.h.b16 %v406
        %v495 = vunpack.c.l.b16 %v407
        %v496 = vunpack.c.h.b16 %v407
        %v497 = vunpack.c.l.b16 %v408
        %v498 = vunpack.c.h.b16 %v408
        %v499 = vunpack.c.l.b16 %v409
        %v500 = vunpack.c.h.b16 %v409
        %v501 = vunpack.c.l.b16 %v410
        %v502 = vunpack.c.h.b16 %v410
        %v503 = vunpack.c.l.b16 %v411
        %v504 = vunpack.c.h.b16 %v411
        %v505 = vunpack.c.l.b16 %v412
        %v506 = vunpack.c.h.b16 %v412
        %v507 = vunpack.c.l.b16 %v413
        %v508 = vunpack.c.h.b16 %v413
        %v509 = vunpack.c.l.b16 %v414
        %v510 = vunpack.c.h.b16 %v414
        %v511 = vunpack.c.l.b16 %v415
        %v512 = vunpack.c.h.b16 %v415
        %v513 = vunpack.c.l.b16 %v416
        %v514 = vunpack.c.h.b16 %v416
        %v515 = vunpack.c.l.b16 %v417
        %v516 = vunpack.c.h.b16 %v417
        %v517 = vunpack.c.l.b16 %v418
        %v518 = vunpack.c.h.b16 %v418
        %v519 = vunpack.c.l.b16 %v419
        %v520 = vunpack.c.h.b16 %v419
        %v521 = vunpack.c.l.b16 %v420
        %v522 = vunpack.c.h.b16 %v420
        %v523 = vunpack.c.l.b16 %v421
        %v524 = vunpack.c.h.b16 %v421
        %v525 = vunpack.c.l.b16 %v422
        %v526 = vunpack.c.h.b16 %v422
        %v527 = vunpack.c.l.b16 %v423
        %v528 = vunpack.c.h.b16 %v423
        %v529 = vunpack.c.l.b16 %v424
        %v530 = vunpack.c.h.b16 %v424
        %v531 = vunpack.c.l.b16 %v425
        %v532 = vunpack.c.h.b16 %v425
        %v533 = vunpack.c.l.b16 %v426
        %v534 = vunpack.c.h.b16 %v426
        %v535 = vunpack.c.l.b16 %v427
        %v536 = vunpack.c.h.b16 %v427
        %v537 = vunpack.c.l.b16 %v428
        %v538 = vunpack.c.h.b16 %v428
        %v539 = vunpack.c.l.b16 %v429
        %v540 = vunpack.c.h.b16 %v429
        %v541 = vunpack.c.l.b16 %v430
        %v542 = vunpack.c.h.b16 %v430
        %v543 = vunpack.c.l.b16 %v431
        %v544 = vunpack.c.h.b16 %v431
        %v545 = vunpack.c.l.b16 %v432
        %v546 = vunpack.c.h.b16 %v432
        %v547 = vunpack.c.l.b16 %v433
        %v548 = vunpack.c.h.b16 %v433
        %v549 = vunpack.c.l.b16 %v434
        %v550 = vunpack.c.h.b16 %v434
        %v551 = vunpack.c.l.b16 %v435
        %v552 = vunpack.c.h.b16 %v435
        %v553 = vunpack.c.l.b16 %v436
        %v554 = vunpack.c.h.b16 %v436
        %v555 = vpack.c.b16 %v495, %v491
        %v556 = vpack.c.b16 %v496, %v492
        %v557 = vpack.c.b16 %v497, %v493
        %v558 = vpack.c.b16 %v498, %v494
        %v559 = vpack.c.b16 %v503, %v499
        %v560 = vpack.c.b16 %v504, %v500
        %v561 = vpack.c.b16 %v505, %v501
        %v562 = vpack.c.b16 %v506, %v502
        %v563 = vpack.c.b16 %v511, %v507
        %v564 = vpack.c.b16 %v512, %v508
        %v565 = vpack.c.b16 %v513, %v509
        %v566 = vpack.c.b16 %v514, %v510
        %v567 = vpack.c.b16 %v519, %v515
        %v568 = vpack.c.b16 %v520, %v516
        %v569 = vpack.c.b16 %v521, %v517
        %v570 = vpack.c.b16 %v522, %v518
        %v571 = vpack.c.b16 %v527, %v523
        %v572 = vpack.c.b16 %v528, %v524
        %v573 = vpack.c.b16 %v529, %v525
        %v574 = vpack.c.b16 %v530, %v526
        %v575 = vpack.c.b16 %v535, %v531
        %v576 = vpack.c.b16 %v536, %v532
        %v577 = vpack.c.b16 %v537, %v533
        %v578 = vpack.c.b16 %v538, %v534
        %v579 = vpack.c.b16 %v543, %v539
        %v580 = vpack.c.b16 %v544, %v540
        %v581 = vpack.c.b16 %v545, %v541
        %v582 = vpack.c.b16 %v546, %v542
        %v583 = vpack.c.b16 %v551, %v547
        %v584 = vpack.c.b16 %v552, %v548
        %v585 = vpack.c.b16 %v553, %v549
        %v586 = vpack.c.b16 %v554, %v550
        %619 = vmatprep.subr.bf16.mxu0 %v556
        %620 = vmatpush1.bf16.msra.mxu0 %v555
        %621 = vmatprep.subr.bf16.mxu0 %v560
        %622 = vmatpush1.bf16.msra.mxu0 %v559
        %623 = vmatprep.subr.bf16.mxu0 %v564
        %624 = vmatpush1.bf16.msra.mxu0 %v563
        %625 = vmatprep.subr.bf16.mxu0 %v568
        %626 = vmatpush1.bf16.msra.mxu0 %v567
        %627 = vmatprep.subr.bf16.mxu0 %v572
        %628 = vmatpush1.bf16.msra.mxu0 %v571
        %629 = vmatprep.subr.bf16.mxu0 %v576
        %630 = vmatpush1.bf16.msra.mxu0 %v575
        %631 = vmatprep.subr.bf16.mxu0 %v580
        %632 = vmatpush1.bf16.msra.mxu0 %v579
        %633 = vmatprep.subr.bf16.mxu0 %v584
        %634 = vmatpush1.bf16.msra.mxu0 %v583
        %635 = vmatprep.subr.bf16.mxu0 0
        %636 = vmatpush1.bf16.msra.mxu0 0
        %637 = vmatprep.subr.bf16.mxu0 0
        %638 = vmatpush1.bf16.msra.mxu0 0
        %639 = vmatprep.subr.bf16.mxu0 0
        %640 = vmatpush1.bf16.msra.mxu0 0
        %641 = vmatprep.subr.bf16.mxu0 0
        %642 = vmatpush1.bf16.msra.mxu0 0
        %643 = vmatprep.subr.bf16.mxu0 0
        %644 = vmatpush1.bf16.msra.mxu0 0
        %645 = vmatprep.subr.bf16.mxu0 0
        %646 = vmatpush1.bf16.msra.mxu0 0
        %647 = vmatprep.subr.bf16.mxu0 0
        %648 = vmatpush1.bf16.msra.mxu0 0
        %649 = vmatprep.subr.bf16.mxu0 0
        %650 = vmatpush1.bf16.msra.mxu0 0
        %651 = vmatprep.mubr.bf16.mxu0 0
        %652 = vmatmul.mubr.bf16.gmra.mrb[0].mxu0 %v404
        %v653 = vpop.f32.mrb[0].mxu0
        %v654 = vadd.f32 %v442, %v653
        %v655 = vpop.f32.mrb[0].mxu0
        %v656 = vadd.f32 %v446, %v655
        %v657 = vpop.f32.mrb[0].mxu0
        %v658 = vpop.f32.mrb[0].mxu0
        %659 = vdwg.mxu0
        %660 = vmatprep.subr.bf16.mxu0 %v558
        %661 = vmatpush1.bf16.msra.mxu0 %v557
        %662 = vmatprep.subr.bf16.mxu0 %v562
        %663 = vmatpush1.bf16.msra.mxu0 %v561
        %664 = vmatprep.subr.bf16.mxu0 %v566
        %665 = vmatpush1.bf16.msra.mxu0 %v565
        %666 = vmatprep.subr.bf16.mxu0 %v570
        %667 = vmatpush1.bf16.msra.mxu0 %v569
        %668 = vmatprep.subr.bf16.mxu0 %v574
        %669 = vmatpush1.bf16.msra.mxu0 %v573
        %670 = vmatprep.subr.bf16.mxu0 %v578
        %671 = vmatpush1.bf16.msra.mxu0 %v577
        %672 = vmatprep.subr.bf16.mxu0 %v582
        %673 = vmatpush1.bf16.msra.mxu0 %v581
        %674 = vmatprep.subr.bf16.mxu0 %v586
        %675 = vmatpush1.bf16.msra.mxu0 %v585
        %676 = vmatprep.subr.bf16.mxu0 0
        %677 = vmatpush1.bf16.msra.mxu0 0
        %678 = vmatprep.subr.bf16.mxu0 0
        %679 = vmatpush1.bf16.msra.mxu0 0
        %680 = vmatprep.subr.bf16.mxu0 0
        %681 = vmatpush1.bf16.msra.mxu0 0
        %682 = vmatprep.subr.bf16.mxu0 0
        %683 = vmatpush1.bf16.msra.mxu0 0
        %684 = vmatprep.subr.bf16.mxu0 0
        %685 = vmatpush1.bf16.msra.mxu0 0
        %686 = vmatprep.subr.bf16.mxu0 0
        %687 = vmatpush1.bf16.msra.mxu0 0
        %688 = vmatprep.subr.bf16.mxu0 0
        %689 = vmatpush1.bf16.msra.mxu0 0
        %690 = vmatprep.subr.bf16.mxu0 0
        %691 = vmatpush1.bf16.msra.mxu0 0
        %692 = vmatprep.mubr.bf16.mxu0 0
        %693 = vmatmul.mubr.bf16.gmra.mrb[0].mxu0 %v404
        %v694 = vpop.f32.mrb[0].mxu0
        %v695 = vadd.f32 %v450, %v694
        %v696 = vpop.f32.mrb[0].mxu0
        %v697 = vadd.f32 %v454, %v696
        %v698 = vpop.f32.mrb[0].mxu0
        %v699 = vpop.f32.mrb[0].mxu0
        %700 = vdwg.mxu0
        %v701 = vmax.f32 %v654, 0.0
        %v702 = vmax.f32 %v656, 0.0
        %v703 = vmax.f32 %v695, 0.0
        %v704 = vmax.f32 %v697, 0.0
        %v705 = vpack.c.bf16 %v701, %v701
        %v706 = vpack.c.bf16 %v702, %v702
        %v707 = vpack.c.bf16 %v703, %v703
        %v708 = vpack.c.bf16 %v704, %v704
        %v709 = vld [vmem:[#allocation8] sm:$0xff]
        %v710 = vld [vmem:[#allocation8 + $0x8] sm:$0xff]
        %v711 = vld [vmem:[#allocation8 + $0x10] sm:$0xff]
        %v712 = vld [vmem:[#allocation8 + $0x18] sm:$0xff]
        %v713 = vld [vmem:[#allocation8 + $0x20] sm:$0xff]
        %v714 = vld [vmem:[#allocation8 + $0x28] sm:$0xff]
        %v715 = vld [vmem:[#allocation8 + $0x30] sm:$0xff]
        %v716 = vld [vmem:[#allocation8 + $0x38] sm:$0xff]
        %v717 = vld [vmem:[#allocation8 + $0x40] sm:$0xff]
        %v718 = vld [vmem:[#allocation8 + $0x48] sm:$0xff]
        %v719 = vld [vmem:[#allocation8 + $0x50] sm:$0xff]
        %v720 = vld [vmem:[#allocation8 + $0x58] sm:$0xff]
        %v721 = vld [vmem:[#allocation8 + $0x60] sm:$0xff]
        %v722 = vld [vmem:[#allocation8 + $0x68] sm:$0xff]
        %v723 = vld [vmem:[#allocation8 + $0x70] sm:$0xff]
        %v724 = vld [vmem:[#allocation8 + $0x78] sm:$0xff]
        %v725 = vld [vmem:[#allocation8 + $0x80] sm:$0xff]
        %v726 = vld [vmem:[#allocation8 + $0x88] sm:$0xff]
        %v727 = vld [vmem:[#allocation8 + $0x90] sm:$0xff]
        %v728 = vld [vmem:[#allocation8 + $0x98] sm:$0xff]
        %v729 = vld [vmem:[#allocation8 + $0xa0] sm:$0xff]
        %v730 = vld [vmem:[#allocation8 + $0xa8] sm:$0xff]
        %v731 = vld [vmem:[#allocation8 + $0xb0] sm:$0xff]
        %v732 = vld [vmem:[#allocation8 + $0xb8] sm:$0xff]
        %v733 = vld [vmem:[#allocation8 + $0xc0] sm:$0xff]
        %v734 = vld [vmem:[#allocation8 + $0xc8] sm:$0xff]
        %v735 = vld [vmem:[#allocation8 + $0xd0] sm:$0xff]
        %v736 = vld [vmem:[#allocation8 + $0xd8] sm:$0xff]
        %v737 = vld [vmem:[#allocation8 + $0xe0] sm:$0xff]
        %v738 = vld [vmem:[#allocation8 + $0xe8] sm:$0xff]
        %v739 = vld [vmem:[#allocation8 + $0xf0] sm:$0xff]
        %v740 = vld [vmem:[#allocation8 + $0xf8] sm:$0xff]
        %v741 = vld [vmem:[#allocation8 + $0x100] sm:$0xff]
        %v742 = vld [vmem:[#allocation8 + $0x108] sm:$0xff]
        %v743 = vld [vmem:[#allocation8 + $0x110] sm:$0xff]
        %v744 = vld [vmem:[#allocation8 + $0x118] sm:$0xff]
        %v745 = vld [vmem:[#allocation8 + $0x120] sm:$0xff]
        %v746 = vld [vmem:[#allocation8 + $0x128] sm:$0xff]
        %v747 = vld [vmem:[#allocation8 + $0x130] sm:$0xff]
        %v748 = vld [vmem:[#allocation8 + $0x138] sm:$0xff]
        %v749 = vld [vmem:[#allocation8 + $0x140] sm:$0xff]
        %v750 = vld [vmem:[#allocation8 + $0x148] sm:$0xff]
        %v751 = vld [vmem:[#allocation8 + $0x150] sm:$0xff]
        %v752 = vld [vmem:[#allocation8 + $0x158] sm:$0xff]
        %v753 = vld [vmem:[#allocation8 + $0x160] sm:$0xff]
        %v754 = vld [vmem:[#allocation8 + $0x168] sm:$0xff]
        %v755 = vld [vmem:[#allocation8 + $0x170] sm:$0xff]
        %v756 = vld [vmem:[#allocation8 + $0x178] sm:$0xff]
        %v757 = vld [vmem:[#allocation8 + $0x180] sm:$0xff]
        %v758 = vld [vmem:[#allocation8 + $0x188] sm:$0xff]
        %v759 = vld [vmem:[#allocation8 + $0x190] sm:$0xff]
        %v760 = vld [vmem:[#allocation8 + $0x198] sm:$0xff]
        %v761 = vld [vmem:[#allocation8 + $0x1a0] sm:$0xff]
        %v762 = vld [vmem:[#allocation8 + $0x1a8] sm:$0xff]
        %v763 = vld [vmem:[#allocation8 + $0x1b0] sm:$0xff]
        %v764 = vld [vmem:[#allocation8 + $0x1b8] sm:$0xff]
        %v765 = vld [vmem:[#allocation8 + $0x1c0] sm:$0xff]
        %v766 = vld [vmem:[#allocation8 + $0x1c8] sm:$0xff]
        %v767 = vld [vmem:[#allocation8 + $0x1d0] sm:$0xff]
        %v768 = vld [vmem:[#allocation8 + $0x1d8] sm:$0xff]
        %v769 = vld [vmem:[#allocation8 + $0x1e0] sm:$0xff]
        %v770 = vld [vmem:[#allocation8 + $0x1e8] sm:$0xff]
        %v771 = vld [vmem:[#allocation8 + $0x1f0] sm:$0xff]
        %v772 = vld [vmem:[#allocation8 + $0x1f8] sm:$0xff]
        %v773 = vld [vmem:[#allocation8 + $0x200] sm:$0xff]
        %v774 = vld [vmem:[#allocation8 + $0x208] sm:$0xff]
        %v775 = vld [vmem:[#allocation8 + $0x210] sm:$0xff]
        %v776 = vld [vmem:[#allocation8 + $0x218] sm:$0xff]
        %v777 = vld [vmem:[#allocation8 + $0x220] sm:$0xff]
        %v778 = vld [vmem:[#allocation8 + $0x228] sm:$0xff]
        %v779 = vld [vmem:[#allocation8 + $0x230] sm:$0xff]
        %v780 = vld [vmem:[#allocation8 + $0x238] sm:$0xff]
        %v781 = vld [vmem:[#allocation8 + $0x240] sm:$0xff]
        %v782 = vld [vmem:[#allocation8 + $0x248] sm:$0xff]
        %v783 = vld [vmem:[#allocation8 + $0x250] sm:$0xff]
        %v784 = vld [vmem:[#allocation8 + $0x258] sm:$0xff]
        %v785 = vld [vmem:[#allocation8 + $0x260] sm:$0xff]
        %v786 = vld [vmem:[#allocation8 + $0x268] sm:$0xff]
        %v787 = vld [vmem:[#allocation8 + $0x270] sm:$0xff]
        %v788 = vld [vmem:[#allocation8 + $0x278] sm:$0xff]
        %v789 = vld [vmem:[#allocation8 + $0x280] sm:$0xff]
        %v790 = vld [vmem:[#allocation8 + $0x288] sm:$0xff]
        %v791 = vld [vmem:[#allocation8 + $0x290] sm:$0xff]
        %v792 = vld [vmem:[#allocation8 + $0x298] sm:$0xff]
        %v793 = vld [vmem:[#allocation8 + $0x2a0] sm:$0xff]
        %v794 = vld [vmem:[#allocation8 + $0x2a8] sm:$0xff]
        %v795 = vld [vmem:[#allocation8 + $0x2b0] sm:$0xff]
        %v796 = vld [vmem:[#allocation8 + $0x2b8] sm:$0xff]
        %v797 = vld [vmem:[#allocation8 + $0x2c0] sm:$0xff]
        %v798 = vld [vmem:[#allocation8 + $0x2c8] sm:$0xff]
        %v799 = vld [vmem:[#allocation8 + $0x2d0] sm:$0xff]
        %v800 = vld [vmem:[#allocation8 + $0x2d8] sm:$0xff]
        %v801 = vld [vmem:[#allocation8 + $0x2e0] sm:$0xff]
        %v802 = vld [vmem:[#allocation8 + $0x2e8] sm:$0xff]
        %v803 = vld [vmem:[#allocation8 + $0x2f0] sm:$0xff]
        %v804 = vld [vmem:[#allocation8 + $0x2f8] sm:$0xff]
        %v805 = vld [vmem:[#allocation8 + $0x300] sm:$0xff]
        %v806 = vld [vmem:[#allocation8 + $0x308] sm:$0xff]
        %v807 = vld [vmem:[#allocation8 + $0x310] sm:$0xff]
        %v808 = vld [vmem:[#allocation8 + $0x318] sm:$0xff]
        %v809 = vld [vmem:[#allocation8 + $0x320] sm:$0xff]
        %v810 = vld [vmem:[#allocation8 + $0x328] sm:$0xff]
        %v811 = vld [vmem:[#allocation8 + $0x330] sm:$0xff]
        %v812 = vld [vmem:[#allocation8 + $0x338] sm:$0xff]
        %v813 = vld [vmem:[#allocation8 + $0x340] sm:$0xff]
        %v814 = vld [vmem:[#allocation8 + $0x348] sm:$0xff]
        %v815 = vld [vmem:[#allocation8 + $0x350] sm:$0xff]
        %v816 = vld [vmem:[#allocation8 + $0x358] sm:$0xff]
        %v817 = vld [vmem:[#allocation8 + $0x360] sm:$0xff]
        %v818 = vld [vmem:[#allocation8 + $0x368] sm:$0xff]
        %v819 = vld [vmem:[#allocation8 + $0x370] sm:$0xff]
        %v820 = vld [vmem:[#allocation8 + $0x378] sm:$0xff]
        %v821 = vld [vmem:[#allocation8 + $0x380] sm:$0xff]
        %v822 = vld [vmem:[#allocation8 + $0x388] sm:$0xff]
        %v823 = vld [vmem:[#allocation8 + $0x390] sm:$0xff]
        %v824 = vld [vmem:[#allocation8 + $0x398] sm:$0xff]
        %v825 = vld [vmem:[#allocation8 + $0x3a0] sm:$0xff]
        %v826 = vld [vmem:[#allocation8 + $0x3a8] sm:$0xff]
        %v827 = vld [vmem:[#allocation8 + $0x3b0] sm:$0xff]
        %v828 = vld [vmem:[#allocation8 + $0x3b8] sm:$0xff]
        %v829 = vld [vmem:[#allocation8 + $0x3c0] sm:$0xff]
        %v830 = vld [vmem:[#allocation8 + $0x3c8] sm:$0xff]
        %v831 = vld [vmem:[#allocation8 + $0x3d0] sm:$0xff]
        %v832 = vld [vmem:[#allocation8 + $0x3d8] sm:$0xff]
        %v833 = vld [vmem:[#allocation8 + $0x3e0] sm:$0xff]
        %v834 = vld [vmem:[#allocation8 + $0x3e8] sm:$0xff]
        %v835 = vld [vmem:[#allocation8 + $0x3f0] sm:$0xff]
        %v836 = vld [vmem:[#allocation8 + $0x3f8] sm:$0xff]
        %v837 = vld [vmem:[#allocation10] sm:$0xf]
        %v839 = vlaneseq
        %v840 = vshrl.u32 %v839, 7
        %v841 = vsub.s32 0, %v840
        %v842 = vrot.slane %v837, %v841
        %v843 = vlaneseq
        %v844 = vshrl.u32 %v843, 7
        %v845 = vsub.s32 1, %v844
        %v846 = vrot.slane %v837, %v845
        %v847 = vlaneseq
        %v848 = vshrl.u32 %v847, 7
        %v849 = vsub.s32 2, %v848
        %v850 = vrot.slane %v837, %v849
        %v851 = vlaneseq
        %v852 = vshrl.u32 %v851, 7
        %v853 = vsub.s32 3, %v852
        %v854 = vrot.slane %v837, %v853
        %v987 = vunpack.c.l.b16 %v709
        %v988 = vunpack.c.h.b16 %v709
        %v989 = vunpack.c.l.b16 %v710
        %v990 = vunpack.c.h.b16 %v710
        %v991 = vunpack.c.l.b16 %v711
        %v992 = vunpack.c.h.b16 %v711
        %v993 = vunpack.c.l.b16 %v712
        %v994 = vunpack.c.h.b16 %v712
        %v995 = vunpack.c.l.b16 %v713
        %v996 = vunpack.c.h.b16 %v713
        %v997 = vunpack.c.l.b16 %v714
        %v998 = vunpack.c.h.b16 %v714
        %v999 = vunpack.c.l.b16 %v715
        %v1000 = vunpack.c.h.b16 %v715
        %v1001 = vunpack.c.l.b16 %v716
        %v1002 = vunpack.c.h.b16 %v716
        %v1003 = vunpack.c.l.b16 %v717
        %v1004 = vunpack.c.h.b16 %v717
        %v1005 = vunpack.c.l.b16 %v718
        %v1006 = vunpack.c.h.b16 %v718
        %v1007 = vunpack.c.l.b16 %v719
        %v1008 = vunpack.c.h.b16 %v719
        %v1009 = vunpack.c.l.b16 %v720
        %v1010 = vunpack.c.h.b16 %v720
        %v1011 = vunpack.c.l.b16 %v721
        %v1012 = vunpack.c.h.b16 %v721
        %v1013 = vunpack.c.l.b16 %v722
        %v1014 = vunpack.c.h.b16 %v722
        %v1015 = vunpack.c.l.b16 %v723
        %v1016 = vunpack.c.h.b16 %v723
        %v1017 = vunpack.c.l.b16 %v724
        %v1018 = vunpack.c.h.b16 %v724
        %v1019 = vunpack.c.l.b16 %v725
        %v1020 = vunpack.c.h.b16 %v725
        %v1021 = vunpack.c.l.b16 %v726
        %v1022 = vunpack.c.h.b16 %v726
        %v1023 = vunpack.c.l.b16 %v727
        %v1024 = vunpack.c.h.b16 %v727
        %v1025 = vunpack.c.l.b16 %v728
        %v1026 = vunpack.c.h.b16 %v728
        %v1027 = vunpack.c.l.b16 %v729
        %v1028 = vunpack.c.h.b16 %v729
        %v1029 = vunpack.c.l.b16 %v730
        %v1030 = vunpack.c.h.b16 %v730
        %v1031 = vunpack.c.l.b16 %v731
        %v1032 = vunpack.c.h.b16 %v731
        %v1033 = vunpack.c.l.b16 %v732
        %v1034 = vunpack.c.h.b16 %v732
        %v1035 = vunpack.c.l.b16 %v733
        %v1036 = vunpack.c.h.b16 %v733
        %v1037 = vunpack.c.l.b16 %v734
        %v1038 = vunpack.c.h.b16 %v734
        %v1039 = vunpack.c.l.b16 %v735
        %v1040 = vunpack.c.h.b16 %v735
        %v1041 = vunpack.c.l.b16 %v736
        %v1042 = vunpack.c.h.b16 %v736
        %v1043 = vunpack.c.l.b16 %v737
        %v1044 = vunpack.c.h.b16 %v737
        %v1045 = vunpack.c.l.b16 %v738
        %v1046 = vunpack.c.h.b16 %v738
        %v1047 = vunpack.c.l.b16 %v739
        %v1048 = vunpack.c.h.b16 %v739
        %v1049 = vunpack.c.l.b16 %v740
        %v1050 = vunpack.c.h.b16 %v740
        %v1051 = vunpack.c.l.b16 %v741
        %v1052 = vunpack.c.h.b16 %v741
        %v1053 = vunpack.c.l.b16 %v742
        %v1054 = vunpack.c.h.b16 %v742
        %v1055 = vunpack.c.l.b16 %v743
        %v1056 = vunpack.c.h.b16 %v743
        %v1057 = vunpack.c.l.b16 %v744
        %v1058 = vunpack.c.h.b16 %v744
        %v1059 = vunpack.c.l.b16 %v745
        %v1060 = vunpack.c.h.b16 %v745
        %v1061 = vunpack.c.l.b16 %v746
        %v1062 = vunpack.c.h.b16 %v746
        %v1063 = vunpack.c.l.b16 %v747
        %v1064 = vunpack.c.h.b16 %v747
        %v1065 = vunpack.c.l.b16 %v748
        %v1066 = vunpack.c.h.b16 %v748
        %v1067 = vunpack.c.l.b16 %v749
        %v1068 = vunpack.c.h.b16 %v749
        %v1069 = vunpack.c.l.b16 %v750
        %v1070 = vunpack.c.h.b16 %v750
        %v1071 = vunpack.c.l.b16 %v751
        %v1072 = vunpack.c.h.b16 %v751
        %v1073 = vunpack.c.l.b16 %v752
        %v1074 = vunpack.c.h.b16 %v752
        %v1075 = vunpack.c.l.b16 %v753
        %v1076 = vunpack.c.h.b16 %v753
        %v1077 = vunpack.c.l.b16 %v754
        %v1078 = vunpack.c.h.b16 %v754
        %v1079 = vunpack.c.l.b16 %v755
        %v1080 = vunpack.c.h.b16 %v755
        %v1081 = vunpack.c.l.b16 %v756
        %v1082 = vunpack.c.h.b16 %v756
        %v1083 = vunpack.c.l.b16 %v757
        %v1084 = vunpack.c.h.b16 %v757
        %v1085 = vunpack.c.l.b16 %v758
        %v1086 = vunpack.c.h.b16 %v758
        %v1087 = vunpack.c.l.b16 %v759
        %v1088 = vunpack.c.h.b16 %v759
        %v1089 = vunpack.c.l.b16 %v760
        %v1090 = vunpack.c.h.b16 %v760
        %v1091 = vunpack.c.l.b16 %v761
        %v1092 = vunpack.c.h.b16 %v761
        %v1093 = vunpack.c.l.b16 %v762
        %v1094 = vunpack.c.h.b16 %v762
        %v1095 = vunpack.c.l.b16 %v763
        %v1096 = vunpack.c.h.b16 %v763
        %v1097 = vunpack.c.l.b16 %v764
        %v1098 = vunpack.c.h.b16 %v764
        %v1099 = vunpack.c.l.b16 %v765
        %v1100 = vunpack.c.h.b16 %v765
        %v1101 = vunpack.c.l.b16 %v766
        %v1102 = vunpack.c.h.b16 %v766
        %v1103 = vunpack.c.l.b16 %v767
        %v1104 = vunpack.c.h.b16 %v767
        %v1105 = vunpack.c.l.b16 %v768
        %v1106 = vunpack.c.h.b16 %v768
        %v1107 = vunpack.c.l.b16 %v769
        %v1108 = vunpack.c.h.b16 %v769
        %v1109 = vunpack.c.l.b16 %v770
        %v1110 = vunpack.c.h.b16 %v770
        %v1111 = vunpack.c.l.b16 %v771
        %v1112 = vunpack.c.h.b16 %v771
        %v1113 = vunpack.c.l.b16 %v772
        %v1114 = vunpack.c.h.b16 %v772
        %v1115 = vunpack.c.l.b16 %v773
        %v1116 = vunpack.c.h.b16 %v773
        %v1117 = vunpack.c.l.b16 %v774
        %v1118 = vunpack.c.h.b16 %v774
        %v1119 = vunpack.c.l.b16 %v775
        %v1120 = vunpack.c.h.b16 %v775
        %v1121 = vunpack.c.l.b16 %v776
        %v1122 = vunpack.c.h.b16 %v776
        %v1123 = vunpack.c.l.b16 %v777
        %v1124 = vunpack.c.h.b16 %v777
        %v1125 = vunpack.c.l.b16 %v778
        %v1126 = vunpack.c.h.b16 %v778
        %v1127 = vunpack.c.l.b16 %v779
        %v1128 = vunpack.c.h.b16 %v779
        %v1129 = vunpack.c.l.b16 %v780
        %v1130 = vunpack.c.h.b16 %v780
        %v1131 = vunpack.c.l.b16 %v781
        %v1132 = vunpack.c.h.b16 %v781
        %v1133 = vunpack.c.l.b16 %v782
        %v1134 = vunpack.c.h.b16 %v782
        %v1135 = vunpack.c.l.b16 %v783
        %v1136 = vunpack.c.h.b16 %v783
        %v1137 = vunpack.c.l.b16 %v784
        %v1138 = vunpack.c.h.b16 %v784
        %v1139 = vunpack.c.l.b16 %v785
        %v1140 = vunpack.c.h.b16 %v785
        %v1141 = vunpack.c.l.b16 %v786
        %v1142 = vunpack.c.h.b16 %v786
        %v1143 = vunpack.c.l.b16 %v787
        %v1144 = vunpack.c.h.b16 %v787
        %v1145 = vunpack.c.l.b16 %v788
        %v1146 = vunpack.c.h.b16 %v788
        %v1147 = vunpack.c.l.b16 %v789
        %v1148 = vunpack.c.h.b16 %v789
        %v1149 = vunpack.c.l.b16 %v790
        %v1150 = vunpack.c.h.b16 %v790
        %v1151 = vunpack.c.l.b16 %v791
        %v1152 = vunpack.c.h.b16 %v791
        %v1153 = vunpack.c.l.b16 %v792
        %v1154 = vunpack.c.h.b16 %v792
        %v1155 = vunpack.c.l.b16 %v793
        %v1156 = vunpack.c.h.b16 %v793
        %v1157 = vunpack.c.l.b16 %v794
        %v1158 = vunpack.c.h.b16 %v794
        %v1159 = vunpack.c.l.b16 %v795
        %v1160 = vunpack.c.h.b16 %v795
        %v1161 = vunpack.c.l.b16 %v796
        %v1162 = vunpack.c.h.b16 %v796
        %v1163 = vunpack.c.l.b16 %v797
        %v1164 = vunpack.c.h.b16 %v797
        %v1165 = vunpack.c.l.b16 %v798
        %v1166 = vunpack.c.h.b16 %v798
        %v1167 = vunpack.c.l.b16 %v799
        %v1168 = vunpack.c.h.b16 %v799
        %v1169 = vunpack.c.l.b16 %v800
        %v1170 = vunpack.c.h.b16 %v800
        %v1171 = vunpack.c.l.b16 %v801
        %v1172 = vunpack.c.h.b16 %v801
        %v1173 = vunpack.c.l.b16 %v802
        %v1174 = vunpack.c.h.b16 %v802
        %v1175 = vunpack.c.l.b16 %v803
        %v1176 = vunpack.c.h.b16 %v803
        %v1177 = vunpack.c.l.b16 %v804
        %v1178 = vunpack.c.h.b16 %v804
        %v1179 = vunpack.c.l.b16 %v805
        %v1180 = vunpack.c.h.b16 %v805
        %v1181 = vunpack.c.l.b16 %v806
        %v1182 = vunpack.c.h.b16 %v806
        %v1183 = vunpack.c.l.b16 %v807
        %v1184 = vunpack.c.h.b16 %v807
        %v1185 = vunpack.c.l.b16 %v808
        %v1186 = vunpack.c.h.b16 %v808
        %v1187 = vunpack.c.l.b16 %v809
        %v1188 = vunpack.c.h.b16 %v809
        %v1189 = vunpack.c.l.b16 %v810
        %v1190 = vunpack.c.h.b16 %v810
        %v1191 = vunpack.c.l.b16 %v811
        %v1192 = vunpack.c.h.b16 %v811
        %v1193 = vunpack.c.l.b16 %v812
        %v1194 = vunpack.c.h.b16 %v812
        %v1195 = vunpack.c.l.b16 %v813
        %v1196 = vunpack.c.h.b16 %v813
        %v1197 = vunpack.c.l.b16 %v814
        %v1198 = vunpack.c.h.b16 %v814
        %v1199 = vunpack.c.l.b16 %v815
        %v1200 = vunpack.c.h.b16 %v815
        %v1201 = vunpack.c.l.b16 %v816
        %v1202 = vunpack.c.h.b16 %v816
        %v1203 = vunpack.c.l.b16 %v817
        %v1204 = vunpack.c.h.b16 %v817
        %v1205 = vunpack.c.l.b16 %v818
        %v1206 = vunpack.c.h.b16 %v818
        %v1207 = vunpack.c.l.b16 %v819
        %v1208 = vunpack.c.h.b16 %v819
        %v1209 = vunpack.c.l.b16 %v820
        %v1210 = vunpack.c.h.b16 %v820
        %v1211 = vunpack.c.l.b16 %v821
        %v1212 = vunpack.c.h.b16 %v821
        %v1213 = vunpack.c.l.b16 %v822
        %v1214 = vunpack.c.h.b16 %v822
        %v1215 = vunpack.c.l.b16 %v823
        %v1216 = vunpack.c.h.b16 %v823
        %v1217 = vunpack.c.l.b16 %v824
        %v1218 = vunpack.c.h.b16 %v824
        %v1219 = vunpack.c.l.b16 %v825
        %v1220 = vunpack.c.h.b16 %v825
        %v1221 = vunpack.c.l.b16 %v826
        %v1222 = vunpack.c.h.b16 %v826
        %v1223 = vunpack.c.l.b16 %v827
        %v1224 = vunpack.c.h.b16 %v827
        %v1225 = vunpack.c.l.b16 %v828
        %v1226 = vunpack.c.h.b16 %v828
        %v1227 = vunpack.c.l.b16 %v829
        %v1228 = vunpack.c.h.b16 %v829
        %v1229 = vunpack.c.l.b16 %v830
        %v1230 = vunpack.c.h.b16 %v830
        %v1231 = vunpack.c.l.b16 %v831
        %v1232 = vunpack.c.h.b16 %v831
        %v1233 = vunpack.c.l.b16 %v832
        %v1234 = vunpack.c.h.b16 %v832
        %v1235 = vunpack.c.l.b16 %v833
        %v1236 = vunpack.c.h.b16 %v833
        %v1237 = vunpack.c.l.b16 %v834
        %v1238 = vunpack.c.h.b16 %v834
        %v1239 = vunpack.c.l.b16 %v835
        %v1240 = vunpack.c.h.b16 %v835
        %v1241 = vunpack.c.l.b16 %v836
        %v1242 = vunpack.c.h.b16 %v836
        %v1243 = vpack.c.b16 %v991, %v987
        %v1244 = vpack.c.b16 %v992, %v988
        %v1245 = vpack.c.b16 %v993, %v989
        %v1246 = vpack.c.b16 %v994, %v990
        %v1247 = vpack.c.b16 %v999, %v995
        %v1248 = vpack.c.b16 %v1000, %v996
        %v1249 = vpack.c.b16 %v1001, %v997
        %v1250 = vpack.c.b16 %v1002, %v998
        %v1251 = vpack.c.b16 %v1007, %v1003
        %v1252 = vpack.c.b16 %v1008, %v1004
        %v1253 = vpack.c.b16 %v1009, %v1005
        %v1254 = vpack.c.b16 %v1010, %v1006
        %v1255 = vpack.c.b16 %v1015, %v1011
        %v1256 = vpack.c.b16 %v1016, %v1012
        %v1257 = vpack.c.b16 %v1017, %v1013
        %v1258 = vpack.c.b16 %v1018, %v1014
        %v1259 = vpack.c.b16 %v1023, %v1019
        %v1260 = vpack.c.b16 %v1024, %v1020
        %v1261 = vpack.c.b16 %v1025, %v1021
        %v1262 = vpack.c.b16 %v1026, %v1022
        %v1263 = vpack.c.b16 %v1031, %v1027
        %v1264 = vpack.c.b16 %v1032, %v1028
        %v1265 = vpack.c.b16 %v1033, %v1029
        %v1266 = vpack.c.b16 %v1034, %v1030
        %v1267 = vpack.c.b16 %v1039, %v1035
        %v1268 = vpack.c.b16 %v1040, %v1036
        %v1269 = vpack.c.b16 %v1041, %v1037
        %v1270 = vpack.c.b16 %v1042, %v1038
        %v1271 = vpack.c.b16 %v1047, %v1043
        %v1272 = vpack.c.b16 %v1048, %v1044
        %v1273 = vpack.c.b16 %v1049, %v1045
        %v1274 = vpack.c.b16 %v1050, %v1046
        %v1275 = vpack.c.b16 %v1055, %v1051
        %v1276 = vpack.c.b16 %v1056, %v1052
        %v1277 = vpack.c.b16 %v1057, %v1053
        %v1278 = vpack.c.b16 %v1058, %v1054
        %v1279 = vpack.c.b16 %v1063, %v1059
        %v1280 = vpack.c.b16 %v1064, %v1060
        %v1281 = vpack.c.b16 %v1065, %v1061
        %v1282 = vpack.c.b16 %v1066, %v1062
        %v1283 = vpack.c.b16 %v1071, %v1067
        %v1284 = vpack.c.b16 %v1072, %v1068
        %v1285 = vpack.c.b16 %v1073, %v1069
        %v1286 = vpack.c.b16 %v1074, %v1070
        %v1287 = vpack.c.b16 %v1079, %v1075
        %v1288 = vpack.c.b16 %v1080, %v1076
        %v1289 = vpack.c.b16 %v1081, %v1077
        %v1290 = vpack.c.b16 %v1082, %v1078
        %v1291 = vpack.c.b16 %v1087, %v1083
        %v1292 = vpack.c.b16 %v1088, %v1084
        %v1293 = vpack.c.b16 %v1089, %v1085
        %v1294 = vpack.c.b16 %v1090, %v1086
        %v1295 = vpack.c.b16 %v1095, %v1091
        %v1296 = vpack.c.b16 %v1096, %v1092
        %v1297 = vpack.c.b16 %v1097, %v1093
        %v1298 = vpack.c.b16 %v1098, %v1094
        %v1299 = vpack.c.b16 %v1103, %v1099
        %v1300 = vpack.c.b16 %v1104, %v1100
        %v1301 = vpack.c.b16 %v1105, %v1101
        %v1302 = vpack.c.b16 %v1106, %v1102
        %v1303 = vpack.c.b16 %v1111, %v1107
        %v1304 = vpack.c.b16 %v1112, %v1108
        %v1305 = vpack.c.b16 %v1113, %v1109
        %v1306 = vpack.c.b16 %v1114, %v1110
        %v1307 = vpack.c.b16 %v1119, %v1115
        %v1308 = vpack.c.b16 %v1120, %v1116
        %v1309 = vpack.c.b16 %v1121, %v1117
        %v1310 = vpack.c.b16 %v1122, %v1118
        %v1311 = vpack.c.b16 %v1127, %v1123
        %v1312 = vpack.c.b16 %v1128, %v1124
        %v1313 = vpack.c.b16 %v1129, %v1125
        %v1314 = vpack.c.b16 %v1130, %v1126
        %v1315 = vpack.c.b16 %v1135, %v1131
        %v1316 = vpack.c.b16 %v1136, %v1132
        %v1317 = vpack.c.b16 %v1137, %v1133
        %v1318 = vpack.c.b16 %v1138, %v1134
        %v1319 = vpack.c.b16 %v1143, %v1139
        %v1320 = vpack.c.b16 %v1144, %v1140
        %v1321 = vpack.c.b16 %v1145, %v1141
        %v1322 = vpack.c.b16 %v1146, %v1142
        %v1323 = vpack.c.b16 %v1151, %v1147
        %v1324 = vpack.c.b16 %v1152, %v1148
        %v1325 = vpack.c.b16 %v1153, %v1149
        %v1326 = vpack.c.b16 %v1154, %v1150
        %v1327 = vpack.c.b16 %v1159, %v1155
        %v1328 = vpack.c.b16 %v1160, %v1156
        %v1329 = vpack.c.b16 %v1161, %v1157
        %v1330 = vpack.c.b16 %v1162, %v1158
        %v1331 = vpack.c.b16 %v1167, %v1163
        %v1332 = vpack.c.b16 %v1168, %v1164
        %v1333 = vpack.c.b16 %v1169, %v1165
        %v1334 = vpack.c.b16 %v1170, %v1166
        %v1335 = vpack.c.b16 %v1175, %v1171
        %v1336 = vpack.c.b16 %v1176, %v1172
        %v1337 = vpack.c.b16 %v1177, %v1173
        %v1338 = vpack.c.b16 %v1178, %v1174
        %v1339 = vpack.c.b16 %v1183, %v1179
        %v1340 = vpack.c.b16 %v1184, %v1180
        %v1341 = vpack.c.b16 %v1185, %v1181
        %v1342 = vpack.c.b16 %v1186, %v1182
        %v1343 = vpack.c.b16 %v1191, %v1187
        %v1344 = vpack.c.b16 %v1192, %v1188
        %v1345 = vpack.c.b16 %v1193, %v1189
        %v1346 = vpack.c.b16 %v1194, %v1190
        %v1347 = vpack.c.b16 %v1199, %v1195
        %v1348 = vpack.c.b16 %v1200, %v1196
        %v1349 = vpack.c.b16 %v1201, %v1197
        %v1350 = vpack.c.b16 %v1202, %v1198
        %v1351 = vpack.c.b16 %v1207, %v1203
        %v1352 = vpack.c.b16 %v1208, %v1204
        %v1353 = vpack.c.b16 %v1209, %v1205
        %v1354 = vpack.c.b16 %v1210, %v1206
        %v1355 = vpack.c.b16 %v1215, %v1211
        %v1356 = vpack.c.b16 %v1216, %v1212
        %v1357 = vpack.c.b16 %v1217, %v1213
        %v1358 = vpack.c.b16 %v1218, %v1214
        %v1359 = vpack.c.b16 %v1223, %v1219
        %v1360 = vpack.c.b16 %v1224, %v1220
        %v1361 = vpack.c.b16 %v1225, %v1221
        %v1362 = vpack.c.b16 %v1226, %v1222
        %v1363 = vpack.c.b16 %v1231, %v1227
        %v1364 = vpack.c.b16 %v1232, %v1228
        %v1365 = vpack.c.b16 %v1233, %v1229
        %v1366 = vpack.c.b16 %v1234, %v1230
        %v1367 = vpack.c.b16 %v1239, %v1235
        %v1368 = vpack.c.b16 %v1240, %v1236
        %v1369 = vpack.c.b16 %v1241, %v1237
        %v1370 = vpack.c.b16 %v1242, %v1238
        %1499 = vmatprep.subr.bf16.mxu0 %v1244
        %1500 = vmatpush1.bf16.msra.mxu0 %v1243
        %1501 = vmatprep.subr.bf16.mxu0 %v1248
        %1502 = vmatpush1.bf16.msra.mxu0 %v1247
        %1503 = vmatprep.subr.bf16.mxu0 %v1252
        %1504 = vmatpush1.bf16.msra.mxu0 %v1251
        %1505 = vmatprep.subr.bf16.mxu0 %v1256
        %1506 = vmatpush1.bf16.msra.mxu0 %v1255
        %1507 = vmatprep.subr.bf16.mxu0 %v1260
        %1508 = vmatpush1.bf16.msra.mxu0 %v1259
        %1509 = vmatprep.subr.bf16.mxu0 %v1264
        %1510 = vmatpush1.bf16.msra.mxu0 %v1263
        %1511 = vmatprep.subr.bf16.mxu0 %v1268
        %1512 = vmatpush1.bf16.msra.mxu0 %v1267
        %1513 = vmatprep.subr.bf16.mxu0 %v1272
        %1514 = vmatpush1.bf16.msra.mxu0 %v1271
        %1515 = vmatprep.subr.bf16.mxu0 %v1276
        %1516 = vmatpush1.bf16.msra.mxu0 %v1275
        %1517 = vmatprep.subr.bf16.mxu0 %v1280
        %1518 = vmatpush1.bf16.msra.mxu0 %v1279
        %1519 = vmatprep.subr.bf16.mxu0 %v1284
        %1520 = vmatpush1.bf16.msra.mxu0 %v1283
        %1521 = vmatprep.subr.bf16.mxu0 %v1288
        %1522 = vmatpush1.bf16.msra.mxu0 %v1287
        %1523 = vmatprep.subr.bf16.mxu0 %v1292
        %1524 = vmatpush1.bf16.msra.mxu0 %v1291
        %1525 = vmatprep.subr.bf16.mxu0 %v1296
        %1526 = vmatpush1.bf16.msra.mxu0 %v1295
        %1527 = vmatprep.subr.bf16.mxu0 %v1300
        %1528 = vmatpush1.bf16.msra.mxu0 %v1299
        %1529 = vmatprep.subr.bf16.mxu0 %v1304
        %1530 = vmatpush1.bf16.msra.mxu0 %v1303
        %1531 = vmatprep.mubr.bf16.mxu0 %v706
        %1532 = vmatmul.mubr.bf16.gmra.mrb[0].mxu0 %v705
        %v1533 = vpop.f32.mrb[0].mxu0
        %v1534 = vadd.f32 %v842, %v1533
        %v1535 = vpop.f32.mrb[0].mxu0
        %v1536 = vadd.f32 %v846, %v1535
        %v1537 = vpop.f32.mrb[0].mxu0
        %v1538 = vpop.f32.mrb[0].mxu0
        %1539 = vdwg.mxu0
        %1540 = vmatprep.subr.bf16.mxu0 %v1308
        %1541 = vmatpush1.bf16.msra.mxu0 %v1307
        %1542 = vmatprep.subr.bf16.mxu0 %v1312
        %1543 = vmatpush1.bf16.msra.mxu0 %v1311
        %1544 = vmatprep.subr.bf16.mxu0 %v1316
        %1545 = vmatpush1.bf16.msra.mxu0 %v1315
        %1546 = vmatprep.subr.bf16.mxu0 %v1320
        %1547 = vmatpush1.bf16.msra.mxu0 %v1319
        %1548 = vmatprep.subr.bf16.mxu0 %v1324
        %1549 = vmatpush1.bf16.msra.mxu0 %v1323
        %1550 = vmatprep.subr.bf16.mxu0 %v1328
        %1551 = vmatpush1.bf16.msra.mxu0 %v1327
        %1552 = vmatprep.subr.bf16.mxu0 %v1332
        %1553 = vmatpush1.bf16.msra.mxu0 %v1331
        %1554 = vmatprep.subr.bf16.mxu0 %v1336
        %1555 = vmatpush1.bf16.msra.mxu0 %v1335
        %1556 = vmatprep.subr.bf16.mxu0 %v1340
        %1557 = vmatpush1.bf16.msra.mxu0 %v1339
        %1558 = vmatprep.subr.bf16.mxu0 %v1344
        %1559 = vmatpush1.bf16.msra.mxu0 %v1343
        %1560 = vmatprep.subr.bf16.mxu0 %v1348
        %1561 = vmatpush1.bf16.msra.mxu0 %v1347
        %1562 = vmatprep.subr.bf16.mxu0 %v1352
        %1563 = vmatpush1.bf16.msra.mxu0 %v1351
        %1564 = vmatprep.subr.bf16.mxu0 %v1356
        %1565 = vmatpush1.bf16.msra.mxu0 %v1355
        %1566 = vmatprep.subr.bf16.mxu0 %v1360
        %1567 = vmatpush1.bf16.msra.mxu0 %v1359
        %1568 = vmatprep.subr.bf16.mxu0 %v1364
        %1569 = vmatpush1.bf16.msra.mxu0 %v1363
        %1570 = vmatprep.subr.bf16.mxu0 %v1368
        %1571 = vmatpush1.bf16.msra.mxu0 %v1367
        %1572 = vmatprep.mubr.bf16.mxu0 %v708
        %1573 = vmatmul.mubr.bf16.gmra.mrb[0].mxu0 %v707
        %v1574 = vpop.f32.mrb[0].mxu0
        %v1575 = vadd.f32 %v1534, %v1574
        %v1576 = vpop.f32.mrb[0].mxu0
        %v1577 = vadd.f32 %v1536, %v1576
        %v1578 = vpop.f32.mrb[0].mxu0
        %v1579 = vpop.f32.mrb[0].mxu0
        %1580 = vdwg.mxu0
        %1581 = vmatprep.subr.bf16.mxu0 %v1246
        %1582 = vmatpush1.bf16.msra.mxu0 %v1245
        %1583 = vmatprep.subr.bf16.mxu0 %v1250
        %1584 = vmatpush1.bf16.msra.mxu0 %v1249
        %1585 = vmatprep.subr.bf16.mxu0 %v1254
        %1586 = vmatpush1.bf16.msra.mxu0 %v1253
        %1587 = vmatprep.subr.bf16.mxu0 %v1258
        %1588 = vmatpush1.bf16.msra.mxu0 %v1257
        %1589 = vmatprep.subr.bf16.mxu0 %v1262
        %1590 = vmatpush1.bf16.msra.mxu0 %v1261
        %1591 = vmatprep.subr.bf16.mxu0 %v1266
        %1592 = vmatpush1.bf16.msra.mxu0 %v1265
        %1593 = vmatprep.subr.bf16.mxu0 %v1270
        %1594 = vmatpush1.bf16.msra.mxu0 %v1269
        %1595 = vmatprep.subr.bf16.mxu0 %v1274
        %1596 = vmatpush1.bf16.msra.mxu0 %v1273
        %1597 = vmatprep.subr.bf16.mxu0 %v1278
        %1598 = vmatpush1.bf16.msra.mxu0 %v1277
        %1599 = vmatprep.subr.bf16.mxu0 %v1282
        %1600 = vmatpush1.bf16.msra.mxu0 %v1281
        %1601 = vmatprep.subr.bf16.mxu0 %v1286
        %1602 = vmatpush1.bf16.msra.mxu0 %v1285
        %1603 = vmatprep.subr.bf16.mxu0 %v1290
        %1604 = vmatpush1.bf16.msra.mxu0 %v1289
        %1605 = vmatprep.subr.bf16.mxu0 %v1294
        %1606 = vmatpush1.bf16.msra.mxu0 %v1293
        %1607 = vmatprep.subr.bf16.mxu0 %v1298
        %1608 = vmatpush1.bf16.msra.mxu0 %v1297
        %1609 = vmatprep.subr.bf16.mxu0 %v1302
        %1610 = vmatpush1.bf16.msra.mxu0 %v1301
        %1611 = vmatprep.subr.bf16.mxu0 %v1306
        %1612 = vmatpush1.bf16.msra.mxu0 %v1305
        %1613 = vmatprep.mubr.bf16.mxu0 %v706
        %1614 = vmatmul.mubr.bf16.gmra.mrb[0].mxu0 %v705
        %v1615 = vpop.f32.mrb[0].mxu0
        %v1616 = vadd.f32 %v850, %v1615
        %v1617 = vpop.f32.mrb[0].mxu0
        %v1618 = vadd.f32 %v854, %v1617
        %v1619 = vpop.f32.mrb[0].mxu0
        %v1620 = vpop.f32.mrb[0].mxu0
        %1621 = vdwg.mxu0
        %1622 = vmatprep.subr.bf16.mxu0 %v1310
        %1623 = vmatpush1.bf16.msra.mxu0 %v1309
        %1624 = vmatprep.subr.bf16.mxu0 %v1314
        %1625 = vmatpush1.bf16.msra.mxu0 %v1313
        %1626 = vmatprep.subr.bf16.mxu0 %v1318
        %1627 = vmatpush1.bf16.msra.mxu0 %v1317
        %1628 = vmatprep.subr.bf16.mxu0 %v1322
        %1629 = vmatpush1.bf16.msra.mxu0 %v1321
        %1630 = vmatprep.subr.bf16.mxu0 %v1326
        %1631 = vmatpush1.bf16.msra.mxu0 %v1325
        %1632 = vmatprep.subr.bf16.mxu0 %v1330
        %1633 = vmatpush1.bf16.msra.mxu0 %v1329
        %1634 = vmatprep.subr.bf16.mxu0 %v1334
        %1635 = vmatpush1.bf16.msra.mxu0 %v1333
        %1636 = vmatprep.subr.bf16.mxu0 %v1338
        %1637 = vmatpush1.bf16.msra.mxu0 %v1337
        %1638 = vmatprep.subr.bf16.mxu0 %v1342
        %1639 = vmatpush1.bf16.msra.mxu0 %v1341
        %1640 = vmatprep.subr.bf16.mxu0 %v1346
        %1641 = vmatpush1.bf16.msra.mxu0 %v1345
        %1642 = vmatprep.subr.bf16.mxu0 %v1350
        %1643 = vmatpush1.bf16.msra.mxu0 %v1349
        %1644 = vmatprep.subr.bf16.mxu0 %v1354
        %1645 = vmatpush1.bf16.msra.mxu0 %v1353
        %1646 = vmatprep.subr.bf16.mxu0 %v1358
        %1647 = vmatpush1.bf16.msra.mxu0 %v1357
        %1648 = vmatprep.subr.bf16.mxu0 %v1362
        %1649 = vmatpush1.bf16.msra.mxu0 %v1361
        %1650 = vmatprep.subr.bf16.mxu0 %v1366
        %1651 = vmatpush1.bf16.msra.mxu0 %v1365
        %1652 = vmatprep.subr.bf16.mxu0 %v1370
        %1653 = vmatpush1.bf16.msra.mxu0 %v1369
        %1654 = vmatprep.mubr.bf16.mxu0 %v708
        %1655 = vmatmul.mubr.bf16.gmra.mrb[0].mxu0 %v707
        %v1656 = vpop.f32.mrb[0].mxu0
        %v1657 = vadd.f32 %v1616, %v1656
        %v1658 = vpop.f32.mrb[0].mxu0
        %v1659 = vadd.f32 %v1618, %v1658
        %v1660 = vpop.f32.mrb[0].mxu0
        %v1661 = vpop.f32.mrb[0].mxu0
        %1662 = vdwg.mxu0
        %v1663 = vmax.f32 %v1575, 0.0
        %v1664 = vmax.f32 %v1577, 0.0
        %v1665 = vmax.f32 %v1657, 0.0
        %v1666 = vmax.f32 %v1659, 0.0
        %v1667 = vpack.c.bf16 %v1663, %v1663
        %v1668 = vpack.c.bf16 %v1664, %v1664
        %v1669 = vpack.c.bf16 %v1665, %v1665
        %v1670 = vpack.c.bf16 %v1666, %v1666
        %v1671 = vld [vmem:[%s354] sm:$0xff]
        %v1672 = vld [vmem:[%s354 + $0x8] sm:$0xff]
        %v1673 = vld [vmem:[%s354 + $0x10] sm:$0xff]
        %v1674 = vld [vmem:[%s354 + $0x18] sm:$0xff]
        %v1675 = vld [vmem:[%s354 + $0x20] sm:$0xff]
        %v1676 = vld [vmem:[%s354 + $0x28] sm:$0xff]
        %v1677 = vld [vmem:[%s354 + $0x30] sm:$0xff]
        %v1678 = vld [vmem:[%s354 + $0x38] sm:$0xff]
        %v1679 = vld [vmem:[%s354 + $0x40] sm:$0xff]
        %v1680 = vld [vmem:[%s354 + $0x48] sm:$0xff]
        %v1681 = vld [vmem:[%s354 + $0x50] sm:$0xff]
        %v1682 = vld [vmem:[%s354 + $0x58] sm:$0xff]
        %v1683 = vld [vmem:[%s354 + $0x60] sm:$0xff]
        %v1684 = vld [vmem:[%s354 + $0x68] sm:$0xff]
        %v1685 = vld [vmem:[%s354 + $0x70] sm:$0xff]
        %v1686 = vld [vmem:[%s354 + $0x78] sm:$0xff]
        %v1687 = vld [vmem:[%s354 + $0x80] sm:$0xff]
        %v1688 = vld [vmem:[%s354 + $0x88] sm:$0xff]
        %v1689 = vld [vmem:[%s354 + $0x90] sm:$0xff]
        %v1690 = vld [vmem:[%s354 + $0x98] sm:$0xff]
        %v1691 = vld [vmem:[%s354 + $0xa0] sm:$0xff]
        %v1692 = vld [vmem:[%s354 + $0xa8] sm:$0xff]
        %v1693 = vld [vmem:[%s354 + $0xb0] sm:$0xff]
        %v1694 = vld [vmem:[%s354 + $0xb8] sm:$0xff]
        %v1695 = vld [vmem:[%s354 + $0xc0] sm:$0xff]
        %v1696 = vld [vmem:[%s354 + $0xc8] sm:$0xff]
        %v1697 = vld [vmem:[%s354 + $0xd0] sm:$0xff]
        %v1698 = vld [vmem:[%s354 + $0xd8] sm:$0xff]
        %v1699 = vld [vmem:[%s354 + $0xe0] sm:$0xff]
        %v1700 = vld [vmem:[%s354 + $0xe8] sm:$0xff]
        %v1701 = vld [vmem:[%s354 + $0xf0] sm:$0xff]
        %v1702 = vld [vmem:[%s354 + $0xf8] sm:$0xff]
        %v1703 = vld [vmem:[%s354 + $0x100] sm:$0xff]
        %v1704 = vld [vmem:[%s354 + $0x108] sm:$0xff]
        %v1705 = vld [vmem:[%s354 + $0x110] sm:$0xff]
        %v1706 = vld [vmem:[%s354 + $0x118] sm:$0xff]
        %v1707 = vld [vmem:[%s354 + $0x120] sm:$0xff]
        %v1708 = vld [vmem:[%s354 + $0x128] sm:$0xff]
        %v1709 = vld [vmem:[%s354 + $0x130] sm:$0xff]
        %v1710 = vld [vmem:[%s354 + $0x138] sm:$0xff]
        %v1711 = vld [vmem:[%s354 + $0x140] sm:$0xff]
        %v1712 = vld [vmem:[%s354 + $0x148] sm:$0xff]
        %v1713 = vld [vmem:[%s354 + $0x150] sm:$0xff]
        %v1714 = vld [vmem:[%s354 + $0x158] sm:$0xff]
        %v1715 = vld [vmem:[%s354 + $0x160] sm:$0xff]
        %v1716 = vld [vmem:[%s354 + $0x168] sm:$0xff]
        %v1717 = vld [vmem:[%s354 + $0x170] sm:$0xff]
        %v1718 = vld [vmem:[%s354 + $0x178] sm:$0xff]
        %v1719 = vld [vmem:[%s354 + $0x180] sm:$0xff]
        %v1720 = vld [vmem:[%s354 + $0x188] sm:$0xff]
        %v1721 = vld [vmem:[%s354 + $0x190] sm:$0xff]
        %v1722 = vld [vmem:[%s354 + $0x198] sm:$0xff]
        %v1723 = vld [vmem:[%s354 + $0x1a0] sm:$0xff]
        %v1724 = vld [vmem:[%s354 + $0x1a8] sm:$0xff]
        %v1725 = vld [vmem:[%s354 + $0x1b0] sm:$0xff]
        %v1726 = vld [vmem:[%s354 + $0x1b8] sm:$0xff]
        %v1727 = vld [vmem:[%s354 + $0x1c0] sm:$0xff]
        %v1728 = vld [vmem:[%s354 + $0x1c8] sm:$0xff]
        %v1729 = vld [vmem:[%s354 + $0x1d0] sm:$0xff]
        %v1730 = vld [vmem:[%s354 + $0x1d8] sm:$0xff]
        %v1731 = vld [vmem:[%s354 + $0x1e0] sm:$0xff]
        %v1732 = vld [vmem:[%s354 + $0x1e8] sm:$0xff]
        %v1733 = vld [vmem:[%s354 + $0x1f0] sm:$0xff]
        %v1734 = vld [vmem:[%s354 + $0x1f8] sm:$0xff]
        %v1735 = vld [vmem:[%s354 + $0x200] sm:$0xff]
        %v1736 = vld [vmem:[%s354 + $0x208] sm:$0xff]
        %v1737 = vld [vmem:[%s354 + $0x210] sm:$0xff]
        %v1738 = vld [vmem:[%s354 + $0x218] sm:$0xff]
        %v1739 = vld [vmem:[%s354 + $0x220] sm:$0xff]
        %v1740 = vld [vmem:[%s354 + $0x228] sm:$0xff]
        %v1741 = vld [vmem:[%s354 + $0x230] sm:$0xff]
        %v1742 = vld [vmem:[%s354 + $0x238] sm:$0xff]
        %v1743 = vld [vmem:[%s354 + $0x240] sm:$0xff]
        %v1744 = vld [vmem:[%s354 + $0x248] sm:$0xff]
        %v1745 = vld [vmem:[%s354 + $0x250] sm:$0xff]
        %v1746 = vld [vmem:[%s354 + $0x258] sm:$0xff]
        %v1747 = vld [vmem:[%s354 + $0x260] sm:$0xff]
        %v1748 = vld [vmem:[%s354 + $0x268] sm:$0xff]
        %v1749 = vld [vmem:[%s354 + $0x270] sm:$0xff]
        %v1750 = vld [vmem:[%s354 + $0x278] sm:$0xff]
        %v1751 = vld [vmem:[%s354 + $0x280] sm:$0xff]
        %v1752 = vld [vmem:[%s354 + $0x288] sm:$0xff]
        %v1753 = vld [vmem:[%s354 + $0x290] sm:$0xff]
        %v1754 = vld [vmem:[%s354 + $0x298] sm:$0xff]
        %v1755 = vld [vmem:[%s354 + $0x2a0] sm:$0xff]
        %v1756 = vld [vmem:[%s354 + $0x2a8] sm:$0xff]
        %v1757 = vld [vmem:[%s354 + $0x2b0] sm:$0xff]
        %v1758 = vld [vmem:[%s354 + $0x2b8] sm:$0xff]
        %v1759 = vld [vmem:[%s354 + $0x2c0] sm:$0xff]
        %v1760 = vld [vmem:[%s354 + $0x2c8] sm:$0xff]
        %v1761 = vld [vmem:[%s354 + $0x2d0] sm:$0xff]
        %v1762 = vld [vmem:[%s354 + $0x2d8] sm:$0xff]
        %v1763 = vld [vmem:[%s354 + $0x2e0] sm:$0xff]
        %v1764 = vld [vmem:[%s354 + $0x2e8] sm:$0xff]
        %v1765 = vld [vmem:[%s354 + $0x2f0] sm:$0xff]
        %v1766 = vld [vmem:[%s354 + $0x2f8] sm:$0xff]
        %v1767 = vld [vmem:[%s354 + $0x300] sm:$0xff]
        %v1768 = vld [vmem:[%s354 + $0x308] sm:$0xff]
        %v1769 = vld [vmem:[%s354 + $0x310] sm:$0xff]
        %v1770 = vld [vmem:[%s354 + $0x318] sm:$0xff]
        %v1771 = vld [vmem:[%s354 + $0x320] sm:$0xff]
        %v1772 = vld [vmem:[%s354 + $0x328] sm:$0xff]
        %v1773 = vld [vmem:[%s354 + $0x330] sm:$0xff]
        %v1774 = vld [vmem:[%s354 + $0x338] sm:$0xff]
        %v1775 = vld [vmem:[%s354 + $0x340] sm:$0xff]
        %v1776 = vld [vmem:[%s354 + $0x348] sm:$0xff]
        %v1777 = vld [vmem:[%s354 + $0x350] sm:$0xff]
        %v1778 = vld [vmem:[%s354 + $0x358] sm:$0xff]
        %v1779 = vld [vmem:[%s354 + $0x360] sm:$0xff]
        %v1780 = vld [vmem:[%s354 + $0x368] sm:$0xff]
        %v1781 = vld [vmem:[%s354 + $0x370] sm:$0xff]
        %v1782 = vld [vmem:[%s354 + $0x378] sm:$0xff]
        %v1783 = vld [vmem:[%s354 + $0x380] sm:$0xff]
        %v1784 = vld [vmem:[%s354 + $0x388] sm:$0xff]
        %v1785 = vld [vmem:[%s354 + $0x390] sm:$0xff]
        %v1786 = vld [vmem:[%s354 + $0x398] sm:$0xff]
        %v1787 = vld [vmem:[%s354 + $0x3a0] sm:$0xff]
        %v1788 = vld [vmem:[%s354 + $0x3a8] sm:$0xff]
        %v1789 = vld [vmem:[%s354 + $0x3b0] sm:$0xff]
        %v1790 = vld [vmem:[%s354 + $0x3b8] sm:$0xff]
        %v1791 = vld [vmem:[%s354 + $0x3c0] sm:$0xff]
        %v1792 = vld [vmem:[%s354 + $0x3c8] sm:$0xff]
        %v1793 = vld [vmem:[%s354 + $0x3d0] sm:$0xff]
        %v1794 = vld [vmem:[%s354 + $0x3d8] sm:$0xff]
        %v1795 = vld [vmem:[%s354 + $0x3e0] sm:$0xff]
        %v1796 = vld [vmem:[%s354 + $0x3e8] sm:$0xff]
        %v1797 = vld [vmem:[%s354 + $0x3f0] sm:$0xff]
        %v1798 = vld [vmem:[%s354 + $0x3f8] sm:$0xff]
        %v1799 = vld [vmem:[%s354 + $0x400] sm:$0xff]
        %v1800 = vld [vmem:[%s354 + $0x408] sm:$0xff]
        %v1801 = vld [vmem:[%s354 + $0x410] sm:$0xff]
        %v1802 = vld [vmem:[%s354 + $0x418] sm:$0xff]
        %v1803 = vld [vmem:[%s354 + $0x420] sm:$0xff]
        %v1804 = vld [vmem:[%s354 + $0x428] sm:$0xff]
        %v1805 = vld [vmem:[%s354 + $0x430] sm:$0xff]
        %v1806 = vld [vmem:[%s354 + $0x438] sm:$0xff]
        %v1807 = vld [vmem:[%s354 + $0x440] sm:$0xff]
        %v1808 = vld [vmem:[%s354 + $0x448] sm:$0xff]
        %v1809 = vld [vmem:[%s354 + $0x450] sm:$0xff]
        %v1810 = vld [vmem:[%s354 + $0x458] sm:$0xff]
        %v1811 = vld [vmem:[%s354 + $0x460] sm:$0xff]
        %v1812 = vld [vmem:[%s354 + $0x468] sm:$0xff]
        %v1813 = vld [vmem:[%s354 + $0x470] sm:$0xff]
        %v1814 = vld [vmem:[%s354 + $0x478] sm:$0xff]
        %v1815 = vld [vmem:[%s354 + $0x480] sm:$0xff]
        %v1816 = vld [vmem:[%s354 + $0x488] sm:$0xff]
        %v1817 = vld [vmem:[%s354 + $0x490] sm:$0xff]
        %v1818 = vld [vmem:[%s354 + $0x498] sm:$0xff]
        %v1819 = vld [vmem:[%s354 + $0x4a0] sm:$0xff]
        %v1820 = vld [vmem:[%s354 + $0x4a8] sm:$0xff]
        %v1821 = vld [vmem:[%s354 + $0x4b0] sm:$0xff]
        %v1822 = vld [vmem:[%s354 + $0x4b8] sm:$0xff]
        %v1823 = vld [vmem:[%s354 + $0x4c0] sm:$0xff]
        %v1824 = vld [vmem:[%s354 + $0x4c8] sm:$0xff]
        %v1825 = vld [vmem:[%s354 + $0x4d0] sm:$0xff]
        %v1826 = vld [vmem:[%s354 + $0x4d8] sm:$0xff]
        %v1827 = vld [vmem:[%s354 + $0x4e0] sm:$0xff]
        %v1828 = vld [vmem:[%s354 + $0x4e8] sm:$0xff]
        %v1829 = vld [vmem:[%s354 + $0x4f0] sm:$0xff]
        %v1830 = vld [vmem:[%s354 + $0x4f8] sm:$0xff]
        %v1831 = vld [vmem:[%s354 + $0x500] sm:$0xff]
        %v1832 = vld [vmem:[%s354 + $0x508] sm:$0xff]
        %v1833 = vld [vmem:[%s354 + $0x510] sm:$0xff]
        %v1834 = vld [vmem:[%s354 + $0x518] sm:$0xff]
        %v1835 = vld [vmem:[%s354 + $0x520] sm:$0xff]
        %v1836 = vld [vmem:[%s354 + $0x528] sm:$0xff]
        %v1837 = vld [vmem:[%s354 + $0x530] sm:$0xff]
        %v1838 = vld [vmem:[%s354 + $0x538] sm:$0xff]
        %v1839 = vld [vmem:[%s354 + $0x540] sm:$0xff]
        %v1840 = vld [vmem:[%s354 + $0x548] sm:$0xff]
        %v1841 = vld [vmem:[%s354 + $0x550] sm:$0xff]
        %v1842 = vld [vmem:[%s354 + $0x558] sm:$0xff]
        %v1843 = vld [vmem:[%s354 + $0x560] sm:$0xff]
        %v1844 = vld [vmem:[%s354 + $0x568] sm:$0xff]
        %v1845 = vld [vmem:[%s354 + $0x570] sm:$0xff]
        %v1846 = vld [vmem:[%s354 + $0x578] sm:$0xff]
        %v1847 = vld [vmem:[%s354 + $0x580] sm:$0xff]
        %v1848 = vld [vmem:[%s354 + $0x588] sm:$0xff]
        %v1849 = vld [vmem:[%s354 + $0x590] sm:$0xff]
        %v1850 = vld [vmem:[%s354 + $0x598] sm:$0xff]
        %v1851 = vld [vmem:[%s354 + $0x5a0] sm:$0xff]
        %v1852 = vld [vmem:[%s354 + $0x5a8] sm:$0xff]
        %v1853 = vld [vmem:[%s354 + $0x5b0] sm:$0xff]
        %v1854 = vld [vmem:[%s354 + $0x5b8] sm:$0xff]
        %v1855 = vld [vmem:[%s354 + $0x5c0] sm:$0xff]
        %v1856 = vld [vmem:[%s354 + $0x5c8] sm:$0xff]
        %v1857 = vld [vmem:[%s354 + $0x5d0] sm:$0xff]
        %v1858 = vld [vmem:[%s354 + $0x5d8] sm:$0xff]
        %v1859 = vld [vmem:[%s354 + $0x5e0] sm:$0xff]
        %v1860 = vld [vmem:[%s354 + $0x5e8] sm:$0xff]
        %v1861 = vld [vmem:[%s354 + $0x5f0] sm:$0xff]
        %v1862 = vld [vmem:[%s354 + $0x5f8] sm:$0xff]
        %v1863 = vld [vmem:[%s354 + $0x600] sm:$0xff]
        %v1864 = vld [vmem:[%s354 + $0x608] sm:$0xff]
        %v1865 = vld [vmem:[%s354 + $0x610] sm:$0xff]
        %v1866 = vld [vmem:[%s354 + $0x618] sm:$0xff]
        %v1867 = vld [vmem:[%s354 + $0x620] sm:$0xff]
        %v1868 = vld [vmem:[%s354 + $0x628] sm:$0xff]
        %v1869 = vld [vmem:[%s354 + $0x630] sm:$0xff]
        %v1870 = vld [vmem:[%s354 + $0x638] sm:$0xff]
        %v1871 = vld [vmem:[%s354 + $0x640] sm:$0xff]
        %v1872 = vld [vmem:[%s354 + $0x648] sm:$0xff]
        %v1873 = vld [vmem:[%s354 + $0x650] sm:$0xff]
        %v1874 = vld [vmem:[%s354 + $0x658] sm:$0xff]
        %v1875 = vld [vmem:[%s354 + $0x660] sm:$0xff]
        %v1876 = vld [vmem:[%s354 + $0x668] sm:$0xff]
        %v1877 = vld [vmem:[%s354 + $0x670] sm:$0xff]
        %v1878 = vld [vmem:[%s354 + $0x678] sm:$0xff]
        %v1879 = vld [vmem:[%s354 + $0x680] sm:$0xff]
        %v1880 = vld [vmem:[%s354 + $0x688] sm:$0xff]
        %v1881 = vld [vmem:[%s354 + $0x690] sm:$0xff]
        %v1882 = vld [vmem:[%s354 + $0x698] sm:$0xff]
        %v1883 = vld [vmem:[%s354 + $0x6a0] sm:$0xff]
        %v1884 = vld [vmem:[%s354 + $0x6a8] sm:$0xff]
        %v1885 = vld [vmem:[%s354 + $0x6b0] sm:$0xff]
        %v1886 = vld [vmem:[%s354 + $0x6b8] sm:$0xff]
        %v1887 = vld [vmem:[%s354 + $0x6c0] sm:$0xff]
        %v1888 = vld [vmem:[%s354 + $0x6c8] sm:$0xff]
        %v1889 = vld [vmem:[%s354 + $0x6d0] sm:$0xff]
        %v1890 = vld [vmem:[%s354 + $0x6d8] sm:$0xff]
        %v1891 = vld [vmem:[%s354 + $0x6e0] sm:$0xff]
        %v1892 = vld [vmem:[%s354 + $0x6e8] sm:$0xff]
        %v1893 = vld [vmem:[%s354 + $0x6f0] sm:$0xff]
        %v1894 = vld [vmem:[%s354 + $0x6f8] sm:$0xff]
        %v1895 = vld [vmem:[%s354 + $0x700] sm:$0xff]
        %v1896 = vld [vmem:[%s354 + $0x708] sm:$0xff]
        %v1897 = vld [vmem:[%s354 + $0x710] sm:$0xff]
        %v1898 = vld [vmem:[%s354 + $0x718] sm:$0xff]
        %v1899 = vld [vmem:[%s354 + $0x720] sm:$0xff]
        %v1900 = vld [vmem:[%s354 + $0x728] sm:$0xff]
        %v1901 = vld [vmem:[%s354 + $0x730] sm:$0xff]
        %v1902 = vld [vmem:[%s354 + $0x738] sm:$0xff]
        %v1903 = vld [vmem:[%s354 + $0x740] sm:$0xff]
        %v1904 = vld [vmem:[%s354 + $0x748] sm:$0xff]
        %v1905 = vld [vmem:[%s354 + $0x750] sm:$0xff]
        %v1906 = vld [vmem:[%s354 + $0x758] sm:$0xff]
        %v1907 = vld [vmem:[%s354 + $0x760] sm:$0xff]
        %v1908 = vld [vmem:[%s354 + $0x768] sm:$0xff]
        %v1909 = vld [vmem:[%s354 + $0x770] sm:$0xff]
        %v1910 = vld [vmem:[%s354 + $0x778] sm:$0xff]
        %v1911 = vld [vmem:[%s354 + $0x780] sm:$0xff]
        %v1912 = vld [vmem:[%s354 + $0x788] sm:$0xff]
        %v1913 = vld [vmem:[%s354 + $0x790] sm:$0xff]
        %v1914 = vld [vmem:[%s354 + $0x798] sm:$0xff]
        %v1915 = vld [vmem:[%s354 + $0x7a0] sm:$0xff]
        %v1916 = vld [vmem:[%s354 + $0x7a8] sm:$0xff]
        %v1917 = vld [vmem:[%s354 + $0x7b0] sm:$0xff]
        %v1918 = vld [vmem:[%s354 + $0x7b8] sm:$0xff]
        %v1919 = vld [vmem:[%s354 + $0x7c0] sm:$0xff]
        %v1920 = vld [vmem:[%s354 + $0x7c8] sm:$0xff]
        %v1921 = vld [vmem:[%s354 + $0x7d0] sm:$0xff]
        %v1922 = vld [vmem:[%s354 + $0x7d8] sm:$0xff]
        %v1923 = vld [vmem:[%s354 + $0x7e0] sm:$0xff]
        %v1924 = vld [vmem:[%s354 + $0x7e8] sm:$0xff]
        %v1925 = vld [vmem:[%s354 + $0x7f0] sm:$0xff]
        %v1926 = vld [vmem:[%s354 + $0x7f8] sm:$0xff]
        %v1927 = vld [vmem:[%s354 + $0x800] sm:$0xff]
        %v1928 = vld [vmem:[%s354 + $0x808] sm:$0xff]
        %v1929 = vld [vmem:[%s354 + $0x810] sm:$0xff]
        %v1930 = vld [vmem:[%s354 + $0x818] sm:$0xff]
        %v1931 = vld [vmem:[%s354 + $0x820] sm:$0xff]
        %v1932 = vld [vmem:[%s354 + $0x828] sm:$0xff]
        %v1933 = vld [vmem:[%s354 + $0x830] sm:$0xff]
        %v1934 = vld [vmem:[%s354 + $0x838] sm:$0xff]
        %v1935 = vld [vmem:[%s354 + $0x840] sm:$0xff]
        %v1936 = vld [vmem:[%s354 + $0x848] sm:$0xff]
        %v1937 = vld [vmem:[%s354 + $0x850] sm:$0xff]
        %v1938 = vld [vmem:[%s354 + $0x858] sm:$0xff]
        %v1939 = vld [vmem:[%s354 + $0x860] sm:$0xff]
        %v1940 = vld [vmem:[%s354 + $0x868] sm:$0xff]
        %v1941 = vld [vmem:[%s354 + $0x870] sm:$0xff]
        %v1942 = vld [vmem:[%s354 + $0x878] sm:$0xff]
        %v1943 = vld [vmem:[%s354 + $0x880] sm:$0xff]
        %v1944 = vld [vmem:[%s354 + $0x888] sm:$0xff]
        %v1945 = vld [vmem:[%s354 + $0x890] sm:$0xff]
        %v1946 = vld [vmem:[%s354 + $0x898] sm:$0xff]
        %v1947 = vld [vmem:[%s354 + $0x8a0] sm:$0xff]
        %v1948 = vld [vmem:[%s354 + $0x8a8] sm:$0xff]
        %v1949 = vld [vmem:[%s354 + $0x8b0] sm:$0xff]
        %v1950 = vld [vmem:[%s354 + $0x8b8] sm:$0xff]
        %v1951 = vld [vmem:[%s354 + $0x8c0] sm:$0xff]
        %v1952 = vld [vmem:[%s354 + $0x8c8] sm:$0xff]
        %v1953 = vld [vmem:[%s354 + $0x8d0] sm:$0xff]
        %v1954 = vld [vmem:[%s354 + $0x8d8] sm:$0xff]
        %v1955 = vld [vmem:[%s354 + $0x8e0] sm:$0xff]
        %v1956 = vld [vmem:[%s354 + $0x8e8] sm:$0xff]
        %v1957 = vld [vmem:[%s354 + $0x8f0] sm:$0xff]
        %v1958 = vld [vmem:[%s354 + $0x8f8] sm:$0xff]
        %v1959 = vld [vmem:[%s354 + $0x900] sm:$0xff]
        %v1960 = vld [vmem:[%s354 + $0x908] sm:$0xff]
        %v1961 = vld [vmem:[%s354 + $0x910] sm:$0xff]
        %v1962 = vld [vmem:[%s354 + $0x918] sm:$0xff]
        %v1963 = vld [vmem:[%s354 + $0x920] sm:$0xff]
        %v1964 = vld [vmem:[%s354 + $0x928] sm:$0xff]
        %v1965 = vld [vmem:[%s354 + $0x930] sm:$0xff]
        %v1966 = vld [vmem:[%s354 + $0x938] sm:$0xff]
        %v1967 = vld [vmem:[%s354 + $0x940] sm:$0xff]
        %v1968 = vld [vmem:[%s354 + $0x948] sm:$0xff]
        %v1969 = vld [vmem:[%s354 + $0x950] sm:$0xff]
        %v1970 = vld [vmem:[%s354 + $0x958] sm:$0xff]
        %v1971 = vld [vmem:[%s354 + $0x960] sm:$0xff]
        %v1972 = vld [vmem:[%s354 + $0x968] sm:$0xff]
        %v1973 = vld [vmem:[%s354 + $0x970] sm:$0xff]
        %v1974 = vld [vmem:[%s354 + $0x978] sm:$0xff]
        %v1975 = vld [vmem:[%s354 + $0x980] sm:$0xff]
        %v1976 = vld [vmem:[%s354 + $0x988] sm:$0xff]
        %v1977 = vld [vmem:[%s354 + $0x990] sm:$0xff]
        %v1978 = vld [vmem:[%s354 + $0x998] sm:$0xff]
        %v1979 = vld [vmem:[%s354 + $0x9a0] sm:$0xff]
        %v1980 = vld [vmem:[%s354 + $0x9a8] sm:$0xff]
        %v1981 = vld [vmem:[%s354 + $0x9b0] sm:$0xff]
        %v1982 = vld [vmem:[%s354 + $0x9b8] sm:$0xff]
        %v1983 = vld [vmem:[%s354 + $0x9c0] sm:$0xff]
        %v1984 = vld [vmem:[%s354 + $0x9c8] sm:$0xff]
        %v1985 = vld [vmem:[%s354 + $0x9d0] sm:$0xff]
        %v1986 = vld [vmem:[%s354 + $0x9d8] sm:$0xff]
        %v1987 = vld [vmem:[%s354 + $0x9e0] sm:$0xff]
        %v1988 = vld [vmem:[%s354 + $0x9e8] sm:$0xff]
        %v1989 = vld [vmem:[%s354 + $0x9f0] sm:$0xff]
        %v1990 = vld [vmem:[%s354 + $0x9f8] sm:$0xff]
        %v1991 = vld [vmem:[%s354 + $0xa00] sm:$0xff]
        %v1992 = vld [vmem:[%s354 + $0xa08] sm:$0xff]
        %v1993 = vld [vmem:[%s354 + $0xa10] sm:$0xff]
        %v1994 = vld [vmem:[%s354 + $0xa18] sm:$0xff]
        %v1995 = vld [vmem:[%s354 + $0xa20] sm:$0xff]
        %v1996 = vld [vmem:[%s354 + $0xa28] sm:$0xff]
        %v1997 = vld [vmem:[%s354 + $0xa30] sm:$0xff]
        %v1998 = vld [vmem:[%s354 + $0xa38] sm:$0xff]
        %v1999 = vld [vmem:[%s354 + $0xa40] sm:$0xff]
        %v2000 = vld [vmem:[%s354 + $0xa48] sm:$0xff]
        %v2001 = vld [vmem:[%s354 + $0xa50] sm:$0xff]
        %v2002 = vld [vmem:[%s354 + $0xa58] sm:$0xff]
        %v2003 = vld [vmem:[%s354 + $0xa60] sm:$0xff]
        %v2004 = vld [vmem:[%s354 + $0xa68] sm:$0xff]
        %v2005 = vld [vmem:[%s354 + $0xa70] sm:$0xff]
        %v2006 = vld [vmem:[%s354 + $0xa78] sm:$0xff]
        %v2007 = vld [vmem:[%s354 + $0xa80] sm:$0xff]
        %v2008 = vld [vmem:[%s354 + $0xa88] sm:$0xff]
        %v2009 = vld [vmem:[%s354 + $0xa90] sm:$0xff]
        %v2010 = vld [vmem:[%s354 + $0xa98] sm:$0xff]
        %v2011 = vld [vmem:[%s354 + $0xaa0] sm:$0xff]
        %v2012 = vld [vmem:[%s354 + $0xaa8] sm:$0xff]
        %v2013 = vld [vmem:[%s354 + $0xab0] sm:$0xff]
        %v2014 = vld [vmem:[%s354 + $0xab8] sm:$0xff]
        %v2015 = vld [vmem:[%s354 + $0xac0] sm:$0xff]
        %v2016 = vld [vmem:[%s354 + $0xac8] sm:$0xff]
        %v2017 = vld [vmem:[%s354 + $0xad0] sm:$0xff]
        %v2018 = vld [vmem:[%s354 + $0xad8] sm:$0xff]
        %v2019 = vld [vmem:[%s354 + $0xae0] sm:$0xff]
        %v2020 = vld [vmem:[%s354 + $0xae8] sm:$0xff]
        %v2021 = vld [vmem:[%s354 + $0xaf0] sm:$0xff]
        %v2022 = vld [vmem:[%s354 + $0xaf8] sm:$0xff]
        %v2023 = vld [vmem:[%s354 + $0xb00] sm:$0xff]
        %v2024 = vld [vmem:[%s354 + $0xb08] sm:$0xff]
        %v2025 = vld [vmem:[%s354 + $0xb10] sm:$0xff]
        %v2026 = vld [vmem:[%s354 + $0xb18] sm:$0xff]
        %v2027 = vld [vmem:[%s354 + $0xb20] sm:$0xff]
        %v2028 = vld [vmem:[%s354 + $0xb28] sm:$0xff]
        %v2029 = vld [vmem:[%s354 + $0xb30] sm:$0xff]
        %v2030 = vld [vmem:[%s354 + $0xb38] sm:$0xff]
        %v2031 = vld [vmem:[%s354 + $0xb40] sm:$0xff]
        %v2032 = vld [vmem:[%s354 + $0xb48] sm:$0xff]
        %v2033 = vld [vmem:[%s354 + $0xb50] sm:$0xff]
        %v2034 = vld [vmem:[%s354 + $0xb58] sm:$0xff]
        %v2035 = vld [vmem:[%s354 + $0xb60] sm:$0xff]
        %v2036 = vld [vmem:[%s354 + $0xb68] sm:$0xff]
        %v2037 = vld [vmem:[%s354 + $0xb70] sm:$0xff]
        %v2038 = vld [vmem:[%s354 + $0xb78] sm:$0xff]
        %v2039 = vld [vmem:[%s354 + $0xb80] sm:$0xff]
        %v2040 = vld [vmem:[%s354 + $0xb88] sm:$0xff]
        %v2041 = vld [vmem:[%s354 + $0xb90] sm:$0xff]
        %v2042 = vld [vmem:[%s354 + $0xb98] sm:$0xff]
        %v2043 = vld [vmem:[%s354 + $0xba0] sm:$0xff]
        %v2044 = vld [vmem:[%s354 + $0xba8] sm:$0xff]
        %v2045 = vld [vmem:[%s354 + $0xbb0] sm:$0xff]
        %v2046 = vld [vmem:[%s354 + $0xbb8] sm:$0xff]
        %v2047 = vld [vmem:[%s354 + $0xbc0] sm:$0xff]
        %v2048 = vld [vmem:[%s354 + $0xbc8] sm:$0xff]
        %v2049 = vld [vmem:[%s354 + $0xbd0] sm:$0xff]
        %v2050 = vld [vmem:[%s354 + $0xbd8] sm:$0xff]
        %v2051 = vld [vmem:[%s354 + $0xbe0] sm:$0xff]
        %v2052 = vld [vmem:[%s354 + $0xbe8] sm:$0xff]
        %v2053 = vld [vmem:[%s354 + $0xbf0] sm:$0xff]
        %v2054 = vld [vmem:[%s354 + $0xbf8] sm:$0xff]
        %v2055 = vld [vmem:[%s363] sm:$0xff]
        %v2056 = vld [vmem:[%s363 + $0x8] sm:$0xf]
        %v2059 = vlaneseq
        %v2060 = vshrl.u32 %v2059, 7
        %v2061 = vsub.s32 0, %v2060
        %v2062 = vrot.slane %v2055, %v2061
        %v2063 = vlaneseq
        %v2064 = vshrl.u32 %v2063, 7
        %v2065 = vsub.s32 1, %v2064
        %v2066 = vrot.slane %v2055, %v2065
        %v2067 = vlaneseq
        %v2068 = vshrl.u32 %v2067, 7
        %v2069 = vsub.s32 2, %v2068
        %v2070 = vrot.slane %v2055, %v2069
        %v2071 = vlaneseq
        %v2072 = vshrl.u32 %v2071, 7
        %v2073 = vsub.s32 3, %v2072
        %v2074 = vrot.slane %v2055, %v2073
        %v2075 = vlaneseq
        %v2076 = vshrl.u32 %v2075, 7
        %v2077 = vsub.s32 4, %v2076
        %v2078 = vrot.slane %v2055, %v2077
        %v2079 = vlaneseq
        %v2080 = vshrl.u32 %v2079, 7
        %v2081 = vsub.s32 5, %v2080
        %v2082 = vrot.slane %v2055, %v2081
        %v2083 = vlaneseq
        %v2084 = vshrl.u32 %v2083, 7
        %v2085 = vsub.s32 6, %v2084
        %v2086 = vrot.slane %v2055, %v2085
        %v2087 = vlaneseq
        %v2088 = vshrl.u32 %v2087, 7
        %v2089 = vsub.s32 7, %v2088
        %v2090 = vrot.slane %v2055, %v2089
        %v2091 = vlaneseq
        %v2092 = vshrl.u32 %v2091, 7
        %v2093 = vsub.s32 0, %v2092
        %v2094 = vrot.slane %v2056, %v2093
        %v2095 = vlaneseq
        %v2096 = vshrl.u32 %v2095, 7
        %v2097 = vsub.s32 1, %v2096
        %v2098 = vrot.slane %v2056, %v2097
        %v2099 = vlaneseq
        %v2100 = vshrl.u32 %v2099, 7
        %v2101 = vsub.s32 2, %v2100
        %v2102 = vrot.slane %v2056, %v2101
        %v2103 = vlaneseq
        %v2104 = vshrl.u32 %v2103, 7
        %v2105 = vsub.s32 3, %v2104
        %v2106 = vrot.slane %v2056, %v2105
        %v2503 = vunpack.c.l.b16 %v1671
        %v2504 = vunpack.c.h.b16 %v1671
        %v2505 = vunpack.c.l.b16 %v1672
        %v2506 = vunpack.c.h.b16 %v1672
        %v2507 = vunpack.c.l.b16 %v1673
        %v2508 = vunpack.c.h.b16 %v1673
        %v2509 = vunpack.c.l.b16 %v1674
        %v2510 = vunpack.c.h.b16 %v1674
        %v2511 = vunpack.c.l.b16 %v1675
        %v2512 = vunpack.c.h.b16 %v1675
        %v2513 = vunpack.c.l.b16 %v1676
        %v2514 = vunpack.c.h.b16 %v1676
        %v2515 = vunpack.c.l.b16 %v1677
        %v2516 = vunpack.c.h.b16 %v1677
        %v2517 = vunpack.c.l.b16 %v1678
        %v2518 = vunpack.c.h.b16 %v1678
        %v2519 = vunpack.c.l.b16 %v1679
        %v2520 = vunpack.c.h.b16 %v1679
        %v2521 = vunpack.c.l.b16 %v1680
        %v2522 = vunpack.c.h.b16 %v1680
        %v2523 = vunpack.c.l.b16 %v1681
        %v2524 = vunpack.c.h.b16 %v1681
        %v2525 = vunpack.c.l.b16 %v1682
        %v2526 = vunpack.c.h.b16 %v1682
        %v2527 = vunpack.c.l.b16 %v1683
        %v2528 = vunpack.c.h.b16 %v1683
        %v2529 = vunpack.c.l.b16 %v1684
        %v2530 = vunpack.c.h.b16 %v1684
        %v2531 = vunpack.c.l.b16 %v1685
        %v2532 = vunpack.c.h.b16 %v1685
        %v2533 = vunpack.c.l.b16 %v1686
        %v2534 = vunpack.c.h.b16 %v1686
        %v2535 = vunpack.c.l.b16 %v1687
        %v2536 = vunpack.c.h.b16 %v1687
        %v2537 = vunpack.c.l.b16 %v1688
        %v2538 = vunpack.c.h.b16 %v1688
        %v2539 = vunpack.c.l.b16 %v1689
        %v2540 = vunpack.c.h.b16 %v1689
        %v2541 = vunpack.c.l.b16 %v1690
        %v2542 = vunpack.c.h.b16 %v1690
        %v2543 = vunpack.c.l.b16 %v1691
        %v2544 = vunpack.c.h.b16 %v1691
        %v2545 = vunpack.c.l.b16 %v1692
        %v2546 = vunpack.c.h.b16 %v1692
        %v2547 = vunpack.c.l.b16 %v1693
        %v2548 = vunpack.c.h.b16 %v1693
        %v2549 = vunpack.c.l.b16 %v1694
        %v2550 = vunpack.c.h.b16 %v1694
        %v2551 = vunpack.c.l.b16 %v1695
        %v2552 = vunpack.c.h.b16 %v1695
        %v2553 = vunpack.c.l.b16 %v1696
        %v2554 = vunpack.c.h.b16 %v1696
        %v2555 = vunpack.c.l.b16 %v1697
        %v2556 = vunpack.c.h.b16 %v1697
        %v2557 = vunpack.c.l.b16 %v1698
        %v2558 = vunpack.c.h.b16 %v1698
        %v2559 = vunpack.c.l.b16 %v1699
        %v2560 = vunpack.c.h.b16 %v1699
        %v2561 = vunpack.c.l.b16 %v1700
        %v2562 = vunpack.c.h.b16 %v1700
        %v2563 = vunpack.c.l.b16 %v1701
        %v2564 = vunpack.c.h.b16 %v1701
        %v2565 = vunpack.c.l.b16 %v1702
        %v2566 = vunpack.c.h.b16 %v1702
        %v2567 = vunpack.c.l.b16 %v1703
        %v2568 = vunpack.c.h.b16 %v1703
        %v2569 = vunpack.c.l.b16 %v1704
        %v2570 = vunpack.c.h.b16 %v1704
        %v2571 = vunpack.c.l.b16 %v1705
        %v2572 = vunpack.c.h.b16 %v1705
        %v2573 = vunpack.c.l.b16 %v1706
        %v2574 = vunpack.c.h.b16 %v1706
        %v2575 = vunpack.c.l.b16 %v1707
        %v2576 = vunpack.c.h.b16 %v1707
        %v2577 = vunpack.c.l.b16 %v1708
        %v2578 = vunpack.c.h.b16 %v1708
        %v2579 = vunpack.c.l.b16 %v1709
        %v2580 = vunpack.c.h.b16 %v1709
        %v2581 = vunpack.c.l.b16 %v1710
        %v2582 = vunpack.c.h.b16 %v1710
        %v2583 = vunpack.c.l.b16 %v1711
        %v2584 = vunpack.c.h.b16 %v1711
        %v2585 = vunpack.c.l.b16 %v1712
        %v2586 = vunpack.c.h.b16 %v1712
        %v2587 = vunpack.c.l.b16 %v1713
        %v2588 = vunpack.c.h.b16 %v1713
        %v2589 = vunpack.c.l.b16 %v1714
        %v2590 = vunpack.c.h.b16 %v1714
        %v2591 = vunpack.c.l.b16 %v1715
        %v2592 = vunpack.c.h.b16 %v1715
        %v2593 = vunpack.c.l.b16 %v1716
        %v2594 = vunpack.c.h.b16 %v1716
        %v2595 = vunpack.c.l.b16 %v1717
        %v2596 = vunpack.c.h.b16 %v1717
        %v2597 = vunpack.c.l.b16 %v1718
        %v2598 = vunpack.c.h.b16 %v1718
        %v2599 = vunpack.c.l.b16 %v1719
        %v2600 = vunpack.c.h.b16 %v1719
        %v2601 = vunpack.c.l.b16 %v1720
        %v2602 = vunpack.c.h.b16 %v1720
        %v2603 = vunpack.c.l.b16 %v1721
        %v2604 = vunpack.c.h.b16 %v1721
        %v2605 = vunpack.c.l.b16 %v1722
        %v2606 = vunpack.c.h.b16 %v1722
        %v2607 = vunpack.c.l.b16 %v1723
        %v2608 = vunpack.c.h.b16 %v1723
        %v2609 = vunpack.c.l.b16 %v1724
        %v2610 = vunpack.c.h.b16 %v1724
        %v2611 = vunpack.c.l.b16 %v1725
        %v2612 = vunpack.c.h.b16 %v1725
        %v2613 = vunpack.c.l.b16 %v1726
        %v2614 = vunpack.c.h.b16 %v1726
        %v2615 = vunpack.c.l.b16 %v1727
        %v2616 = vunpack.c.h.b16 %v1727
        %v2617 = vunpack.c.l.b16 %v1728
        %v2618 = vunpack.c.h.b16 %v1728
        %v2619 = vunpack.c.l.b16 %v1729
        %v2620 = vunpack.c.h.b16 %v1729
        %v2621 = vunpack.c.l.b16 %v1730
        %v2622 = vunpack.c.h.b16 %v1730
        %v2623 = vunpack.c.l.b16 %v1731
        %v2624 = vunpack.c.h.b16 %v1731
        %v2625 = vunpack.c.l.b16 %v1732
        %v2626 = vunpack.c.h.b16 %v1732
        %v2627 = vunpack.c.l.b16 %v1733
        %v2628 = vunpack.c.h.b16 %v1733
        %v2629 = vunpack.c.l.b16 %v1734
        %v2630 = vunpack.c.h.b16 %v1734
        %v2631 = vunpack.c.l.b16 %v1735
        %v2632 = vunpack.c.h.b16 %v1735
        %v2633 = vunpack.c.l.b16 %v1736
        %v2634 = vunpack.c.h.b16 %v1736
        %v2635 = vunpack.c.l.b16 %v1737
        %v2636 = vunpack.c.h.b16 %v1737
        %v2637 = vunpack.c.l.b16 %v1738
        %v2638 = vunpack.c.h.b16 %v1738
        %v2639 = vunpack.c.l.b16 %v1739
        %v2640 = vunpack.c.h.b16 %v1739
        %v2641 = vunpack.c.l.b16 %v1740
        %v2642 = vunpack.c.h.b16 %v1740
        %v2643 = vunpack.c.l.b16 %v1741
        %v2644 = vunpack.c.h.b16 %v1741
        %v2645 = vunpack.c.l.b16 %v1742
        %v2646 = vunpack.c.h.b16 %v1742
        %v2647 = vunpack.c.l.b16 %v1743
        %v2648 = vunpack.c.h.b16 %v1743
        %v2649 = vunpack.c.l.b16 %v1744
        %v2650 = vunpack.c.h.b16 %v1744
        %v2651 = vunpack.c.l.b16 %v1745
        %v2652 = vunpack.c.h.b16 %v1745
        %v2653 = vunpack.c.l.b16 %v1746
        %v2654 = vunpack.c.h.b16 %v1746
        %v2655 = vunpack.c.l.b16 %v1747
        %v2656 = vunpack.c.h.b16 %v1747
        %v2657 = vunpack.c.l.b16 %v1748
        %v2658 = vunpack.c.h.b16 %v1748
        %v2659 = vunpack.c.l.b16 %v1749
        %v2660 = vunpack.c.h.b16 %v1749
        %v2661 = vunpack.c.l.b16 %v1750
        %v2662 = vunpack.c.h.b16 %v1750
        %v2663 = vunpack.c.l.b16 %v1751
        %v2664 = vunpack.c.h.b16 %v1751
        %v2665 = vunpack.c.l.b16 %v1752
        %v2666 = vunpack.c.h.b16 %v1752
        %v2667 = vunpack.c.l.b16 %v1753
        %v2668 = vunpack.c.h.b16 %v1753
        %v2669 = vunpack.c.l.b16 %v1754
        %v2670 = vunpack.c.h.b16 %v1754
        %v2671 = vunpack.c.l.b16 %v1755
        %v2672 = vunpack.c.h.b16 %v1755
        %v2673 = vunpack.c.l.b16 %v1756
        %v2674 = vunpack.c.h.b16 %v1756
        %v2675 = vunpack.c.l.b16 %v1757
        %v2676 = vunpack.c.h.b16 %v1757
        %v2677 = vunpack.c.l.b16 %v1758
        %v2678 = vunpack.c.h.b16 %v1758
        %v2679 = vunpack.c.l.b16 %v1759
        %v2680 = vunpack.c.h.b16 %v1759
        %v2681 = vunpack.c.l.b16 %v1760
        %v2682 = vunpack.c.h.b16 %v1760
        %v2683 = vunpack.c.l.b16 %v1761
        %v2684 = vunpack.c.h.b16 %v1761
        %v2685 = vunpack.c.l.b16 %v1762
        %v2686 = vunpack.c.h.b16 %v1762
        %v2687 = vunpack.c.l.b16 %v1763
        %v2688 = vunpack.c.h.b16 %v1763
        %v2689 = vunpack.c.l.b16 %v1764
        %v2690 = vunpack.c.h.b16 %v1764
        %v2691 = vunpack.c.l.b16 %v1765
        %v2692 = vunpack.c.h.b16 %v1765
        %v2693 = vunpack.c.l.b16 %v1766
        %v2694 = vunpack.c.h.b16 %v1766
        %v2695 = vunpack.c.l.b16 %v1767
        %v2696 = vunpack.c.h.b16 %v1767
        %v2697 = vunpack.c.l.b16 %v1768
        %v2698 = vunpack.c.h.b16 %v1768
        %v2699 = vunpack.c.l.b16 %v1769
        %v2700 = vunpack.c.h.b16 %v1769
        %v2701 = vunpack.c.l.b16 %v1770
        %v2702 = vunpack.c.h.b16 %v1770
        %v2703 = vunpack.c.l.b16 %v1771
        %v2704 = vunpack.c.h.b16 %v1771
        %v2705 = vunpack.c.l.b16 %v1772
        %v2706 = vunpack.c.h.b16 %v1772
        %v2707 = vunpack.c.l.b16 %v1773
        %v2708 = vunpack.c.h.b16 %v1773
        %v2709 = vunpack.c.l.b16 %v1774
        %v2710 = vunpack.c.h.b16 %v1774
        %v2711 = vunpack.c.l.b16 %v1775
        %v2712 = vunpack.c.h.b16 %v1775
        %v2713 = vunpack.c.l.b16 %v1776
        %v2714 = vunpack.c.h.b16 %v1776
        %v2715 = vunpack.c.l.b16 %v1777
        %v2716 = vunpack.c.h.b16 %v1777
        %v2717 = vunpack.c.l.b16 %v1778
        %v2718 = vunpack.c.h.b16 %v1778
        %v2719 = vunpack.c.l.b16 %v1779
        %v2720 = vunpack.c.h.b16 %v1779
        %v2721 = vunpack.c.l.b16 %v1780
        %v2722 = vunpack.c.h.b16 %v1780
        %v2723 = vunpack.c.l.b16 %v1781
        %v2724 = vunpack.c.h.b16 %v1781
        %v2725 = vunpack.c.l.b16 %v1782
        %v2726 = vunpack.c.h.b16 %v1782
        %v2727 = vunpack.c.l.b16 %v1783
        %v2728 = vunpack.c.h.b16 %v1783
        %v2729 = vunpack.c.l.b16 %v1784
        %v2730 = vunpack.c.h.b16 %v1784
        %v2731 = vunpack.c.l.b16 %v1785
        %v2732 = vunpack.c.h.b16 %v1785
        %v2733 = vunpack.c.l.b16 %v1786
        %v2734 = vunpack.c.h.b16 %v1786
        %v2735 = vunpack.c.l.b16 %v1787
        %v2736 = vunpack.c.h.b16 %v1787
        %v2737 = vunpack.c.l.b16 %v1788
        %v2738 = vunpack.c.h.b16 %v1788
        %v2739 = vunpack.c.l.b16 %v1789
        %v2740 = vunpack.c.h.b16 %v1789
        %v2741 = vunpack.c.l.b16 %v1790
        %v2742 = vunpack.c.h.b16 %v1790
        %v2743 = vunpack.c.l.b16 %v1791
        %v2744 = vunpack.c.h.b16 %v1791
        %v2745 = vunpack.c.l.b16 %v1792
        %v2746 = vunpack.c.h.b16 %v1792
        %v2747 = vunpack.c.l.b16 %v1793
        %v2748 = vunpack.c.h.b16 %v1793
        %v2749 = vunpack.c.l.b16 %v1794
        %v2750 = vunpack.c.h.b16 %v1794
        %v2751 = vunpack.c.l.b16 %v1795
        %v2752 = vunpack.c.h.b16 %v1795
        %v2753 = vunpack.c.l.b16 %v1796
        %v2754 = vunpack.c.h.b16 %v1796
        %v2755 = vunpack.c.l.b16 %v1797
        %v2756 = vunpack.c.h.b16 %v1797
        %v2757 = vunpack.c.l.b16 %v1798
        %v2758 = vunpack.c.h.b16 %v1798
        %v2759 = vunpack.c.l.b16 %v1799
        %v2760 = vunpack.c.h.b16 %v1799
        %v2761 = vunpack.c.l.b16 %v1800
        %v2762 = vunpack.c.h.b16 %v1800
        %v2763 = vunpack.c.l.b16 %v1801
        %v2764 = vunpack.c.h.b16 %v1801
        %v2765 = vunpack.c.l.b16 %v1802
        %v2766 = vunpack.c.h.b16 %v1802
        %v2767 = vunpack.c.l.b16 %v1803
        %v2768 = vunpack.c.h.b16 %v1803
        %v2769 = vunpack.c.l.b16 %v1804
        %v2770 = vunpack.c.h.b16 %v1804
        %v2771 = vunpack.c.l.b16 %v1805
        %v2772 = vunpack.c.h.b16 %v1805
        %v2773 = vunpack.c.l.b16 %v1806
        %v2774 = vunpack.c.h.b16 %v1806
        %v2775 = vunpack.c.l.b16 %v1807
        %v2776 = vunpack.c.h.b16 %v1807
        %v2777 = vunpack.c.l.b16 %v1808
        %v2778 = vunpack.c.h.b16 %v1808
        %v2779 = vunpack.c.l.b16 %v1809
        %v2780 = vunpack.c.h.b16 %v1809
        %v2781 = vunpack.c.l.b16 %v1810
        %v2782 = vunpack.c.h.b16 %v1810
        %v2783 = vunpack.c.l.b16 %v1811
        %v2784 = vunpack.c.h.b16 %v1811
        %v2785 = vunpack.c.l.b16 %v1812
        %v2786 = vunpack.c.h.b16 %v1812
        %v2787 = vunpack.c.l.b16 %v1813
        %v2788 = vunpack.c.h.b16 %v1813
        %v2789 = vunpack.c.l.b16 %v1814
        %v2790 = vunpack.c.h.b16 %v1814
        %v2791 = vunpack.c.l.b16 %v1815
        %v2792 = vunpack.c.h.b16 %v1815
        %v2793 = vunpack.c.l.b16 %v1816
        %v2794 = vunpack.c.h.b16 %v1816
        %v2795 = vunpack.c.l.b16 %v1817
        %v2796 = vunpack.c.h.b16 %v1817
        %v2797 = vunpack.c.l.b16 %v1818
        %v2798 = vunpack.c.h.b16 %v1818
        %v2799 = vunpack.c.l.b16 %v1819
        %v2800 = vunpack.c.h.b16 %v1819
        %v2801 = vunpack.c.l.b16 %v1820
        %v2802 = vunpack.c.h.b16 %v1820
        %v2803 = vunpack.c.l.b16 %v1821
        %v2804 = vunpack.c.h.b16 %v1821
        %v2805 = vunpack.c.l.b16 %v1822
        %v2806 = vunpack.c.h.b16 %v1822
        %v2807 = vunpack.c.l.b16 %v1823
        %v2808 = vunpack.c.h.b16 %v1823
        %v2809 = vunpack.c.l.b16 %v1824
        %v2810 = vunpack.c.h.b16 %v1824
        %v2811 = vunpack.c.l.b16 %v1825
        %v2812 = vunpack.c.h.b16 %v1825
        %v2813 = vunpack.c.l.b16 %v1826
        %v2814 = vunpack.c.h.b16 %v1826
        %v2815 = vunpack.c.l.b16 %v1827
        %v2816 = vunpack.c.h.b16 %v1827
        %v2817 = vunpack.c.l.b16 %v1828
        %v2818 = vunpack.c.h.b16 %v1828
        %v2819 = vunpack.c.l.b16 %v1829
        %v2820 = vunpack.c.h.b16 %v1829
        %v2821 = vunpack.c.l.b16 %v1830
        %v2822 = vunpack.c.h.b16 %v1830
        %v2823 = vunpack.c.l.b16 %v1831
        %v2824 = vunpack.c.h.b16 %v1831
        %v2825 = vunpack.c.l.b16 %v1832
        %v2826 = vunpack.c.h.b16 %v1832
        %v2827 = vunpack.c.l.b16 %v1833
        %v2828 = vunpack.c.h.b16 %v1833
        %v2829 = vunpack.c.l.b16 %v1834
        %v2830 = vunpack.c.h.b16 %v1834
        %v2831 = vunpack.c.l.b16 %v1835
        %v2832 = vunpack.c.h.b16 %v1835
        %v2833 = vunpack.c.l.b16 %v1836
        %v2834 = vunpack.c.h.b16 %v1836
        %v2835 = vunpack.c.l.b16 %v1837
        %v2836 = vunpack.c.h.b16 %v1837
        %v2837 = vunpack.c.l.b16 %v1838
        %v2838 = vunpack.c.h.b16 %v1838
        %v2839 = vunpack.c.l.b16 %v1839
        %v2840 = vunpack.c.h.b16 %v1839
        %v2841 = vunpack.c.l.b16 %v1840
        %v2842 = vunpack.c.h.b16 %v1840
        %v2843 = vunpack.c.l.b16 %v1841
        %v2844 = vunpack.c.h.b16 %v1841
        %v2845 = vunpack.c.l.b16 %v1842
        %v2846 = vunpack.c.h.b16 %v1842
        %v2847 = vunpack.c.l.b16 %v1843
        %v2848 = vunpack.c.h.b16 %v1843
        %v2849 = vunpack.c.l.b16 %v1844
        %v2850 = vunpack.c.h.b16 %v1844
        %v2851 = vunpack.c.l.b16 %v1845
        %v2852 = vunpack.c.h.b16 %v1845
        %v2853 = vunpack.c.l.b16 %v1846
        %v2854 = vunpack.c.h.b16 %v1846
        %v2855 = vunpack.c.l.b16 %v1847
        %v2856 = vunpack.c.h.b16 %v1847
        %v2857 = vunpack.c.l.b16 %v1848
        %v2858 = vunpack.c.h.b16 %v1848
        %v2859 = vunpack.c.l.b16 %v1849
        %v2860 = vunpack.c.h.b16 %v1849
        %v2861 = vunpack.c.l.b16 %v1850
        %v2862 = vunpack.c.h.b16 %v1850
        %v2863 = vunpack.c.l.b16 %v1851
        %v2864 = vunpack.c.h.b16 %v1851
        %v2865 = vunpack.c.l.b16 %v1852
        %v2866 = vunpack.c.h.b16 %v1852
        %v2867 = vunpack.c.l.b16 %v1853
        %v2868 = vunpack.c.h.b16 %v1853
        %v2869 = vunpack.c.l.b16 %v1854
        %v2870 = vunpack.c.h.b16 %v1854
        %v2871 = vunpack.c.l.b16 %v1855
        %v2872 = vunpack.c.h.b16 %v1855
        %v2873 = vunpack.c.l.b16 %v1856
        %v2874 = vunpack.c.h.b16 %v1856
        %v2875 = vunpack.c.l.b16 %v1857
        %v2876 = vunpack.c.h.b16 %v1857
        %v2877 = vunpack.c.l.b16 %v1858
        %v2878 = vunpack.c.h.b16 %v1858
        %v2879 = vunpack.c.l.b16 %v1859
        %v2880 = vunpack.c.h.b16 %v1859
        %v2881 = vunpack.c.l.b16 %v1860
        %v2882 = vunpack.c.h.b16 %v1860
        %v2883 = vunpack.c.l.b16 %v1861
        %v2884 = vunpack.c.h.b16 %v1861
        %v2885 = vunpack.c.l.b16 %v1862
        %v2886 = vunpack.c.h.b16 %v1862
        %v2887 = vunpack.c.l.b16 %v1863
        %v2888 = vunpack.c.h.b16 %v1863
        %v2889 = vunpack.c.l.b16 %v1864
        %v2890 = vunpack.c.h.b16 %v1864
        %v2891 = vunpack.c.l.b16 %v1865
        %v2892 = vunpack.c.h.b16 %v1865
        %v2893 = vunpack.c.l.b16 %v1866
        %v2894 = vunpack.c.h.b16 %v1866
        %v2895 = vunpack.c.l.b16 %v1867
        %v2896 = vunpack.c.h.b16 %v1867
        %v2897 = vunpack.c.l.b16 %v1868
        %v2898 = vunpack.c.h.b16 %v1868
        %v2899 = vunpack.c.l.b16 %v1869
        %v2900 = vunpack.c.h.b16 %v1869
        %v2901 = vunpack.c.l.b16 %v1870
        %v2902 = vunpack.c.h.b16 %v1870
        %v2903 = vunpack.c.l.b16 %v1871
        %v2904 = vunpack.c.h.b16 %v1871
        %v2905 = vunpack.c.l.b16 %v1872
        %v2906 = vunpack.c.h.b16 %v1872
        %v2907 = vunpack.c.l.b16 %v1873
        %v2908 = vunpack.c.h.b16 %v1873
        %v2909 = vunpack.c.l.b16 %v1874
        %v2910 = vunpack.c.h.b16 %v1874
        %v2911 = vunpack.c.l.b16 %v1875
        %v2912 = vunpack.c.h.b16 %v1875
        %v2913 = vunpack.c.l.b16 %v1876
        %v2914 = vunpack.c.h.b16 %v1876
        %v2915 = vunpack.c.l.b16 %v1877
        %v2916 = vunpack.c.h.b16 %v1877
        %v2917 = vunpack.c.l.b16 %v1878
        %v2918 = vunpack.c.h.b16 %v1878
        %v2919 = vunpack.c.l.b16 %v1879
        %v2920 = vunpack.c.h.b16 %v1879
        %v2921 = vunpack.c.l.b16 %v1880
        %v2922 = vunpack.c.h.b16 %v1880
        %v2923 = vunpack.c.l.b16 %v1881
        %v2924 = vunpack.c.h.b16 %v1881
        %v2925 = vunpack.c.l.b16 %v1882
        %v2926 = vunpack.c.h.b16 %v1882
        %v2927 = vunpack.c.l.b16 %v1883
        %v2928 = vunpack.c.h.b16 %v1883
        %v2929 = vunpack.c.l.b16 %v1884
        %v2930 = vunpack.c.h.b16 %v1884
        %v2931 = vunpack.c.l.b16 %v1885
        %v2932 = vunpack.c.h.b16 %v1885
        %v2933 = vunpack.c.l.b16 %v1886
        %v2934 = vunpack.c.h.b16 %v1886
        %v2935 = vunpack.c.l.b16 %v1887
        %v2936 = vunpack.c.h.b16 %v1887
        %v2937 = vunpack.c.l.b16 %v1888
        %v2938 = vunpack.c.h.b16 %v1888
        %v2939 = vunpack.c.l.b16 %v1889
        %v2940 = vunpack.c.h.b16 %v1889
        %v2941 = vunpack.c.l.b16 %v1890
        %v2942 = vunpack.c.h.b16 %v1890
        %v2943 = vunpack.c.l.b16 %v1891
        %v2944 = vunpack.c.h.b16 %v1891
        %v2945 = vunpack.c.l.b16 %v1892
        %v2946 = vunpack.c.h.b16 %v1892
        %v2947 = vunpack.c.l.b16 %v1893
        %v2948 = vunpack.c.h.b16 %v1893
        %v2949 = vunpack.c.l.b16 %v1894
        %v2950 = vunpack.c.h.b16 %v1894
        %v2951 = vunpack.c.l.b16 %v1895
        %v2952 = vunpack.c.h.b16 %v1895
        %v2953 = vunpack.c.l.b16 %v1896
        %v2954 = vunpack.c.h.b16 %v1896
        %v2955 = vunpack.c.l.b16 %v1897
        %v2956 = vunpack.c.h.b16 %v1897
        %v2957 = vunpack.c.l.b16 %v1898
        %v2958 = vunpack.c.h.b16 %v1898
        %v2959 = vunpack.c.l.b16 %v1899
        %v2960 = vunpack.c.h.b16 %v1899
        %v2961 = vunpack.c.l.b16 %v1900
        %v2962 = vunpack.c.h.b16 %v1900
        %v2963 = vunpack.c.l.b16 %v1901
        %v2964 = vunpack.c.h.b16 %v1901
        %v2965 = vunpack.c.l.b16 %v1902
        %v2966 = vunpack.c.h.b16 %v1902
        %v2967 = vunpack.c.l.b16 %v1903
        %v2968 = vunpack.c.h.b16 %v1903
        %v2969 = vunpack.c.l.b16 %v1904
        %v2970 = vunpack.c.h.b16 %v1904
        %v2971 = vunpack.c.l.b16 %v1905
        %v2972 = vunpack.c.h.b16 %v1905
        %v2973 = vunpack.c.l.b16 %v1906
        %v2974 = vunpack.c.h.b16 %v1906
        %v2975 = vunpack.c.l.b16 %v1907
        %v2976 = vunpack.c.h.b16 %v1907
        %v2977 = vunpack.c.l.b16 %v1908
        %v2978 = vunpack.c.h.b16 %v1908
        %v2979 = vunpack.c.l.b16 %v1909
        %v2980 = vunpack.c.h.b16 %v1909
        %v2981 = vunpack.c.l.b16 %v1910
        %v2982 = vunpack.c.h.b16 %v1910
        %v2983 = vunpack.c.l.b16 %v1911
        %v2984 = vunpack.c.h.b16 %v1911
        %v2985 = vunpack.c.l.b16 %v1912
        %v2986 = vunpack.c.h.b16 %v1912
        %v2987 = vunpack.c.l.b16 %v1913
        %v2988 = vunpack.c.h.b16 %v1913
        %v2989 = vunpack.c.l.b16 %v1914
        %v2990 = vunpack.c.h.b16 %v1914
        %v2991 = vunpack.c.l.b16 %v1915
        %v2992 = vunpack.c.h.b16 %v1915
        %v2993 = vunpack.c.l.b16 %v1916
        %v2994 = vunpack.c.h.b16 %v1916
        %v2995 = vunpack.c.l.b16 %v1917
        %v2996 = vunpack.c.h.b16 %v1917
        %v2997 = vunpack.c.l.b16 %v1918
        %v2998 = vunpack.c.h.b16 %v1918
        %v2999 = vunpack.c.l.b16 %v1919
        %v3000 = vunpack.c.h.b16 %v1919
        %v3001 = vunpack.c.l.b16 %v1920
        %v3002 = vunpack.c.h.b16 %v1920
        %v3003 = vunpack.c.l.b16 %v1921
        %v3004 = vunpack.c.h.b16 %v1921
        %v3005 = vunpack.c.l.b16 %v1922
        %v3006 = vunpack.c.h.b16 %v1922
        %v3007 = vunpack.c.l.b16 %v1923
        %v3008 = vunpack.c.h.b16 %v1923
        %v3009 = vunpack.c.l.b16 %v1924
        %v3010 = vunpack.c.h.b16 %v1924
        %v3011 = vunpack.c.l.b16 %v1925
        %v3012 = vunpack.c.h.b16 %v1925
        %v3013 = vunpack.c.l.b16 %v1926
        %v3014 = vunpack.c.h.b16 %v1926
        %v3015 = vunpack.c.l.b16 %v1927
        %v3016 = vunpack.c.h.b16 %v1927
        %v3017 = vunpack.c.l.b16 %v1928
        %v3018 = vunpack.c.h.b16 %v1928
        %v3019 = vunpack.c.l.b16 %v1929
        %v3020 = vunpack.c.h.b16 %v1929
        %v3021 = vunpack.c.l.b16 %v1930
        %v3022 = vunpack.c.h.b16 %v1930
        %v3023 = vunpack.c.l.b16 %v1931
        %v3024 = vunpack.c.h.b16 %v1931
        %v3025 = vunpack.c.l.b16 %v1932
        %v3026 = vunpack.c.h.b16 %v1932
        %v3027 = vunpack.c.l.b16 %v1933
        %v3028 = vunpack.c.h.b16 %v1933
        %v3029 = vunpack.c.l.b16 %v1934
        %v3030 = vunpack.c.h.b16 %v1934
        %v3031 = vunpack.c.l.b16 %v1935
        %v3032 = vunpack.c.h.b16 %v1935
        %v3033 = vunpack.c.l.b16 %v1936
        %v3034 = vunpack.c.h.b16 %v1936
        %v3035 = vunpack.c.l.b16 %v1937
        %v3036 = vunpack.c.h.b16 %v1937
        %v3037 = vunpack.c.l.b16 %v1938
        %v3038 = vunpack.c.h.b16 %v1938
        %v3039 = vunpack.c.l.b16 %v1939
        %v3040 = vunpack.c.h.b16 %v1939
        %v3041 = vunpack.c.l.b16 %v1940
        %v3042 = vunpack.c.h.b16 %v1940
        %v3043 = vunpack.c.l.b16 %v1941
        %v3044 = vunpack.c.h.b16 %v1941
        %v3045 = vunpack.c.l.b16 %v1942
        %v3046 = vunpack.c.h.b16 %v1942
        %v3047 = vunpack.c.l.b16 %v1943
        %v3048 = vunpack.c.h.b16 %v1943
        %v3049 = vunpack.c.l.b16 %v1944
        %v3050 = vunpack.c.h.b16 %v1944
        %v3051 = vunpack.c.l.b16 %v1945
        %v3052 = vunpack.c.h.b16 %v1945
        %v3053 = vunpack.c.l.b16 %v1946
        %v3054 = vunpack.c.h.b16 %v1946
        %v3055 = vunpack.c.l.b16 %v1947
        %v3056 = vunpack.c.h.b16 %v1947
        %v3057 = vunpack.c.l.b16 %v1948
        %v3058 = vunpack.c.h.b16 %v1948
        %v3059 = vunpack.c.l.b16 %v1949
        %v3060 = vunpack.c.h.b16 %v1949
        %v3061 = vunpack.c.l.b16 %v1950
        %v3062 = vunpack.c.h.b16 %v1950
        %v3063 = vunpack.c.l.b16 %v1951
        %v3064 = vunpack.c.h.b16 %v1951
        %v3065 = vunpack.c.l.b16 %v1952
        %v3066 = vunpack.c.h.b16 %v1952
        %v3067 = vunpack.c.l.b16 %v1953
        %v3068 = vunpack.c.h.b16 %v1953
        %v3069 = vunpack.c.l.b16 %v1954
        %v3070 = vunpack.c.h.b16 %v1954
        %v3071 = vunpack.c.l.b16 %v1955
        %v3072 = vunpack.c.h.b16 %v1955
        %v3073 = vunpack.c.l.b16 %v1956
        %v3074 = vunpack.c.h.b16 %v1956
        %v3075 = vunpack.c.l.b16 %v1957
        %v3076 = vunpack.c.h.b16 %v1957
        %v3077 = vunpack.c.l.b16 %v1958
        %v3078 = vunpack.c.h.b16 %v1958
        %v3079 = vunpack.c.l.b16 %v1959
        %v3080 = vunpack.c.h.b16 %v1959
        %v3081 = vunpack.c.l.b16 %v1960
        %v3082 = vunpack.c.h.b16 %v1960
        %v3083 = vunpack.c.l.b16 %v1961
        %v3084 = vunpack.c.h.b16 %v1961
        %v3085 = vunpack.c.l.b16 %v1962
        %v3086 = vunpack.c.h.b16 %v1962
        %v3087 = vunpack.c.l.b16 %v1963
        %v3088 = vunpack.c.h.b16 %v1963
        %v3089 = vunpack.c.l.b16 %v1964
        %v3090 = vunpack.c.h.b16 %v1964
        %v3091 = vunpack.c.l.b16 %v1965
        %v3092 = vunpack.c.h.b16 %v1965
        %v3093 = vunpack.c.l.b16 %v1966
        %v3094 = vunpack.c.h.b16 %v1966
        %v3095 = vunpack.c.l.b16 %v1967
        %v3096 = vunpack.c.h.b16 %v1967
        %v3097 = vunpack.c.l.b16 %v1968
        %v3098 = vunpack.c.h.b16 %v1968
        %v3099 = vunpack.c.l.b16 %v1969
        %v3100 = vunpack.c.h.b16 %v1969
        %v3101 = vunpack.c.l.b16 %v1970
        %v3102 = vunpack.c.h.b16 %v1970
        %v3103 = vunpack.c.l.b16 %v1971
        %v3104 = vunpack.c.h.b16 %v1971
        %v3105 = vunpack.c.l.b16 %v1972
        %v3106 = vunpack.c.h.b16 %v1972
        %v3107 = vunpack.c.l.b16 %v1973
        %v3108 = vunpack.c.h.b16 %v1973
        %v3109 = vunpack.c.l.b16 %v1974
        %v3110 = vunpack.c.h.b16 %v1974
        %v3111 = vunpack.c.l.b16 %v1975
        %v3112 = vunpack.c.h.b16 %v1975
        %v3113 = vunpack.c.l.b16 %v1976
        %v3114 = vunpack.c.h.b16 %v1976
        %v3115 = vunpack.c.l.b16 %v1977
        %v3116 = vunpack.c.h.b16 %v1977
        %v3117 = vunpack.c.l.b16 %v1978
        %v3118 = vunpack.c.h.b16 %v1978
        %v3119 = vunpack.c.l.b16 %v1979
        %v3120 = vunpack.c.h.b16 %v1979
        %v3121 = vunpack.c.l.b16 %v1980
        %v3122 = vunpack.c.h.b16 %v1980
        %v3123 = vunpack.c.l.b16 %v1981
        %v3124 = vunpack.c.h.b16 %v1981
        %v3125 = vunpack.c.l.b16 %v1982
        %v3126 = vunpack.c.h.b16 %v1982
        %v3127 = vunpack.c.l.b16 %v1983
        %v3128 = vunpack.c.h.b16 %v1983
        %v3129 = vunpack.c.l.b16 %v1984
        %v3130 = vunpack.c.h.b16 %v1984
        %v3131 = vunpack.c.l.b16 %v1985
        %v3132 = vunpack.c.h.b16 %v1985
        %v3133 = vunpack.c.l.b16 %v1986
        %v3134 = vunpack.c.h.b16 %v1986
        %v3135 = vunpack.c.l.b16 %v1987
        %v3136 = vunpack.c.h.b16 %v1987
        %v3137 = vunpack.c.l.b16 %v1988
        %v3138 = vunpack.c.h.b16 %v1988
        %v3139 = vunpack.c.l.b16 %v1989
        %v3140 = vunpack.c.h.b16 %v1989
        %v3141 = vunpack.c.l.b16 %v1990
        %v3142 = vunpack.c.h.b16 %v1990
        %v3143 = vunpack.c.l.b16 %v1991
        %v3144 = vunpack.c.h.b16 %v1991
        %v3145 = vunpack.c.l.b16 %v1992
        %v3146 = vunpack.c.h.b16 %v1992
        %v3147 = vunpack.c.l.b16 %v1993
        %v3148 = vunpack.c.h.b16 %v1993
        %v3149 = vunpack.c.l.b16 %v1994
        %v3150 = vunpack.c.h.b16 %v1994
        %v3151 = vunpack.c.l.b16 %v1995
        %v3152 = vunpack.c.h.b16 %v1995
        %v3153 = vunpack.c.l.b16 %v1996
        %v3154 = vunpack.c.h.b16 %v1996
        %v3155 = vunpack.c.l.b16 %v1997
        %v3156 = vunpack.c.h.b16 %v1997
        %v3157 = vunpack.c.l.b16 %v1998
        %v3158 = vunpack.c.h.b16 %v1998
        %v3159 = vunpack.c.l.b16 %v1999
        %v3160 = vunpack.c.h.b16 %v1999
        %v3161 = vunpack.c.l.b16 %v2000
        %v3162 = vunpack.c.h.b16 %v2000
        %v3163 = vunpack.c.l.b16 %v2001
        %v3164 = vunpack.c.h.b16 %v2001
        %v3165 = vunpack.c.l.b16 %v2002
        %v3166 = vunpack.c.h.b16 %v2002
        %v3167 = vunpack.c.l.b16 %v2003
        %v3168 = vunpack.c.h.b16 %v2003
        %v3169 = vunpack.c.l.b16 %v2004
        %v3170 = vunpack.c.h.b16 %v2004
        %v3171 = vunpack.c.l.b16 %v2005
        %v3172 = vunpack.c.h.b16 %v2005
        %v3173 = vunpack.c.l.b16 %v2006
        %v3174 = vunpack.c.h.b16 %v2006
        %v3175 = vunpack.c.l.b16 %v2007
        %v3176 = vunpack.c.h.b16 %v2007
        %v3177 = vunpack.c.l.b16 %v2008
        %v3178 = vunpack.c.h.b16 %v2008
        %v3179 = vunpack.c.l.b16 %v2009
        %v3180 = vunpack.c.h.b16 %v2009
        %v3181 = vunpack.c.l.b16 %v2010
        %v3182 = vunpack.c.h.b16 %v2010
        %v3183 = vunpack.c.l.b16 %v2011
        %v3184 = vunpack.c.h.b16 %v2011
        %v3185 = vunpack.c.l.b16 %v2012
        %v3186 = vunpack.c.h.b16 %v2012
        %v3187 = vunpack.c.l.b16 %v2013
        %v3188 = vunpack.c.h.b16 %v2013
        %v3189 = vunpack.c.l.b16 %v2014
        %v3190 = vunpack.c.h.b16 %v2014
        %v3191 = vunpack.c.l.b16 %v2015
        %v3192 = vunpack.c.h.b16 %v2015
        %v3193 = vunpack.c.l.b16 %v2016
        %v3194 = vunpack.c.h.b16 %v2016
        %v3195 = vunpack.c.l.b16 %v2017
        %v3196 = vunpack.c.h.b16 %v2017
        %v3197 = vunpack.c.l.b16 %v2018
        %v3198 = vunpack.c.h.b16 %v2018
        %v3199 = vunpack.c.l.b16 %v2019
        %v3200 = vunpack.c.h.b16 %v2019
        %v3201 = vunpack.c.l.b16 %v2020
        %v3202 = vunpack.c.h.b16 %v2020
        %v3203 = vunpack.c.l.b16 %v2021
        %v3204 = vunpack.c.h.b16 %v2021
        %v3205 = vunpack.c.l.b16 %v2022
        %v3206 = vunpack.c.h.b16 %v2022
        %v3207 = vunpack.c.l.b16 %v2023
        %v3208 = vunpack.c.h.b16 %v2023
        %v3209 = vunpack.c.l.b16 %v2024
        %v3210 = vunpack.c.h.b16 %v2024
        %v3211 = vunpack.c.l.b16 %v2025
        %v3212 = vunpack.c.h.b16 %v2025
        %v3213 = vunpack.c.l.b16 %v2026
        %v3214 = vunpack.c.h.b16 %v2026
        %v3215 = vunpack.c.l.b16 %v2027
        %v3216 = vunpack.c.h.b16 %v2027
        %v3217 = vunpack.c.l.b16 %v2028
        %v3218 = vunpack.c.h.b16 %v2028
        %v3219 = vunpack.c.l.b16 %v2029
        %v3220 = vunpack.c.h.b16 %v2029
        %v3221 = vunpack.c.l.b16 %v2030
        %v3222 = vunpack.c.h.b16 %v2030
        %v3223 = vunpack.c.l.b16 %v2031
        %v3224 = vunpack.c.h.b16 %v2031
        %v3225 = vunpack.c.l.b16 %v2032
        %v3226 = vunpack.c.h.b16 %v2032
        %v3227 = vunpack.c.l.b16 %v2033
        %v3228 = vunpack.c.h.b16 %v2033
        %v3229 = vunpack.c.l.b16 %v2034
        %v3230 = vunpack.c.h.b16 %v2034
        %v3231 = vunpack.c.l.b16 %v2035
        %v3232 = vunpack.c.h.b16 %v2035
        %v3233 = vunpack.c.l.b16 %v2036
        %v3234 = vunpack.c.h.b16 %v2036
        %v3235 = vunpack.c.l.b16 %v2037
        %v3236 = vunpack.c.h.b16 %v2037
        %v3237 = vunpack.c.l.b16 %v2038
        %v3238 = vunpack.c.h.b16 %v2038
        %v3239 = vunpack.c.l.b16 %v2039
        %v3240 = vunpack.c.h.b16 %v2039
        %v3241 = vunpack.c.l.b16 %v2040
        %v3242 = vunpack.c.h.b16 %v2040
        %v3243 = vunpack.c.l.b16 %v2041
        %v3244 = vunpack.c.h.b16 %v2041
        %v3245 = vunpack.c.l.b16 %v2042
        %v3246 = vunpack.c.h.b16 %v2042
        %v3247 = vunpack.c.l.b16 %v2043
        %v3248 = vunpack.c.h.b16 %v2043
        %v3249 = vunpack.c.l.b16 %v2044
        %v3250 = vunpack.c.h.b16 %v2044
        %v3251 = vunpack.c.l.b16 %v2045
        %v3252 = vunpack.c.h.b16 %v2045
        %v3253 = vunpack.c.l.b16 %v2046
        %v3254 = vunpack.c.h.b16 %v2046
        %v3255 = vunpack.c.l.b16 %v2047
        %v3256 = vunpack.c.h.b16 %v2047
        %v3257 = vunpack.c.l.b16 %v2048
        %v3258 = vunpack.c.h.b16 %v2048
        %v3259 = vunpack.c.l.b16 %v2049
        %v3260 = vunpack.c.h.b16 %v2049
        %v3261 = vunpack.c.l.b16 %v2050
        %v3262 = vunpack.c.h.b16 %v2050
        %v3263 = vunpack.c.l.b16 %v2051
        %v3264 = vunpack.c.h.b16 %v2051
        %v3265 = vunpack.c.l.b16 %v2052
        %v3266 = vunpack.c.h.b16 %v2052
        %v3267 = vunpack.c.l.b16 %v2053
        %v3268 = vunpack.c.h.b16 %v2053
        %v3269 = vunpack.c.l.b16 %v2054
        %v3270 = vunpack.c.h.b16 %v2054
        %v3271 = vpack.c.b16 %v2515, %v2503
        %v3272 = vpack.c.b16 %v2516, %v2504
        %v3273 = vpack.c.b16 %v2517, %v2505
        %v3274 = vpack.c.b16 %v2518, %v2506
        %v3275 = vpack.c.b16 %v2519, %v2507
        %v3276 = vpack.c.b16 %v2520, %v2508
        %v3277 = vpack.c.b16 %v2521, %v2509
        %v3278 = vpack.c.b16 %v2522, %v2510
        %v3279 = vpack.c.b16 %v2523, %v2511
        %v3280 = vpack.c.b16 %v2524, %v2512
        %v3281 = vpack.c.b16 %v2525, %v2513
        %v3282 = vpack.c.b16 %v2526, %v2514
        %v3283 = vpack.c.b16 %v2539, %v2527
        %v3284 = vpack.c.b16 %v2540, %v2528
        %v3285 = vpack.c.b16 %v2541, %v2529
        %v3286 = vpack.c.b16 %v2542, %v2530
        %v3287 = vpack.c.b16 %v2543, %v2531
        %v3288 = vpack.c.b16 %v2544, %v2532
        %v3289 = vpack.c.b16 %v2545, %v2533
        %v3290 = vpack.c.b16 %v2546, %v2534
        %v3291 = vpack.c.b16 %v2547, %v2535
        %v3292 = vpack.c.b16 %v2548, %v2536
        %v3293 = vpack.c.b16 %v2549, %v2537
        %v3294 = vpack.c.b16 %v2550, %v2538
        %v3295 = vpack.c.b16 %v2563, %v2551
        %v3296 = vpack.c.b16 %v2564, %v2552
        %v3297 = vpack.c.b16 %v2565, %v2553
        %v3298 = vpack.c.b16 %v2566, %v2554
        %v3299 = vpack.c.b16 %v2567, %v2555
        %v3300 = vpack.c.b16 %v2568, %v2556
        %v3301 = vpack.c.b16 %v2569, %v2557
        %v3302 = vpack.c.b16 %v2570, %v2558
        %v3303 = vpack.c.b16 %v2571, %v2559
        %v3304 = vpack.c.b16 %v2572, %v2560
        %v3305 = vpack.c.b16 %v2573, %v2561
        %v3306 = vpack.c.b16 %v2574, %v2562
        %v3307 = vpack.c.b16 %v2587, %v2575
        %v3308 = vpack.c.b16 %v2588, %v2576
        %v3309 = vpack.c.b16 %v2589, %v2577
        %v3310 = vpack.c.b16 %v2590, %v2578
        %v3311 = vpack.c.b16 %v2591, %v2579
        %v3312 = vpack.c.b16 %v2592, %v2580
        %v3313 = vpack.c.b16 %v2593, %v2581
        %v3314 = vpack.c.b16 %v2594, %v2582
        %v3315 = vpack.c.b16 %v2595, %v2583
        %v3316 = vpack.c.b16 %v2596, %v2584
        %v3317 = vpack.c.b16 %v2597, %v2585
        %v3318 = vpack.c.b16 %v2598, %v2586
        %v3319 = vpack.c.b16 %v2611, %v2599
        %v3320 = vpack.c.b16 %v2612, %v2600
        %v3321 = vpack.c.b16 %v2613, %v2601
        %v3322 = vpack.c.b16 %v2614, %v2602
        %v3323 = vpack.c.b16 %v2615, %v2603
        %v3324 = vpack.c.b16 %v2616, %v2604
        %v3325 = vpack.c.b16 %v2617, %v2605
        %v3326 = vpack.c.b16 %v2618, %v2606
        %v3327 = vpack.c.b16 %v2619, %v2607
        %v3328 = vpack.c.b16 %v2620, %v2608
        %v3329 = vpack.c.b16 %v2621, %v2609
        %v3330 = vpack.c.b16 %v2622, %v2610
        %v3331 = vpack.c.b16 %v2635, %v2623
        %v3332 = vpack.c.b16 %v2636, %v2624
        %v3333 = vpack.c.b16 %v2637, %v2625
        %v3334 = vpack.c.b16 %v2638, %v2626
        %v3335 = vpack.c.b16 %v2639, %v2627
        %v3336 = vpack.c.b16 %v2640, %v2628
        %v3337 = vpack.c.b16 %v2641, %v2629
        %v3338 = vpack.c.b16 %v2642, %v2630
        %v3339 = vpack.c.b16 %v2643, %v2631
        %v3340 = vpack.c.b16 %v2644, %v2632
        %v3341 = vpack.c.b16 %v2645, %v2633
        %v3342 = vpack.c.b16 %v2646, %v2634
        %v3343 = vpack.c.b16 %v2659, %v2647
        %v3344 = vpack.c.b16 %v2660, %v2648
        %v3345 = vpack.c.b16 %v2661, %v2649
        %v3346 = vpack.c.b16 %v2662, %v2650
        %v3347 = vpack.c.b16 %v2663, %v2651
        %v3348 = vpack.c.b16 %v2664, %v2652
        %v3349 = vpack.c.b16 %v2665, %v2653
        %v3350 = vpack.c.b16 %v2666, %v2654
        %v3351 = vpack.c.b16 %v2667, %v2655
        %v3352 = vpack.c.b16 %v2668, %v2656
        %v3353 = vpack.c.b16 %v2669, %v2657
        %v3354 = vpack.c.b16 %v2670, %v2658
        %v3355 = vpack.c.b16 %v2683, %v2671
        %v3356 = vpack.c.b16 %v2684, %v2672
        %v3357 = vpack.c.b16 %v2685, %v2673
        %v3358 = vpack.c.b16 %v2686, %v2674
        %v3359 = vpack.c.b16 %v2687, %v2675
        %v3360 = vpack.c.b16 %v2688, %v2676
        %v3361 = vpack.c.b16 %v2689, %v2677
        %v3362 = vpack.c.b16 %v2690, %v2678
        %v3363 = vpack.c.b16 %v2691, %v2679
        %v3364 = vpack.c.b16 %v2692, %v2680
        %v3365 = vpack.c.b16 %v2693, %v2681
        %v3366 = vpack.c.b16 %v2694, %v2682
        %v3367 = vpack.c.b16 %v2707, %v2695
        %v3368 = vpack.c.b16 %v2708, %v2696
        %v3369 = vpack.c.b16 %v2709, %v2697
        %v3370 = vpack.c.b16 %v2710, %v2698
        %v3371 = vpack.c.b16 %v2711, %v2699
        %v3372 = vpack.c.b16 %v2712, %v2700
        %v3373 = vpack.c.b16 %v2713, %v2701
        %v3374 = vpack.c.b16 %v2714, %v2702
        %v3375 = vpack.c.b16 %v2715, %v2703
        %v3376 = vpack.c.b16 %v2716, %v2704
        %v3377 = vpack.c.b16 %v2717, %v2705
        %v3378 = vpack.c.b16 %v2718, %v2706
        %v3379 = vpack.c.b16 %v2731, %v2719
        %v3380 = vpack.c.b16 %v2732, %v2720
        %v3381 = vpack.c.b16 %v2733, %v2721
        %v3382 = vpack.c.b16 %v2734, %v2722
        %v3383 = vpack.c.b16 %v2735, %v2723
        %v3384 = vpack.c.b16 %v2736, %v2724
        %v3385 = vpack.c.b16 %v2737, %v2725
        %v3386 = vpack.c.b16 %v2738, %v2726
        %v3387 = vpack.c.b16 %v2739, %v2727
        %v3388 = vpack.c.b16 %v2740, %v2728
        %v3389 = vpack.c.b16 %v2741, %v2729
        %v3390 = vpack.c.b16 %v2742, %v2730
        %v3391 = vpack.c.b16 %v2755, %v2743
        %v3392 = vpack.c.b16 %v2756, %v2744
        %v3393 = vpack.c.b16 %v2757, %v2745
        %v3394 = vpack.c.b16 %v2758, %v2746
        %v3395 = vpack.c.b16 %v2759, %v2747
        %v3396 = vpack.c.b16 %v2760, %v2748
        %v3397 = vpack.c.b16 %v2761, %v2749
        %v3398 = vpack.c.b16 %v2762, %v2750
        %v3399 = vpack.c.b16 %v2763, %v2751
        %v3400 = vpack.c.b16 %v2764, %v2752
        %v3401 = vpack.c.b16 %v2765, %v2753
        %v3402 = vpack.c.b16 %v2766, %v2754
        %v3403 = vpack.c.b16 %v2779, %v2767
        %v3404 = vpack.c.b16 %v2780, %v2768
        %v3405 = vpack.c.b16 %v2781, %v2769
        %v3406 = vpack.c.b16 %v2782, %v2770
        %v3407 = vpack.c.b16 %v2783, %v2771
        %v3408 = vpack.c.b16 %v2784, %v2772
        %v3409 = vpack.c.b16 %v2785, %v2773
        %v3410 = vpack.c.b16 %v2786, %v2774
        %v3411 = vpack.c.b16 %v2787, %v2775
        %v3412 = vpack.c.b16 %v2788, %v2776
        %v3413 = vpack.c.b16 %v2789, %v2777
        %v3414 = vpack.c.b16 %v2790, %v2778
        %v3415 = vpack.c.b16 %v2803, %v2791
        %v3416 = vpack.c.b16 %v2804, %v2792
        %v3417 = vpack.c.b16 %v2805, %v2793
        %v3418 = vpack.c.b16 %v2806, %v2794
        %v3419 = vpack.c.b16 %v2807, %v2795
        %v3420 = vpack.c.b16 %v2808, %v2796
        %v3421 = vpack.c.b16 %v2809, %v2797
        %v3422 = vpack.c.b16 %v2810, %v2798
        %v3423 = vpack.c.b16 %v2811, %v2799
        %v3424 = vpack.c.b16 %v2812, %v2800
        %v3425 = vpack.c.b16 %v2813, %v2801
        %v3426 = vpack.c.b16 %v2814, %v2802
        %v3427 = vpack.c.b16 %v2827, %v2815
        %v3428 = vpack.c.b16 %v2828, %v2816
        %v3429 = vpack.c.b16 %v2829, %v2817
        %v3430 = vpack.c.b16 %v2830, %v2818
        %v3431 = vpack.c.b16 %v2831, %v2819
        %v3432 = vpack.c.b16 %v2832, %v2820
        %v3433 = vpack.c.b16 %v2833, %v2821
        %v3434 = vpack.c.b16 %v2834, %v2822
        %v3435 = vpack.c.b16 %v2835, %v2823
        %v3436 = vpack.c.b16 %v2836, %v2824
        %v3437 = vpack.c.b16 %v2837, %v2825
        %v3438 = vpack.c.b16 %v2838, %v2826
        %v3439 = vpack.c.b16 %v2851, %v2839
        %v3440 = vpack.c.b16 %v2852, %v2840
        %v3441 = vpack.c.b16 %v2853, %v2841
        %v3442 = vpack.c.b16 %v2854, %v2842
        %v3443 = vpack.c.b16 %v2855, %v2843
        %v3444 = vpack.c.b16 %v2856, %v2844
        %v3445 = vpack.c.b16 %v2857, %v2845
        %v3446 = vpack.c.b16 %v2858, %v2846
        %v3447 = vpack.c.b16 %v2859, %v2847
        %v3448 = vpack.c.b16 %v2860, %v2848
        %v3449 = vpack.c.b16 %v2861, %v2849
        %v3450 = vpack.c.b16 %v2862, %v2850
        %v3451 = vpack.c.b16 %v2875, %v2863
        %v3452 = vpack.c.b16 %v2876, %v2864
        %v3453 = vpack.c.b16 %v2877, %v2865
        %v3454 = vpack.c.b16 %v2878, %v2866
        %v3455 = vpack.c.b16 %v2879, %v2867
        %v3456 = vpack.c.b16 %v2880, %v2868
        %v3457 = vpack.c.b16 %v2881, %v2869
        %v3458 = vpack.c.b16 %v2882, %v2870
        %v3459 = vpack.c.b16 %v2883, %v2871
        %v3460 = vpack.c.b16 %v2884, %v2872
        %v3461 = vpack.c.b16 %v2885, %v2873
        %v3462 = vpack.c.b16 %v2886, %v2874
        %v3463 = vpack.c.b16 %v2899, %v2887
        %v3464 = vpack.c.b16 %v2900, %v2888
        %v3465 = vpack.c.b16 %v2901, %v2889
        %v3466 = vpack.c.b16 %v2902, %v2890
        %v3467 = vpack.c.b16 %v2903, %v2891
        %v3468 = vpack.c.b16 %v2904, %v2892
        %v3469 = vpack.c.b16 %v2905, %v2893
        %v3470 = vpack.c.b16 %v2906, %v2894
        %v3471 = vpack.c.b16 %v2907, %v2895
        %v3472 = vpack.c.b16 %v2908, %v2896
        %v3473 = vpack.c.b16 %v2909, %v2897
        %v3474 = vpack.c.b16 %v2910, %v2898
        %v3475 = vpack.c.b16 %v2923, %v2911
        %v3476 = vpack.c.b16 %v2924, %v2912
        %v3477 = vpack.c.b16 %v2925, %v2913
        %v3478 = vpack.c.b16 %v2926, %v2914
        %v3479 = vpack.c.b16 %v2927, %v2915
        %v3480 = vpack.c.b16 %v2928, %v2916
        %v3481 = vpack.c.b16 %v2929, %v2917
        %v3482 = vpack.c.b16 %v2930, %v2918
        %v3483 = vpack.c.b16 %v2931, %v2919
        %v3484 = vpack.c.b16 %v2932, %v2920
        %v3485 = vpack.c.b16 %v2933, %v2921
        %v3486 = vpack.c.b16 %v2934, %v2922
        %v3487 = vpack.c.b16 %v2947, %v2935
        %v3488 = vpack.c.b16 %v2948, %v2936
        %v3489 = vpack.c.b16 %v2949, %v2937
        %v3490 = vpack.c.b16 %v2950, %v2938
        %v3491 = vpack.c.b16 %v2951, %v2939
        %v3492 = vpack.c.b16 %v2952, %v2940
        %v3493 = vpack.c.b16 %v2953, %v2941
        %v3494 = vpack.c.b16 %v2954, %v2942
        %v3495 = vpack.c.b16 %v2955, %v2943
        %v3496 = vpack.c.b16 %v2956, %v2944
        %v3497 = vpack.c.b16 %v2957, %v2945
        %v3498 = vpack.c.b16 %v2958, %v2946
        %v3499 = vpack.c.b16 %v2971, %v2959
        %v3500 = vpack.c.b16 %v2972, %v2960
        %v3501 = vpack.c.b16 %v2973, %v2961
        %v3502 = vpack.c.b16 %v2974, %v2962
        %v3503 = vpack.c.b16 %v2975, %v2963
        %v3504 = vpack.c.b16 %v2976, %v2964
        %v3505 = vpack.c.b16 %v2977, %v2965
        %v3506 = vpack.c.b16 %v2978, %v2966
        %v3507 = vpack.c.b16 %v2979, %v2967
        %v3508 = vpack.c.b16 %v2980, %v2968
        %v3509 = vpack.c.b16 %v2981, %v2969
        %v3510 = vpack.c.b16 %v2982, %v2970
        %v3511 = vpack.c.b16 %v2995, %v2983
        %v3512 = vpack.c.b16 %v2996, %v2984
        %v3513 = vpack.c.b16 %v2997, %v2985
        %v3514 = vpack.c.b16 %v2998, %v2986
        %v3515 = vpack.c.b16 %v2999, %v2987
        %v3516 = vpack.c.b16 %v3000, %v2988
        %v3517 = vpack.c.b16 %v3001, %v2989
        %v3518 = vpack.c.b16 %v3002, %v2990
        %v3519 = vpack.c.b16 %v3003, %v2991
        %v3520 = vpack.c.b16 %v3004, %v2992
        %v3521 = vpack.c.b16 %v3005, %v2993
        %v3522 = vpack.c.b16 %v3006, %v2994
        %v3523 = vpack.c.b16 %v3019, %v3007
        %v3524 = vpack.c.b16 %v3020, %v3008
        %v3525 = vpack.c.b16 %v3021, %v3009
        %v3526 = vpack.c.b16 %v3022, %v3010
        %v3527 = vpack.c.b16 %v3023, %v3011
        %v3528 = vpack.c.b16 %v3024, %v3012
        %v3529 = vpack.c.b16 %v3025, %v3013
        %v3530 = vpack.c.b16 %v3026, %v3014
        %v3531 = vpack.c.b16 %v3027, %v3015
        %v3532 = vpack.c.b16 %v3028, %v3016
        %v3533 = vpack.c.b16 %v3029, %v3017
        %v3534 = vpack.c.b16 %v3030, %v3018
        %v3535 = vpack.c.b16 %v3043, %v3031
        %v3536 = vpack.c.b16 %v3044, %v3032
        %v3537 = vpack.c.b16 %v3045, %v3033
        %v3538 = vpack.c.b16 %v3046, %v3034
        %v3539 = vpack.c.b16 %v3047, %v3035
        %v3540 = vpack.c.b16 %v3048, %v3036
        %v3541 = vpack.c.b16 %v3049, %v3037
        %v3542 = vpack.c.b16 %v3050, %v3038
        %v3543 = vpack.c.b16 %v3051, %v3039
        %v3544 = vpack.c.b16 %v3052, %v3040
        %v3545 = vpack.c.b16 %v3053, %v3041
        %v3546 = vpack.c.b16 %v3054, %v3042
        %v3547 = vpack.c.b16 %v3067, %v3055
        %v3548 = vpack.c.b16 %v3068, %v3056
        %v3549 = vpack.c.b16 %v3069, %v3057
        %v3550 = vpack.c.b16 %v3070, %v3058
        %v3551 = vpack.c.b16 %v3071, %v3059
        %v3552 = vpack.c.b16 %v3072, %v3060
        %v3553 = vpack.c.b16 %v3073, %v3061
        %v3554 = vpack.c.b16 %v3074, %v3062
        %v3555 = vpack.c.b16 %v3075, %v3063
        %v3556 = vpack.c.b16 %v3076, %v3064
        %v3557 = vpack.c.b16 %v3077, %v3065
        %v3558 = vpack.c.b16 %v3078, %v3066
        %v3559 = vpack.c.b16 %v3091, %v3079
        %v3560 = vpack.c.b16 %v3092, %v3080
        %v3561 = vpack.c.b16 %v3093, %v3081
        %v3562 = vpack.c.b16 %v3094, %v3082
        %v3563 = vpack.c.b16 %v3095, %v3083
        %v3564 = vpack.c.b16 %v3096, %v3084
        %v3565 = vpack.c.b16 %v3097, %v3085
        %v3566 = vpack.c.b16 %v3098, %v3086
        %v3567 = vpack.c.b16 %v3099, %v3087
        %v3568 = vpack.c.b16 %v3100, %v3088
        %v3569 = vpack.c.b16 %v3101, %v3089
        %v3570 = vpack.c.b16 %v3102, %v3090
        %v3571 = vpack.c.b16 %v3115, %v3103
        %v3572 = vpack.c.b16 %v3116, %v3104
        %v3573 = vpack.c.b16 %v3117, %v3105
        %v3574 = vpack.c.b16 %v3118, %v3106
        %v3575 = vpack.c.b16 %v3119, %v3107
        %v3576 = vpack.c.b16 %v3120, %v3108
        %v3577 = vpack.c.b16 %v3121, %v3109
        %v3578 = vpack.c.b16 %v3122, %v3110
        %v3579 = vpack.c.b16 %v3123, %v3111
        %v3580 = vpack.c.b16 %v3124, %v3112
        %v3581 = vpack.c.b16 %v3125, %v3113
        %v3582 = vpack.c.b16 %v3126, %v3114
        %v3583 = vpack.c.b16 %v3139, %v3127
        %v3584 = vpack.c.b16 %v3140, %v3128
        %v3585 = vpack.c.b16 %v3141, %v3129
        %v3586 = vpack.c.b16 %v3142, %v3130
        %v3587 = vpack.c.b16 %v3143, %v3131
        %v3588 = vpack.c.b16 %v3144, %v3132
        %v3589 = vpack.c.b16 %v3145, %v3133
        %v3590 = vpack.c.b16 %v3146, %v3134
        %v3591 = vpack.c.b16 %v3147, %v3135
        %v3592 = vpack.c.b16 %v3148, %v3136
        %v3593 = vpack.c.b16 %v3149, %v3137
        %v3594 = vpack.c.b16 %v3150, %v3138
        %v3595 = vpack.c.b16 %v3163, %v3151
        %v3596 = vpack.c.b16 %v3164, %v3152
        %v3597 = vpack.c.b16 %v3165, %v3153
        %v3598 = vpack.c.b16 %v3166, %v3154
        %v3599 = vpack.c.b16 %v3167, %v3155
        %v3600 = vpack.c.b16 %v3168, %v3156
        %v3601 = vpack.c.b16 %v3169, %v3157
        %v3602 = vpack.c.b16 %v3170, %v3158
        %v3603 = vpack.c.b16 %v3171, %v3159
        %v3604 = vpack.c.b16 %v3172, %v3160
        %v3605 = vpack.c.b16 %v3173, %v3161
        %v3606 = vpack.c.b16 %v3174, %v3162
        %v3607 = vpack.c.b16 %v3187, %v3175
        %v3608 = vpack.c.b16 %v3188, %v3176
        %v3609 = vpack.c.b16 %v3189, %v3177
        %v3610 = vpack.c.b16 %v3190, %v3178
        %v3611 = vpack.c.b16 %v3191, %v3179
        %v3612 = vpack.c.b16 %v3192, %v3180
        %v3613 = vpack.c.b16 %v3193, %v3181
        %v3614 = vpack.c.b16 %v3194, %v3182
        %v3615 = vpack.c.b16 %v3195, %v3183
        %v3616 = vpack.c.b16 %v3196, %v3184
        %v3617 = vpack.c.b16 %v3197, %v3185
        %v3618 = vpack.c.b16 %v3198, %v3186
        %v3619 = vpack.c.b16 %v3211, %v3199
        %v3620 = vpack.c.b16 %v3212, %v3200
        %v3621 = vpack.c.b16 %v3213, %v3201
        %v3622 = vpack.c.b16 %v3214, %v3202
        %v3623 = vpack.c.b16 %v3215, %v3203
        %v3624 = vpack.c.b16 %v3216, %v3204
        %v3625 = vpack.c.b16 %v3217, %v3205
        %v3626 = vpack.c.b16 %v3218, %v3206
        %v3627 = vpack.c.b16 %v3219, %v3207
        %v3628 = vpack.c.b16 %v3220, %v3208
        %v3629 = vpack.c.b16 %v3221, %v3209
        %v3630 = vpack.c.b16 %v3222, %v3210
        %v3631 = vpack.c.b16 %v3235, %v3223
        %v3632 = vpack.c.b16 %v3236, %v3224
        %v3633 = vpack.c.b16 %v3237, %v3225
        %v3634 = vpack.c.b16 %v3238, %v3226
        %v3635 = vpack.c.b16 %v3239, %v3227
        %v3636 = vpack.c.b16 %v3240, %v3228
        %v3637 = vpack.c.b16 %v3241, %v3229
        %v3638 = vpack.c.b16 %v3242, %v3230
        %v3639 = vpack.c.b16 %v3243, %v3231
        %v3640 = vpack.c.b16 %v3244, %v3232
        %v3641 = vpack.c.b16 %v3245, %v3233
        %v3642 = vpack.c.b16 %v3246, %v3234
        %v3643 = vpack.c.b16 %v3259, %v3247
        %v3644 = vpack.c.b16 %v3260, %v3248
        %v3645 = vpack.c.b16 %v3261, %v3249
        %v3646 = vpack.c.b16 %v3262, %v3250
        %v3647 = vpack.c.b16 %v3263, %v3251
        %v3648 = vpack.c.b16 %v3264, %v3252
        %v3649 = vpack.c.b16 %v3265, %v3253
        %v3650 = vpack.c.b16 %v3266, %v3254
        %v3651 = vpack.c.b16 %v3267, %v3255
        %v3652 = vpack.c.b16 %v3268, %v3256
        %v3653 = vpack.c.b16 %v3269, %v3257
        %v3654 = vpack.c.b16 %v3270, %v3258
        %4039 = vmatprep.subr.bf16.mxu0 %v3272
        %4040 = vmatpush1.bf16.msra.mxu0 %v3271
        %4041 = vmatprep.subr.bf16.mxu0 %v3284
        %4042 = vmatpush1.bf16.msra.mxu0 %v3283
        %4043 = vmatprep.subr.bf16.mxu0 %v3296
        %4044 = vmatpush1.bf16.msra.mxu0 %v3295
        %4045 = vmatprep.subr.bf16.mxu0 %v3308
        %4046 = vmatpush1.bf16.msra.mxu0 %v3307
        %4047 = vmatprep.subr.bf16.mxu0 %v3320
        %4048 = vmatpush1.bf16.msra.mxu0 %v3319
        %4049 = vmatprep.subr.bf16.mxu0 %v3332
        %4050 = vmatpush1.bf16.msra.mxu0 %v3331
        %4051 = vmatprep.subr.bf16.mxu0 %v3344
        %4052 = vmatpush1.bf16.msra.mxu0 %v3343
        %4053 = vmatprep.subr.bf16.mxu0 %v3356
        %4054 = vmatpush1.bf16.msra.mxu0 %v3355
        %4055 = vmatprep.subr.bf16.mxu0 %v3368
        %4056 = vmatpush1.bf16.msra.mxu0 %v3367
        %4057 = vmatprep.subr.bf16.mxu0 %v3380
        %4058 = vmatpush1.bf16.msra.mxu0 %v3379
        %4059 = vmatprep.subr.bf16.mxu0 %v3392
        %4060 = vmatpush1.bf16.msra.mxu0 %v3391
        %4061 = vmatprep.subr.bf16.mxu0 %v3404
        %4062 = vmatpush1.bf16.msra.mxu0 %v3403
        %4063 = vmatprep.subr.bf16.mxu0 %v3416
        %4064 = vmatpush1.bf16.msra.mxu0 %v3415
        %4065 = vmatprep.subr.bf16.mxu0 %v3428
        %4066 = vmatpush1.bf16.msra.mxu0 %v3427
        %4067 = vmatprep.subr.bf16.mxu0 %v3440
        %4068 = vmatpush1.bf16.msra.mxu0 %v3439
        %4069 = vmatprep.subr.bf16.mxu0 %v3452
        %4070 = vmatpush1.bf16.msra.mxu0 %v3451
        %4071 = vmatprep.mubr.bf16.mxu0 %v1668
        %4072 = vmatmul.mubr.bf16.gmra.mrb[0].mxu0 %v1667
        %v4073 = vpop.f32.mrb[0].mxu0
        %v4074 = vadd.f32 %v2062, %v4073
        %v4075 = vpop.f32.mrb[0].mxu0
        %v4076 = vadd.f32 %v2066, %v4075
        %v4077 = vpop.f32.mrb[0].mxu0
        %v4078 = vpop.f32.mrb[0].mxu0
        %4079 = vdwg.mxu0
        %4080 = vmatprep.subr.bf16.mxu0 %v3464
        %4081 = vmatpush1.bf16.msra.mxu0 %v3463
        %4082 = vmatprep.subr.bf16.mxu0 %v3476
        %4083 = vmatpush1.bf16.msra.mxu0 %v3475
        %4084 = vmatprep.subr.bf16.mxu0 %v3488
        %4085 = vmatpush1.bf16.msra.mxu0 %v3487
        %4086 = vmatprep.subr.bf16.mxu0 %v3500
        %4087 = vmatpush1.bf16.msra.mxu0 %v3499
        %4088 = vmatprep.subr.bf16.mxu0 %v3512
        %4089 = vmatpush1.bf16.msra.mxu0 %v3511
        %4090 = vmatprep.subr.bf16.mxu0 %v3524
        %4091 = vmatpush1.bf16.msra.mxu0 %v3523
        %4092 = vmatprep.subr.bf16.mxu0 %v3536
        %4093 = vmatpush1.bf16.msra.mxu0 %v3535
        %4094 = vmatprep.subr.bf16.mxu0 %v3548
        %4095 = vmatpush1.bf16.msra.mxu0 %v3547
        %4096 = vmatprep.subr.bf16.mxu0 %v3560
        %4097 = vmatpush1.bf16.msra.mxu0 %v3559
        %4098 = vmatprep.subr.bf16.mxu0 %v3572
        %4099 = vmatpush1.bf16.msra.mxu0 %v3571
        %4100 = vmatprep.subr.bf16.mxu0 %v3584
        %4101 = vmatpush1.bf16.msra.mxu0 %v3583
        %4102 = vmatprep.subr.bf16.mxu0 %v3596
        %4103 = vmatpush1.bf16.msra.mxu0 %v3595
        %4104 = vmatprep.subr.bf16.mxu0 %v3608
        %4105 = vmatpush1.bf16.msra.mxu0 %v3607
        %4106 = vmatprep.subr.bf16.mxu0 %v3620
        %4107 = vmatpush1.bf16.msra.mxu0 %v3619
        %4108 = vmatprep.subr.bf16.mxu0 %v3632
        %4109 = vmatpush1.bf16.msra.mxu0 %v3631
        %4110 = vmatprep.subr.bf16.mxu0 %v3644
        %4111 = vmatpush1.bf16.msra.mxu0 %v3643
        %4112 = vmatprep.mubr.bf16.mxu0 %v1670
        %4113 = vmatmul.mubr.bf16.gmra.mrb[0].mxu0 %v1669
        %v4114 = vpop.f32.mrb[0].mxu0
        %v4115 = vadd.f32 %v4074, %v4114
        %v4116 = vpop.f32.mrb[0].mxu0
        %v4117 = vadd.f32 %v4076, %v4116
        %v4118 = vpop.f32.mrb[0].mxu0
        %v4119 = vpop.f32.mrb[0].mxu0
        %4120 = vdwg.mxu0
        %4121 = vmatprep.subr.bf16.mxu0 %v3274
        %4122 = vmatpush1.bf16.msra.mxu0 %v3273
        %4123 = vmatprep.subr.bf16.mxu0 %v3286
        %4124 = vmatpush1.bf16.msra.mxu0 %v3285
        %4125 = vmatprep.subr.bf16.mxu0 %v3298
        %4126 = vmatpush1.bf16.msra.mxu0 %v3297
        %4127 = vmatprep.subr.bf16.mxu0 %v3310
        %4128 = vmatpush1.bf16.msra.mxu0 %v3309
        %4129 = vmatprep.subr.bf16.mxu0 %v3322
        %4130 = vmatpush1.bf16.msra.mxu0 %v3321
        %4131 = vmatprep.subr.bf16.mxu0 %v3334
        %4132 = vmatpush1.bf16.msra.mxu0 %v3333
        %4133 = vmatprep.subr.bf16.mxu0 %v3346
        %4134 = vmatpush1.bf16.msra.mxu0 %v3345
        %4135 = vmatprep.subr.bf16.mxu0 %v3358
        %4136 = vmatpush1.bf16.msra.mxu0 %v3357
        %4137 = vmatprep.subr.bf16.mxu0 %v3370
        %4138 = vmatpush1.bf16.msra.mxu0 %v3369
        %4139 = vmatprep.subr.bf16.mxu0 %v3382
        %4140 = vmatpush1.bf16.msra.mxu0 %v3381
        %4141 = vmatprep.subr.bf16.mxu0 %v3394
        %4142 = vmatpush1.bf16.msra.mxu0 %v3393
        %4143 = vmatprep.subr.bf16.mxu0 %v3406
        %4144 = vmatpush1.bf16.msra.mxu0 %v3405
        %4145 = vmatprep.subr.bf16.mxu0 %v3418
        %4146 = vmatpush1.bf16.msra.mxu0 %v3417
        %4147 = vmatprep.subr.bf16.mxu0 %v3430
        %4148 = vmatpush1.bf16.msra.mxu0 %v3429
        %4149 = vmatprep.subr.bf16.mxu0 %v3442
        %4150 = vmatpush1.bf16.msra.mxu0 %v3441
        %4151 = vmatprep.subr.bf16.mxu0 %v3454
        %4152 = vmatpush1.bf16.msra.mxu0 %v3453
        %4153 = vmatprep.mubr.bf16.mxu0 %v1668
        %4154 = vmatmul.mubr.bf16.gmra.mrb[0].mxu0 %v1667
        %v4155 = vpop.f32.mrb[0].mxu0
        %v4156 = vadd.f32 %v2070, %v4155
        %v4157 = vpop.f32.mrb[0].mxu0
        %v4158 = vadd.f32 %v2074, %v4157
        %v4159 = vpop.f32.mrb[0].mxu0
        %v4160 = vpop.f32.mrb[0].mxu0
        %4161 = vdwg.mxu0
        %4162 = vmatprep.subr.bf16.mxu0 %v3466
        %4163 = vmatpush1.bf16.msra.mxu0 %v3465
        %4164 = vmatprep.subr.bf16.mxu0 %v3478
        %4165 = vmatpush1.bf16.msra.mxu0 %v3477
        %4166 = vmatprep.subr.bf16.mxu0 %v3490
        %4167 = vmatpush1.bf16.msra.mxu0 %v3489
        %4168 = vmatprep.subr.bf16.mxu0 %v3502
        %4169 = vmatpush1.bf16.msra.mxu0 %v3501
        %4170 = vmatprep.subr.bf16.mxu0 %v3514
        %4171 = vmatpush1.bf16.msra.mxu0 %v3513
        %4172 = vmatprep.subr.bf16.mxu0 %v3526
        %4173 = vmatpush1.bf16.msra.mxu0 %v3525
        %4174 = vmatprep.subr.bf16.mxu0 %v3538
        %4175 = vmatpush1.bf16.msra.mxu0 %v3537
        %4176 = vmatprep.subr.bf16.mxu0 %v3550
        %4177 = vmatpush1.bf16.msra.mxu0 %v3549
        %4178 = vmatprep.subr.bf16.mxu0 %v3562
        %4179 = vmatpush1.bf16.msra.mxu0 %v3561
        %4180 = vmatprep.subr.bf16.mxu0 %v3574
        %4181 = vmatpush1.bf16.msra.mxu0 %v3573
        %4182 = vmatprep.subr.bf16.mxu0 %v3586
        %4183 = vmatpush1.bf16.msra.mxu0 %v3585
        %4184 = vmatprep.subr.bf16.mxu0 %v3598
        %4185 = vmatpush1.bf16.msra.mxu0 %v3597
        %4186 = vmatprep.subr.bf16.mxu0 %v3610
        %4187 = vmatpush1.bf16.msra.mxu0 %v3609
        %4188 = vmatprep.subr.bf16.mxu0 %v3622
        %4189 = vmatpush1.bf16.msra.mxu0 %v3621
        %4190 = vmatprep.subr.bf16.mxu0 %v3634
        %4191 = vmatpush1.bf16.msra.mxu0 %v3633
        %4192 = vmatprep.subr.bf16.mxu0 %v3646
        %4193 = vmatpush1.bf16.msra.mxu0 %v3645
        %4194 = vmatprep.mubr.bf16.mxu0 %v1670
        %4195 = vmatmul.mubr.bf16.gmra.mrb[0].mxu0 %v1669
        %v4196 = vpop.f32.mrb[0].mxu0
        %v4197 = vadd.f32 %v4156, %v4196
        %v4198 = vpop.f32.mrb[0].mxu0
        %v4199 = vadd.f32 %v4158, %v4198
        %v4200 = vpop.f32.mrb[0].mxu0
        %v4201 = vpop.f32.mrb[0].mxu0
        %4202 = vdwg.mxu0
        %4203 = vmatprep.subr.bf16.mxu0 %v3276
        %4204 = vmatpush1.bf16.msra.mxu0 %v3275
        %4205 = vmatprep.subr.bf16.mxu0 %v3288
        %4206 = vmatpush1.bf16.msra.mxu0 %v3287
        %4207 = vmatprep.subr.bf16.mxu0 %v3300
        %4208 = vmatpush1.bf16.msra.mxu0 %v3299
        %4209 = vmatprep.subr.bf16.mxu0 %v3312
        %4210 = vmatpush1.bf16.msra.mxu0 %v3311
        %4211 = vmatprep.subr.bf16.mxu0 %v3324
        %4212 = vmatpush1.bf16.msra.mxu0 %v3323
        %4213 = vmatprep.subr.bf16.mxu0 %v3336
        %4214 = vmatpush1.bf16.msra.mxu0 %v3335
        %4215 = vmatprep.subr.bf16.mxu0 %v3348
        %4216 = vmatpush1.bf16.msra.mxu0 %v3347
        %4217 = vmatprep.subr.bf16.mxu0 %v3360
        %4218 = vmatpush1.bf16.msra.mxu0 %v3359
        %4219 = vmatprep.subr.bf16.mxu0 %v3372
        %4220 = vmatpush1.bf16.msra.mxu0 %v3371
        %4221 = vmatprep.subr.bf16.mxu0 %v3384
        %4222 = vmatpush1.bf16.msra.mxu0 %v3383
        %4223 = vmatprep.subr.bf16.mxu0 %v3396
        %4224 = vmatpush1.bf16.msra.mxu0 %v3395
        %4225 = vmatprep.subr.bf16.mxu0 %v3408
        %4226 = vmatpush1.bf16.msra.mxu0 %v3407
        %4227 = vmatprep.subr.bf16.mxu0 %v3420
        %4228 = vmatpush1.bf16.msra.mxu0 %v3419
        %4229 = vmatprep.subr.bf16.mxu0 %v3432
        %4230 = vmatpush1.bf16.msra.mxu0 %v3431
        %4231 = vmatprep.subr.bf16.mxu0 %v3444
        %4232 = vmatpush1.bf16.msra.mxu0 %v3443
        %4233 = vmatprep.subr.bf16.mxu0 %v3456
        %4234 = vmatpush1.bf16.msra.mxu0 %v3455
        %4235 = vmatprep.mubr.bf16.mxu0 %v1668
        %4236 = vmatmul.mubr.bf16.gmra.mrb[0].mxu0 %v1667
        %v4237 = vpop.f32.mrb[0].mxu0
        %v4238 = vadd.f32 %v2078, %v4237
        %v4239 = vpop.f32.mrb[0].mxu0
        %v4240 = vadd.f32 %v2082, %v4239
        %v4241 = vpop.f32.mrb[0].mxu0
        %v4242 = vpop.f32.mrb[0].mxu0
        %4243 = vdwg.mxu0
        %4244 = vmatprep.subr.bf16.mxu0 %v3468
        %4245 = vmatpush1.bf16.msra.mxu0 %v3467
        %4246 = vmatprep.subr.bf16.mxu0 %v3480
        %4247 = vmatpush1.bf16.msra.mxu0 %v3479
        %4248 = vmatprep.subr.bf16.mxu0 %v3492
        %4249 = vmatpush1.bf16.msra.mxu0 %v3491
        %4250 = vmatprep.subr.bf16.mxu0 %v3504
        %4251 = vmatpush1.bf16.msra.mxu0 %v3503
        %4252 = vmatprep.subr.bf16.mxu0 %v3516
        %4253 = vmatpush1.bf16.msra.mxu0 %v3515
        %4254 = vmatprep.subr.bf16.mxu0 %v3528
        %4255 = vmatpush1.bf16.msra.mxu0 %v3527
        %4256 = vmatprep.subr.bf16.mxu0 %v3540
        %4257 = vmatpush1.bf16.msra.mxu0 %v3539
        %4258 = vmatprep.subr.bf16.mxu0 %v3552
        %4259 = vmatpush1.bf16.msra.mxu0 %v3551
        %4260 = vmatprep.subr.bf16.mxu0 %v3564
        %4261 = vmatpush1.bf16.msra.mxu0 %v3563
        %4262 = vmatprep.subr.bf16.mxu0 %v3576
        %4263 = vmatpush1.bf16.msra.mxu0 %v3575
        %4264 = vmatprep.subr.bf16.mxu0 %v3588
        %4265 = vmatpush1.bf16.msra.mxu0 %v3587
        %4266 = vmatprep.subr.bf16.mxu0 %v3600
        %4267 = vmatpush1.bf16.msra.mxu0 %v3599
        %4268 = vmatprep.subr.bf16.mxu0 %v3612
        %4269 = vmatpush1.bf16.msra.mxu0 %v3611
        %4270 = vmatprep.subr.bf16.mxu0 %v3624
        %4271 = vmatpush1.bf16.msra.mxu0 %v3623
        %4272 = vmatprep.subr.bf16.mxu0 %v3636
        %4273 = vmatpush1.bf16.msra.mxu0 %v3635
        %4274 = vmatprep.subr.bf16.mxu0 %v3648
        %4275 = vmatpush1.bf16.msra.mxu0 %v3647
        %4276 = vmatprep.mubr.bf16.mxu0 %v1670
        %4277 = vmatmul.mubr.bf16.gmra.mrb[0].mxu0 %v1669
        %v4278 = vpop.f32.mrb[0].mxu0
        %v4279 = vadd.f32 %v4238, %v4278
        %v4280 = vpop.f32.mrb[0].mxu0
        %v4281 = vadd.f32 %v4240, %v4280
        %v4282 = vpop.f32.mrb[0].mxu0
        %v4283 = vpop.f32.mrb[0].mxu0
        %4284 = vdwg.mxu0
        %4285 = vmatprep.subr.bf16.mxu0 %v3278
        %4286 = vmatpush1.bf16.msra.mxu0 %v3277
        %4287 = vmatprep.subr.bf16.mxu0 %v3290
        %4288 = vmatpush1.bf16.msra.mxu0 %v3289
        %4289 = vmatprep.subr.bf16.mxu0 %v3302
        %4290 = vmatpush1.bf16.msra.mxu0 %v3301
        %4291 = vmatprep.subr.bf16.mxu0 %v3314
        %4292 = vmatpush1.bf16.msra.mxu0 %v3313
        %4293 = vmatprep.subr.bf16.mxu0 %v3326
        %4294 = vmatpush1.bf16.msra.mxu0 %v3325
        %4295 = vmatprep.subr.bf16.mxu0 %v3338
        %4296 = vmatpush1.bf16.msra.mxu0 %v3337
        %4297 = vmatprep.subr.bf16.mxu0 %v3350
        %4298 = vmatpush1.bf16.msra.mxu0 %v3349
        %4299 = vmatprep.subr.bf16.mxu0 %v3362
        %4300 = vmatpush1.bf16.msra.mxu0 %v3361
        %4301 = vmatprep.subr.bf16.mxu0 %v3374
        %4302 = vmatpush1.bf16.msra.mxu0 %v3373
        %4303 = vmatprep.subr.bf16.mxu0 %v3386
        %4304 = vmatpush1.bf16.msra.mxu0 %v3385
        %4305 = vmatprep.subr.bf16.mxu0 %v3398
        %4306 = vmatpush1.bf16.msra.mxu0 %v3397
        %4307 = vmatprep.subr.bf16.mxu0 %v3410
        %4308 = vmatpush1.bf16.msra.mxu0 %v3409
        %4309 = vmatprep.subr.bf16.mxu0 %v3422
        %4310 = vmatpush1.bf16.msra.mxu0 %v3421
        %4311 = vmatprep.subr.bf16.mxu0 %v3434
        %4312 = vmatpush1.bf16.msra.mxu0 %v3433
        %4313 = vmatprep.subr.bf16.mxu0 %v3446
        %4314 = vmatpush1.bf16.msra.mxu0 %v3445
        %4315 = vmatprep.subr.bf16.mxu0 %v3458
        %4316 = vmatpush1.bf16.msra.mxu0 %v3457
        %4317 = vmatprep.mubr.bf16.mxu0 %v1668
        %4318 = vmatmul.mubr.bf16.gmra.mrb[0].mxu0 %v1667
        %v4319 = vpop.f32.mrb[0].mxu0
        %v4320 = vadd.f32 %v2086, %v4319
        %v4321 = vpop.f32.mrb[0].mxu0
        %v4322 = vadd.f32 %v2090, %v4321
        %v4323 = vpop.f32.mrb[0].mxu0
        %v4324 = vpop.f32.mrb[0].mxu0
        %4325 = vdwg.mxu0
        %4326 = vmatprep.subr.bf16.mxu0 %v3470
        %4327 = vmatpush1.bf16.msra.mxu0 %v3469
        %4328 = vmatprep.subr.bf16.mxu0 %v3482
        %4329 = vmatpush1.bf16.msra.mxu0 %v3481
        %4330 = vmatprep.subr.bf16.mxu0 %v3494
        %4331 = vmatpush1.bf16.msra.mxu0 %v3493
        %4332 = vmatprep.subr.bf16.mxu0 %v3506
        %4333 = vmatpush1.bf16.msra.mxu0 %v3505
        %4334 = vmatprep.subr.bf16.mxu0 %v3518
        %4335 = vmatpush1.bf16.msra.mxu0 %v3517
        %4336 = vmatprep.subr.bf16.mxu0 %v3530
        %4337 = vmatpush1.bf16.msra.mxu0 %v3529
        %4338 = vmatprep.subr.bf16.mxu0 %v3542
        %4339 = vmatpush1.bf16.msra.mxu0 %v3541
        %4340 = vmatprep.subr.bf16.mxu0 %v3554
        %4341 = vmatpush1.bf16.msra.mxu0 %v3553
        %4342 = vmatprep.subr.bf16.mxu0 %v3566
        %4343 = vmatpush1.bf16.msra.mxu0 %v3565
        %4344 = vmatprep.subr.bf16.mxu0 %v3578
        %4345 = vmatpush1.bf16.msra.mxu0 %v3577
        %4346 = vmatprep.subr.bf16.mxu0 %v3590
        %4347 = vmatpush1.bf16.msra.mxu0 %v3589
        %4348 = vmatprep.subr.bf16.mxu0 %v3602
        %4349 = vmatpush1.bf16.msra.mxu0 %v3601
        %4350 = vmatprep.subr.bf16.mxu0 %v3614
        %4351 = vmatpush1.bf16.msra.mxu0 %v3613
        %4352 = vmatprep.subr.bf16.mxu0 %v3626
        %4353 = vmatpush1.bf16.msra.mxu0 %v3625
        %4354 = vmatprep.subr.bf16.mxu0 %v3638
        %4355 = vmatpush1.bf16.msra.mxu0 %v3637
        %4356 = vmatprep.subr.bf16.mxu0 %v3650
        %4357 = vmatpush1.bf16.msra.mxu0 %v3649
        %4358 = vmatprep.mubr.bf16.mxu0 %v1670
        %4359 = vmatmul.mubr.bf16.gmra.mrb[0].mxu0 %v1669
        %v4360 = vpop.f32.mrb[0].mxu0
        %v4361 = vadd.f32 %v4320, %v4360
        %v4362 = vpop.f32.mrb[0].mxu0
        %v4363 = vadd.f32 %v4322, %v4362
        %v4364 = vpop.f32.mrb[0].mxu0
        %v4365 = vpop.f32.mrb[0].mxu0
        %4366 = vdwg.mxu0
        %4367 = vmatprep.subr.bf16.mxu0 %v3280
        %4368 = vmatpush1.bf16.msra.mxu0 %v3279
        %4369 = vmatprep.subr.bf16.mxu0 %v3292
        %4370 = vmatpush1.bf16.msra.mxu0 %v3291
        %4371 = vmatprep.subr.bf16.mxu0 %v3304
        %4372 = vmatpush1.bf16.msra.mxu0 %v3303
        %4373 = vmatprep.subr.bf16.mxu0 %v3316
        %4374 = vmatpush1.bf16.msra.mxu0 %v3315
        %4375 = vmatprep.subr.bf16.mxu0 %v3328
        %4376 = vmatpush1.bf16.msra.mxu0 %v3327
        %4377 = vmatprep.subr.bf16.mxu0 %v3340
        %4378 = vmatpush1.bf16.msra.mxu0 %v3339
        %4379 = vmatprep.subr.bf16.mxu0 %v3352
        %4380 = vmatpush1.bf16.msra.mxu0 %v3351
        %4381 = vmatprep.subr.bf16.mxu0 %v3364
        %4382 = vmatpush1.bf16.msra.mxu0 %v3363
        %4383 = vmatprep.subr.bf16.mxu0 %v3376
        %4384 = vmatpush1.bf16.msra.mxu0 %v3375
        %4385 = vmatprep.subr.bf16.mxu0 %v3388
        %4386 = vmatpush1.bf16.msra.mxu0 %v3387
        %4387 = vmatprep.subr.bf16.mxu0 %v3400
        %4388 = vmatpush1.bf16.msra.mxu0 %v3399
        %4389 = vmatprep.subr.bf16.mxu0 %v3412
        %4390 = vmatpush1.bf16.msra.mxu0 %v3411
        %4391 = vmatprep.subr.bf16.mxu0 %v3424
        %4392 = vmatpush1.bf16.msra.mxu0 %v3423
        %4393 = vmatprep.subr.bf16.mxu0 %v3436
        %4394 = vmatpush1.bf16.msra.mxu0 %v3435
        %4395 = vmatprep.subr.bf16.mxu0 %v3448
        %4396 = vmatpush1.bf16.msra.mxu0 %v3447
        %4397 = vmatprep.subr.bf16.mxu0 %v3460
        %4398 = vmatpush1.bf16.msra.mxu0 %v3459
        %4399 = vmatprep.mubr.bf16.mxu0 %v1668
        %4400 = vmatmul.mubr.bf16.gmra.mrb[0].mxu0 %v1667
        %v4401 = vpop.f32.mrb[0].mxu0
        %v4402 = vadd.f32 %v2094, %v4401
        %v4403 = vpop.f32.mrb[0].mxu0
        %v4404 = vadd.f32 %v2098, %v4403
        %v4405 = vpop.f32.mrb[0].mxu0
        %v4406 = vpop.f32.mrb[0].mxu0
        %4407 = vdwg.mxu0
        %4408 = vmatprep.subr.bf16.mxu0 %v3472
        %4409 = vmatpush1.bf16.msra.mxu0 %v3471
        %4410 = vmatprep.subr.bf16.mxu0 %v3484
        %4411 = vmatpush1.bf16.msra.mxu0 %v3483
        %4412 = vmatprep.subr.bf16.mxu0 %v3496
        %4413 = vmatpush1.bf16.msra.mxu0 %v3495
        %4414 = vmatprep.subr.bf16.mxu0 %v3508
        %4415 = vmatpush1.bf16.msra.mxu0 %v3507
        %4416 = vmatprep.subr.bf16.mxu0 %v3520
        %4417 = vmatpush1.bf16.msra.mxu0 %v3519
        %4418 = vmatprep.subr.bf16.mxu0 %v3532
        %4419 = vmatpush1.bf16.msra.mxu0 %v3531
        %4420 = vmatprep.subr.bf16.mxu0 %v3544
        %4421 = vmatpush1.bf16.msra.mxu0 %v3543
        %4422 = vmatprep.subr.bf16.mxu0 %v3556
        %4423 = vmatpush1.bf16.msra.mxu0 %v3555
        %4424 = vmatprep.subr.bf16.mxu0 %v3568
        %4425 = vmatpush1.bf16.msra.mxu0 %v3567
        %4426 = vmatprep.subr.bf16.mxu0 %v3580
        %4427 = vmatpush1.bf16.msra.mxu0 %v3579
        %4428 = vmatprep.subr.bf16.mxu0 %v3592
        %4429 = vmatpush1.bf16.msra.mxu0 %v3591
        %4430 = vmatprep.subr.bf16.mxu0 %v3604
        %4431 = vmatpush1.bf16.msra.mxu0 %v3603
        %4432 = vmatprep.subr.bf16.mxu0 %v3616
        %4433 = vmatpush1.bf16.msra.mxu0 %v3615
        %4434 = vmatprep.subr.bf16.mxu0 %v3628
        %4435 = vmatpush1.bf16.msra.mxu0 %v3627
        %4436 = vmatprep.subr.bf16.mxu0 %v3640
        %4437 = vmatpush1.bf16.msra.mxu0 %v3639
        %4438 = vmatprep.subr.bf16.mxu0 %v3652
        %4439 = vmatpush1.bf16.msra.mxu0 %v3651
        %4440 = vmatprep.mubr.bf16.mxu0 %v1670
        %4441 = vmatmul.mubr.bf16.gmra.mrb[0].mxu0 %v1669
        %v4442 = vpop.f32.mrb[0].mxu0
        %v4443 = vadd.f32 %v4402, %v4442
        %v4444 = vpop.f32.mrb[0].mxu0
        %v4445 = vadd.f32 %v4404, %v4444
        %v4446 = vpop.f32.mrb[0].mxu0
        %v4447 = vpop.f32.mrb[0].mxu0
        %4448 = vdwg.mxu0
        %4449 = vmatprep.subr.bf16.mxu0 %v3282
        %4450 = vmatpush1.bf16.msra.mxu0 %v3281
        %4451 = vmatprep.subr.bf16.mxu0 %v3294
        %4452 = vmatpush1.bf16.msra.mxu0 %v3293
        %4453 = vmatprep.subr.bf16.mxu0 %v3306
        %4454 = vmatpush1.bf16.msra.mxu0 %v3305
        %4455 = vmatprep.subr.bf16.mxu0 %v3318
        %4456 = vmatpush1.bf16.msra.mxu0 %v3317
        %4457 = vmatprep.subr.bf16.mxu0 %v3330
        %4458 = vmatpush1.bf16.msra.mxu0 %v3329
        %4459 = vmatprep.subr.bf16.mxu0 %v3342
        %4460 = vmatpush1.bf16.msra.mxu0 %v3341
        %4461 = vmatprep.subr.bf16.mxu0 %v3354
        %4462 = vmatpush1.bf16.msra.mxu0 %v3353
        %4463 = vmatprep.subr.bf16.mxu0 %v3366
        %4464 = vmatpush1.bf16.msra.mxu0 %v3365
        %4465 = vmatprep.subr.bf16.mxu0 %v3378
        %4466 = vmatpush1.bf16.msra.mxu0 %v3377
        %4467 = vmatprep.subr.bf16.mxu0 %v3390
        %4468 = vmatpush1.bf16.msra.mxu0 %v3389
        %4469 = vmatprep.subr.bf16.mxu0 %v3402
        %4470 = vmatpush1.bf16.msra.mxu0 %v3401
        %4471 = vmatprep.subr.bf16.mxu0 %v3414
        %4472 = vmatpush1.bf16.msra.mxu0 %v3413
        %4473 = vmatprep.subr.bf16.mxu0 %v3426
        %4474 = vmatpush1.bf16.msra.mxu0 %v3425
        %4475 = vmatprep.subr.bf16.mxu0 %v3438
        %4476 = vmatpush1.bf16.msra.mxu0 %v3437
        %4477 = vmatprep.subr.bf16.mxu0 %v3450
        %4478 = vmatpush1.bf16.msra.mxu0 %v3449
        %4479 = vmatprep.subr.bf16.mxu0 %v3462
        %4480 = vmatpush1.bf16.msra.mxu0 %v3461
        %4481 = vmatprep.mubr.bf16.mxu0 %v1668
        %4482 = vmatmul.mubr.bf16.gmra.mrb[0].mxu0 %v1667
        %v4483 = vpop.f32.mrb[0].mxu0
        %v4484 = vadd.f32 %v2102, %v4483
        %v4485 = vpop.f32.mrb[0].mxu0
        %v4486 = vadd.f32 %v2106, %v4485
        %v4487 = vpop.f32.mrb[0].mxu0
        %v4488 = vpop.f32.mrb[0].mxu0
        %4489 = vdwg.mxu0
        %4490 = vmatprep.subr.bf16.mxu0 %v3474
        %4491 = vmatpush1.bf16.msra.mxu0 %v3473
        %4492 = vmatprep.subr.bf16.mxu0 %v3486
        %4493 = vmatpush1.bf16.msra.mxu0 %v3485
        %4494 = vmatprep.subr.bf16.mxu0 %v3498
        %4495 = vmatpush1.bf16.msra.mxu0 %v3497
        %4496 = vmatprep.subr.bf16.mxu0 %v3510
        %4497 = vmatpush1.bf16.msra.mxu0 %v3509
        %4498 = vmatprep.subr.bf16.mxu0 %v3522
        %4499 = vmatpush1.bf16.msra.mxu0 %v3521
        %4500 = vmatprep.subr.bf16.mxu0 %v3534
        %4501 = vmatpush1.bf16.msra.mxu0 %v3533
        %4502 = vmatprep.subr.bf16.mxu0 %v3546
        %4503 = vmatpush1.bf16.msra.mxu0 %v3545
        %4504 = vmatprep.subr.bf16.mxu0 %v3558
        %4505 = vmatpush1.bf16.msra.mxu0 %v3557
        %4506 = vmatprep.subr.bf16.mxu0 %v3570
        %4507 = vmatpush1.bf16.msra.mxu0 %v3569
        %4508 = vmatprep.subr.bf16.mxu0 %v3582
        %4509 = vmatpush1.bf16.msra.mxu0 %v3581
        %4510 = vmatprep.subr.bf16.mxu0 %v3594
        %4511 = vmatpush1.bf16.msra.mxu0 %v3593
        %4512 = vmatprep.subr.bf16.mxu0 %v3606
        %4513 = vmatpush1.bf16.msra.mxu0 %v3605
        %4514 = vmatprep.subr.bf16.mxu0 %v3618
        %4515 = vmatpush1.bf16.msra.mxu0 %v3617
        %4516 = vmatprep.subr.bf16.mxu0 %v3630
        %4517 = vmatpush1.bf16.msra.mxu0 %v3629
        %4518 = vmatprep.subr.bf16.mxu0 %v3642
        %4519 = vmatpush1.bf16.msra.mxu0 %v3641
        %4520 = vmatprep.subr.bf16.mxu0 %v3654
        %4521 = vmatpush1.bf16.msra.mxu0 %v3653
        %4522 = vmatprep.mubr.bf16.mxu0 %v1670
        %4523 = vmatmul.mubr.bf16.gmra.mrb[0].mxu0 %v1669
        %v4524 = vpop.f32.mrb[0].mxu0
        %v4525 = vadd.f32 %v4484, %v4524
        %v4526 = vpop.f32.mrb[0].mxu0
        %v4527 = vadd.f32 %v4486, %v4526
        %v4528 = vpop.f32.mrb[0].mxu0
        %v4529 = vpop.f32.mrb[0].mxu0
        %4530 = vdwg.mxu0
        %v4543 = vcombine.low %v4115, %v4117
        %v4544 = vcombine.low %v4197, %v4199
        %v4546 = vunpack.c.l.s4 1983009808
        %v4547 = vunpack.c.0.s8 %v4546
        %v4548 = vlaneseq
        %v4549 = vshrl.u32 %v4548, 7
        %v4550 = vsub.s32 %v4547, %v4549
        %v4551 = vrot.slane %v4543, %v4550
        %v4553 = vunpack.c.l.s4 1983009808
        %v4554 = vunpack.c.0.s8 %v4553
        %v4555 = vlaneseq
        %v4556 = vshrl.u32 %v4555, 7
        %v4557 = vsub.s32 %v4554, %v4556
        %v4558 = vrot.slane %v4544, %v4557
        %v4559 = vcombine.low %v4551, %v4558
        %v4560 = vcombine.low %v4279, %v4281
        %v4561 = vcombine.low %v4361, %v4363
        %v4563 = vunpack.c.l.s4 1983009808
        %v4564 = vunpack.c.0.s8 %v4563
        %v4565 = vlaneseq
        %v4566 = vshrl.u32 %v4565, 7
        %v4567 = vsub.s32 %v4564, %v4566
        %v4568 = vrot.slane %v4560, %v4567
        %v4570 = vunpack.c.l.s4 1983009808
        %v4571 = vunpack.c.0.s8 %v4570
        %v4572 = vlaneseq
        %v4573 = vshrl.u32 %v4572, 7
        %v4574 = vsub.s32 %v4571, %v4573
        %v4575 = vrot.slane %v4561, %v4574
        %v4576 = vcombine.low %v4568, %v4575
        %v4577 = vcombine.low %v4443, %v4445
        %v4578 = vcombine.low %v4525, %v4527
        %v4580 = vunpack.c.l.s4 1983009808
        %v4581 = vunpack.c.0.s8 %v4580
        %v4582 = vlaneseq
        %v4583 = vshrl.u32 %v4582, 7
        %v4584 = vsub.s32 %v4581, %v4583
        %v4585 = vrot.slane %v4577, %v4584
        %v4587 = vunpack.c.l.s4 1983009808
        %v4588 = vunpack.c.0.s8 %v4587
        %v4589 = vlaneseq
        %v4590 = vshrl.u32 %v4589, 7
        %v4591 = vsub.s32 %v4588, %v4590
        %v4592 = vrot.slane %v4578, %v4591
        %v4593 = vcombine.low %v4585, %v4592
        %4597 = vst [vmem:[%s398] sm:$0xff] %v4559
        %4598 = vst [vmem:[%s398 + $0x8] sm:$0xff] %v4576
        %4599 = vst [vmem:[%s398 + $0x10] sm:$0xff] %v4593
        %s4600 = sand.u32 %s192, 1
        %s4601 = scalar_lea.sflag [#allocation4], %s4600
        %s4602 = sand.u32 %s192, 1
        %s4603 = smul.addr %s4602, 24
        %s4604 = scalar_lea.vmem [#allocation14], %s4603
        // Predicated region
        $region77: #{tpu_custom_call.1} parent=47 // pred_check
          %p4605 = pneg %p202
        $region78: #{tpu_custom_call.1} parent=47 // pred_check_branch
          %4607 = sbr.rel (%p4605) target = $region80
        $region79: #{tpu_custom_call.1} parent=47 // pred_region
          %s4608 = smul.u32 12, %s27
          %s4610 = ssub.s32 384, 384
          %4611 = vsyncadd %s4601, %s4610
          %s4612 = smul.addr %s4608, 32
          %s4613 = scalar_lea.hbm %s7, %s4612
          %s4615 = sshll.u32 %s4604, 4
          %s4616 = int_to_ptr.vmem [resolvable:$true] %s4615
          %4618 = dma.vmem_to_hbm [thread:$0]  %s4616, 384, %s4613, %s4601
        $region80: #{tpu_custom_call.1} parent=47 // pred_fallthru
          _
      $region48: #{tpu_custom_call.1} parent=5 // pred_fallthru
        _
      %p4619 = scmp.le.s32.totalorder 2, %s22
      // Predicated region
      $region81: #{tpu_custom_call.1} parent=5 // pred_check
        %p4620 = pneg %p4619
      $region82: #{tpu_custom_call.1} parent=5 // pred_check_branch
        %4622 = sbr.rel (%p4620) target = $region84
      $region83: #{tpu_custom_call.1} parent=5 // pred_region
        %s4623 = ssub.s32 %s22, 2
        // Predicated region
        $region85: #{tpu_custom_call.1} parent=83 // pred_check
          %p4624 = pneg %p208
        $region86: #{tpu_custom_call.1} parent=83 // pred_check_branch
          %4626 = sbr.rel (%p4624) target = $region88
        $region87: #{tpu_custom_call.1} parent=83 // pred_region
          %s4627 = sand.u32 %s193, 1
          %s4628 = scalar_lea.sflag [#allocation4], %s4627
          %s4629 = sand.u32 %s193, 1
          %s4630 = smul.addr %s4629, 24
          %s4631 = scalar_lea.vmem [#allocation14], %s4630
          %4632 = dma.done %s4628, 384
        $region88: #{tpu_custom_call.1} parent=83 // pred_fallthru
          _
      $region84: #{tpu_custom_call.1} parent=5 // pred_fallthru
        _
    $region6: #{tpu_custom_call.1} parent=1 // loop_footer
      %s26 = sadd.s32 1, %s22
    $region7: #{tpu_custom_call.1} parent=1 // loop_footer_branch
      %21 = sbr.rel target = $region3
    $region8: #{tpu_custom_call.1} parent=1 // loop_exit
      _
    %4633 = vsyncpa [#allocation3], 1
    %s4634 = scalar_lea.sflag [#allocation3], 1
    %4635 = vsyncpa %s4634, 1
    %4636 = vsyncpa [#allocation6], 1
    %4637 = vsyncpa [#allocation9], 1
    %4638 = vsyncpa [#allocation12], 1
    %s4639 = scalar_lea.sflag [#allocation12], 1
    %4640 = vsyncpa %s4639, 1
    %4641 = vsyncpa [#allocation4], 1
    %s4642 = scalar_lea.sflag [#allocation4], 1
    %4643 = vsyncpa %s4642, 1

</llo_original>
